<compile_context>
chip_gen: v7x
topology: tpu7x:2x2x1
jax: 0.10.0
libtpu: 0.0.40
codegen_flags: <defaults>
</compile_context>

<pallas_src>
import jax
import jax.numpy as jnp
from jax import lax
from jax.experimental import pallas as pl
from jax.experimental.pallas import tpu as pltpu


# ----------------------------------------------------------------------------
# Fused kernel: conv1(+BN+ReLU) -> conv2 -> [store xs] -> BN+ReLU+SE -> [store x]
# One batch element per grid step; all intermediates live in VMEM scratch.
# ----------------------------------------------------------------------------
def _fused_local_conv_block_kernel(
        x_ref,        # (1, H, W, Cin)        bf16   input block
        w1_ref,       # (9*Cin, Cout)         bf16   conv1 weight, im2col layout
        w2_ref,       # (9*Cout, Cout)        bf16   conv2 weight, im2col layout
        s1_ref,       # (1, Cout)             f32    folded BN1 scale
        fb1_ref,      # (1, Cout)             f32    conv1 bias folded into BN1 bias
        b2_ref,       # (1, Cout)             f32    conv2 bias (no norm)
        s2_ref,       # (1, Cout)             f32    BN2 scale
        t2_ref,       # (1, Cout)             f32    BN2 bias
        sew1_ref,     # (Cout, hid)           f32    SE Linear 1 (bias-free)
        sew2_ref,     # (hid, Cout)           f32    SE Linear 2 (bias-free)
        x_out_ref,    # (1, H, W, Cout)       f32
        xs_out_ref,   # (1, H, W, Cout)       f32
        xpad_ref,     # (H+2, W+2, Cin)       f32    scratch: padded input
        p1_ref,       # (H, W, 9*Cin)         bf16   scratch: im2col patches (conv1)
        h1pad_ref,    # (H+2, W+2, Cout)      f32    scratch: padded h1
        p2_ref):      # (H, W, 9*Cout)        bf16   scratch: im2col patches (conv2)
    _, H, W, Cin = x_ref.shape
    Cout = x_out_ref.shape[-1]
    bf16 = jnp.bfloat16

    # ---- conv1: in-VMEM halo + im2col + single big-K MXU matmul -------------
    xpad_ref[...] = jnp.zeros_like(xpad_ref)
    xpad_ref[1:H + 1, 1:W + 1, :] = x_ref[0].astype(jnp.float32)
    for dy in range(3):
        for dx in range(3):
            c0 = (dy * 3 + dx) * Cin
            p1_ref[:, :, c0:c0 + Cin] = xpad_ref[dy:dy + H, dx:dx + W, :].astype(bf16)
    acc1 = jnp.dot(p1_ref[...].reshape(H * W, 9 * Cin), w1_ref[...],
                   preferred_element_type=jnp.float32)          # (H*W, Cout) f32
    # conv bias folded into BN bias: y = acc*s + (b*s + t)
    h1 = jnp.maximum(acc1 * s1_ref[...] + fb1_ref[...], 0.0)

    # ---- conv2 (no norm / act); h1 never leaves VMEM ------------------------
    h1pad_ref[...] = jnp.zeros_like(h1pad_ref)
    h1pad_ref[1:H + 1, 1:W + 1, :] = h1.reshape(H, W, Cout)
    for dy in range(3):
        for dx in range(3):
            c0 = (dy * 3 + dx) * Cout
            p2_ref[:, :, c0:c0 + Cout] = h1pad_ref[dy:dy + H, dx:dx + W, :].astype(bf16)
    xs = jnp.dot(p2_ref[...].reshape(H * W, 9 * Cout), w2_ref[...],
                 preferred_element_type=jnp.float32) + b2_ref[...]   # (H*W, Cout)
    xs_out_ref[...] = xs.reshape(1, H, W, Cout).astype(xs_out_ref.dtype)

    # ---- BN + ReLU + SqueezeExcite epilogue (f32) ---------------------------
    x2 = jnp.maximum(xs * s2_ref[...] + t2_ref[...], 0.0)           # (H*W, Cout)
    gap = jnp.mean(x2, axis=0, keepdims=True)                       # (1, Cout)
    hse = jnp.maximum(jnp.dot(gap, sew1_ref[...],
                              preferred_element_type=jnp.float32), 0.0)
    gate = jax.nn.sigmoid(jnp.dot(hse, sew2_ref[...],
                                  preferred_element_type=jnp.float32))  # (1, Cout)
    x_out_ref[...] = (x2 * gate).reshape(1, H, W, Cout).astype(x_out_ref.dtype)


def local_conv_block_forward(x_nchw, p):
    """Returns (x, xs), both NCHW f32, matching the PyTorch module (eval mode)."""
    N, Cin, H, W = x_nchw.shape
    Cout = p["w1"].shape[-1]
    hid = p["se_w1"].shape[-1]
    bf16 = jnp.bfloat16

    # NCHW -> NHWC; matmul operands in bf16 (halves HBM read traffic).
    x = jnp.transpose(x_nchw, (0, 2, 3, 1)).astype(bf16)
    w1c = p["w1"].reshape(9 * Cin, Cout).astype(bf16)    # HWIO -> (9*Cin, Cout)
    w2c = p["w2"].reshape(9 * Cout, Cout).astype(bf16)
    s1 = p["bn1_scale"]
    fb1 = p["b1"] * s1 + p["bn1_bias"]                   # fold conv1 bias into BN1 bias
    b2 = p["b2"]
    s2, t2 = p["bn2_scale"], p["bn2_bias"]

    x_out, xs_out = pl.pallas_call(
        _fused_local_conv_block_kernel,
        out_shape=(jax.ShapeDtypeStruct((N, H, W, Cout), jnp.float32),
                   jax.ShapeDtypeStruct((N, H, W, Cout), jnp.float32)),
        grid=(N,),
        in_specs=[
            pl.BlockSpec((1, H, W, Cin), lambda n: (n, 0, 0, 0)),
            pl.BlockSpec((9 * Cin, Cout), lambda n: (0, 0)),
            pl.BlockSpec((9 * Cout, Cout), lambda n: (0, 0)),
            pl.BlockSpec((1, Cout), lambda n: (0, 0)),
            pl.BlockSpec((1, Cout), lambda n: (0, 0)),
            pl.BlockSpec((1, Cout), lambda n: (0, 0)),
            pl.BlockSpec((1, Cout), lambda n: (0, 0)),
            pl.BlockSpec((1, Cout), lambda n: (0, 0)),
            pl.BlockSpec((Cout, hid), lambda n: (0, 0)),
            pl.BlockSpec((hid, Cout), lambda n: (0, 0)),
        ],
        out_specs=[
            pl.BlockSpec((1, H, W, Cout), lambda n: (n, 0, 0, 0)),
            pl.BlockSpec((1, H, W, Cout), lambda n: (n, 0, 0, 0)),
        ],
        scratch_shapes=[
            pltpu.VMEM((H + 2, W + 2, Cin), jnp.float32),
            pltpu.VMEM((H, W, 9 * Cin), bf16),
            pltpu.VMEM((H + 2, W + 2, Cout), jnp.float32),
            pltpu.VMEM((H, W, 9 * Cout), bf16),
        ],
        compiler_params=pltpu.CompilerParams(
            dimension_semantics=("parallel",),
            vmem_limit_bytes=48 * 1024 * 1024),
    )(x, w1c, w2c, s1, fb1, b2, s2, t2, p["se_w1"], p["se_w2"])

    return (jnp.transpose(x_out, (0, 3, 1, 2)),
            jnp.transpose(xs_out, (0, 3, 1, 2)))


# ----------------------------------------------------------------------------
# Parameter setup (BN folded to per-channel scale/bias; inference mode).
# ----------------------------------------------------------------------------
def _fold_bn(gamma, beta, mean, var, eps=1e-5):
    scale = gamma / jnp.sqrt(var + eps)
    bias = beta - mean * scale
    return (scale.reshape(1, -1).astype(jnp.float32),
            bias.reshape(1, -1).astype(jnp.float32))


def init_params(key, in_features, out_features, reduction=8):
    hid = max(1, out_features // reduction)
    ks = jax.random.split(key, 16)
    p = {}
    # conv1 (conv_block: conv + BN + ReLU)
    p["w1"] = 0.1 * jax.random.normal(ks[0], (3, 3, in_features, out_features), jnp.float32)
    p["b1"] = 0.05 * jax.random.normal(ks[1], (1, out_features), jnp.float32)
    p["bn1_scale"], p["bn1_bias"] = _fold_bn(
        1.0 + 0.1 * jax.random.normal(ks[2], (out_features,)),
        0.05 * jax.random.normal(ks[3], (out_features,)),
        0.05 * jax.random.normal(ks[4], (out_features,)),
        0.5 + jax.random.uniform(ks[5], (out_features,)))
    # conv2 (conv_block: conv only, no norm, no activation)
    p["w2"] = 0.1 * jax.random.normal(ks[6], (3, 3, out_features, out_features), jnp.float32)
    p["b2"] = 0.05 * jax.random.normal(ks[7], (1, out_features), jnp.float32)
    # self.bn (BatchNorm2d applied to xs)
    p["bn2_scale"], p["bn2_bias"] = _fold_bn(
        1.0 + 0.1 * jax.random.normal(ks[8], (out_features,)),
        0.05 * jax.random.normal(ks[9], (out_features,)),
        0.05 * jax.random.normal(ks[10], (out_features,)),
        0.5 + jax.random.uniform(ks[11], (out_features,)))
    # SqueezeExcite (two bias-free Linears)
    p["se_w1"] = 0.3 * jax.random.normal(ks[12], (out_features, hid), jnp.float32)
    p["se_w2"] = 0.3 * jax.random.normal(ks[13], (hid, out_features), jnp.float32)
    return p


# ----------------------------------------------------------------------------
# Pure-JAX reference mirroring the kernel's numerics (bf16 conv operands,
# f32 accumulation / epilogue).  Correctness check only.
# ----------------------------------------------------------------------------
def _ref_forward(x_nchw, p):
    bf16 = jnp.bfloat16

    def conv(xb, wb):
        return lax.conv_general_dilated(
            xb.astype(bf16), wb.astype(bf16), (1, 1), "SAME",
            dimension_numbers=("NHWC", "HWIO", "NHWC"),
            preferred_element_type=jnp.float32)

    x = jnp.transpose(x_nchw, (0, 2, 3, 1)).astype(jnp.float32)
    s1 = p["bn1_scale"]
    fb1 = p["b1"] * s1 + p["bn1_bias"]
    h1 = jax.nn.relu(conv(x, p["w1"]) * s1 + fb1)
    xs = conv(h1, p["w2"]) + p["b2"]
    x2 = jax.nn.relu(xs * p["bn2_scale"] + p["bn2_bias"])
    gap = jnp.mean(x2, axis=(1, 2))                                   # (N, C)
    g = jax.nn.sigmoid(jax.nn.relu(gap @ p["se_w1"]) @ p["se_w2"])    # (N, C)
    out = x2 * g[:, None, None, :]
    return (jnp.transpose(out, (0, 3, 1, 2)),
            jnp.transpose(xs, (0, 3, 1, 2)))


if __name__ == "__main__":
    N, C_IN, C_OUT, H, W = 2, 4, 16, 16, 16

    key = jax.random.PRNGKey(0)
    k_x, k_p = jax.random.split(key)
    x = jax.random.normal(k_x, (N, C_IN, H, W), jnp.float32)   # NCHW like PyTorch
    params = init_params(k_p, C_IN, C_OUT, reduction=8)

    out_x, out_xs = local_conv_block_forward(x, params)
    out_x, out_xs = jax.block_until_ready((out_x, out_xs))

    ref_x, ref_xs = _ref_forward(x, params)
    assert out_x.shape == (N, C_OUT, H, W) and out_xs.shape == (N, C_OUT, H, W)
    assert jnp.allclose(out_xs, ref_xs, atol=2e-3, rtol=2e-3)
    assert jnp.allclose(out_x, ref_x, atol=2e-3, rtol=2e-3)

    print("KERNEL_OK")
</pallas_src>

<mosaic_0001>
module attributes {stable_mosaic.version = 11 : i64} {
  func.func @_fused_local_conv_block_kernel(%arg0: i32, %arg1: memref<1x16x16x4xbf16, #tpu.memory_space<vmem>>, %arg2: memref<36x16xbf16, #tpu.memory_space<vmem>>, %arg3: memref<144x16xbf16, #tpu.memory_space<vmem>>, %arg4: memref<1x16xf32, #tpu.memory_space<vmem>>, %arg5: memref<1x16xf32, #tpu.memory_space<vmem>>, %arg6: memref<1x16xf32, #tpu.memory_space<vmem>>, %arg7: memref<1x16xf32, #tpu.memory_space<vmem>>, %arg8: memref<1x16xf32, #tpu.memory_space<vmem>>, %arg9: memref<16x2xf32, #tpu.memory_space<vmem>>, %arg10: memref<2x16xf32, #tpu.memory_space<vmem>>, %arg11: memref<1x16x16x16xf32, #tpu.memory_space<vmem>>, %arg12: memref<1x16x16x16xf32, #tpu.memory_space<vmem>>, %arg13: memref<18x18x4xf32, #tpu.memory_space<vmem>>, %arg14: memref<16x16x36xbf16, #tpu.memory_space<vmem>>, %arg15: memref<18x18x16xf32, #tpu.memory_space<vmem>>, %arg16: memref<16x16x144xbf16, #tpu.memory_space<vmem>>) attributes {dimension_semantics = [#tpu.dimension_semantics<parallel>], iteration_bounds = array<i64: 2>, scalar_prefetch = 0 : i64, scratch_operands = 4 : i64, tpu.core_type = #tpu.core_type<tc>, window_params = [{transform_indices = @transform_0, window_bounds = array<i64: 1, 16, 16, 4>}, {pipeline_mode = #tpu.pipeline_mode<synchronous>, transform_indices = @transform_1, window_bounds = array<i64: 36, 16>}, {pipeline_mode = #tpu.pipeline_mode<synchronous>, transform_indices = @transform_2, window_bounds = array<i64: 144, 16>}, {pipeline_mode = #tpu.pipeline_mode<synchronous>, transform_indices = @transform_3, window_bounds = array<i64: 1, 16>}, {pipeline_mode = #tpu.pipeline_mode<synchronous>, transform_indices = @transform_4, window_bounds = array<i64: 1, 16>}, {pipeline_mode = #tpu.pipeline_mode<synchronous>, transform_indices = @transform_5, window_bounds = array<i64: 1, 16>}, {pipeline_mode = #tpu.pipeline_mode<synchronous>, transform_indices = @transform_6, window_bounds = array<i64: 1, 16>}, {pipeline_mode = #tpu.pipeline_mode<synchronous>, transform_indices = @transform_7, window_bounds = array<i64: 1, 16>}, {pipeline_mode = #tpu.pipeline_mode<synchronous>, transform_indices = @transform_8, window_bounds = array<i64: 16, 2>}, {pipeline_mode = #tpu.pipeline_mode<synchronous>, transform_indices = @transform_9, window_bounds = array<i64: 2, 16>}, {transform_indices = @transform_10, window_bounds = array<i64: 1, 16, 16, 16>}, {transform_indices = @transform_11, window_bounds = array<i64: 1, 16, 16, 16>}]} {
    %cst = arith.constant 0.000000e+00 : f32
    %0 = vector.broadcast %cst : f32 to vector<18x18x4xf32>
    %c0 = arith.constant 0 : index
    %c0_0 = arith.constant 0 : index
    %c0_1 = arith.constant 0 : index
    %1 = vector.load %arg13[%c0, %c0_0, %c0_1] : memref<18x18x4xf32, #tpu.memory_space<vmem>>, vector<18x18x4xf32>
    tpu.vector_store %arg13[%c0, %c0_0, %c0_1], %0 {strides = array<i32>} : memref<18x18x4xf32, #tpu.memory_space<vmem>>, vector<18x18x4xf32>,
    %c0_2 = arith.constant 0 : index
    %c0_3 = arith.constant 0 : index
    %c0_4 = arith.constant 0 : index
    %c0_5 = arith.constant 0 : index
    %2 = vector.load %arg1[%c0_2, %c0_3, %c0_4, %c0_5] : memref<1x16x16x4xbf16, #tpu.memory_space<vmem>>, vector<1x16x16x4xbf16>
    %3 = vector.shape_cast %2 : vector<1x16x16x4xbf16> to vector<16x16x4xbf16>
    %4 = arith.extf %3 : vector<16x16x4xbf16> to vector<16x16x4xf32>
    %c1 = arith.constant 1 : index
    %c1_6 = arith.constant 1 : index
    %c0_7 = arith.constant 0 : index
    %5 = vector.load %arg13[%c1, %c1_6, %c0_7] : memref<18x18x4xf32, #tpu.memory_space<vmem>>, vector<16x16x4xf32>
    tpu.vector_store %arg13[%c1, %c1_6, %c0_7], %4 {strides = array<i32>} : memref<18x18x4xf32, #tpu.memory_space<vmem>>, vector<16x16x4xf32>,
    %c0_8 = arith.constant 0 : index
    %c0_9 = arith.constant 0 : index
    %c0_10 = arith.constant 0 : index
    %6 = vector.load %arg13[%c0_8, %c0_9, %c0_10] : memref<18x18x4xf32, #tpu.memory_space<vmem>>, vector<16x16x4xf32>
    %7 = arith.truncf %6 : vector<16x16x4xf32> to vector<16x16x4xbf16>
    %c0_11 = arith.constant 0 : index
    %c0_12 = arith.constant 0 : index
    %c0_13 = arith.constant 0 : index
    %8 = vector.load %arg14[%c0_11, %c0_12, %c0_13] : memref<16x16x36xbf16, #tpu.memory_space<vmem>>, vector<16x16x4xbf16>
    tpu.vector_store %arg14[%c0_11, %c0_12, %c0_13], %7 {strides = array<i32>} : memref<16x16x36xbf16, #tpu.memory_space<vmem>>, vector<16x16x4xbf16>,
    %c0_14 = arith.constant 0 : index
    %c1_15 = arith.constant 1 : index
    %c0_16 = arith.constant 0 : index
    %9 = vector.load %arg13[%c0_14, %c1_15, %c0_16] : memref<18x18x4xf32, #tpu.memory_space<vmem>>, vector<16x16x4xf32>
    %10 = arith.truncf %9 : vector<16x16x4xf32> to vector<16x16x4xbf16>
    %c0_17 = arith.constant 0 : index
    %c0_18 = arith.constant 0 : index
    %c4 = arith.constant 4 : index
    %11 = vector.load %arg14[%c0_17, %c0_18, %c4] : memref<16x16x36xbf16, #tpu.memory_space<vmem>>, vector<16x16x4xbf16>
    tpu.vector_store %arg14[%c0_17, %c0_18, %c4], %10 {strides = array<i32>} : memref<16x16x36xbf16, #tpu.memory_space<vmem>>, vector<16x16x4xbf16>,
    %c0_19 = arith.constant 0 : index
    %c2 = arith.constant 2 : index
    %c0_20 = arith.constant 0 : index
    %12 = vector.load %arg13[%c0_19, %c2, %c0_20] : memref<18x18x4xf32, #tpu.memory_space<vmem>>, vector<16x16x4xf32>
    %13 = arith.truncf %12 : vector<16x16x4xf32> to vector<16x16x4xbf16>
    %c0_21 = arith.constant 0 : index
    %c0_22 = arith.constant 0 : index
    %c8 = arith.constant 8 : index
    %14 = vector.load %arg14[%c0_21, %c0_22, %c8] : memref<16x16x36xbf16, #tpu.memory_space<vmem>>, vector<16x16x4xbf16>
    tpu.vector_store %arg14[%c0_21, %c0_22, %c8], %13 {strides = array<i32>} : memref<16x16x36xbf16, #tpu.memory_space<vmem>>, vector<16x16x4xbf16>,
    %c1_23 = arith.constant 1 : index
    %c0_24 = arith.constant 0 : index
    %c0_25 = arith.constant 0 : index
    %15 = vector.load %arg13[%c1_23, %c0_24, %c0_25] : memref<18x18x4xf32, #tpu.memory_space<vmem>>, vector<16x16x4xf32>
    %16 = arith.truncf %15 : vector<16x16x4xf32> to vector<16x16x4xbf16>
    %c0_26 = arith.constant 0 : index
    %c0_27 = arith.constant 0 : index
    %c12 = arith.constant 12 : index
    %17 = vector.load %arg14[%c0_26, %c0_27, %c12] : memref<16x16x36xbf16, #tpu.memory_space<vmem>>, vector<16x16x4xbf16>
    tpu.vector_store %arg14[%c0_26, %c0_27, %c12], %16 {strides = array<i32>} : memref<16x16x36xbf16, #tpu.memory_space<vmem>>, vector<16x16x4xbf16>,
    %c1_28 = arith.constant 1 : index
    %c1_29 = arith.constant 1 : index
    %c0_30 = arith.constant 0 : index
    %18 = vector.load %arg13[%c1_28, %c1_29, %c0_30] : memref<18x18x4xf32, #tpu.memory_space<vmem>>, vector<16x16x4xf32>
    %19 = arith.truncf %18 : vector<16x16x4xf32> to vector<16x16x4xbf16>
    %c0_31 = arith.constant 0 : index
    %c0_32 = arith.constant 0 : index
    %c16 = arith.constant 16 : index
    %20 = vector.load %arg14[%c0_31, %c0_32, %c16] : memref<16x16x36xbf16, #tpu.memory_space<vmem>>, vector<16x16x4xbf16>
    tpu.vector_store %arg14[%c0_31, %c0_32, %c16], %19 {strides = array<i32>} : memref<16x16x36xbf16, #tpu.memory_space<vmem>>, vector<16x16x4xbf16>,
    %c1_33 = arith.constant 1 : index
    %c2_34 = arith.constant 2 : index
    %c0_35 = arith.constant 0 : index
    %21 = vector.load %arg13[%c1_33, %c2_34, %c0_35] : memref<18x18x4xf32, #tpu.memory_space<vmem>>, vector<16x16x4xf32>
    %22 = arith.truncf %21 : vector<16x16x4xf32> to vector<16x16x4xbf16>
    %c0_36 = arith.constant 0 : index
    %c0_37 = arith.constant 0 : index
    %c20 = arith.constant 20 : index
    %23 = vector.load %arg14[%c0_36, %c0_37, %c20] : memref<16x16x36xbf16, #tpu.memory_space<vmem>>, vector<16x16x4xbf16>
    tpu.vector_store %arg14[%c0_36, %c0_37, %c20], %22 {strides = array<i32>} : memref<16x16x36xbf16, #tpu.memory_space<vmem>>, vector<16x16x4xbf16>,
    %c2_38 = arith.constant 2 : index
    %c0_39 = arith.constant 0 : index
    %c0_40 = arith.constant 0 : index
    %24 = vector.load %arg13[%c2_38, %c0_39, %c0_40] : memref<18x18x4xf32, #tpu.memory_space<vmem>>, vector<16x16x4xf32>
    %25 = arith.truncf %24 : vector<16x16x4xf32> to vector<16x16x4xbf16>
    %c0_41 = arith.constant 0 : index
    %c0_42 = arith.constant 0 : index
    %c24 = arith.constant 24 : index
    %26 = vector.load %arg14[%c0_41, %c0_42, %c24] : memref<16x16x36xbf16, #tpu.memory_space<vmem>>, vector<16x16x4xbf16>
    tpu.vector_store %arg14[%c0_41, %c0_42, %c24], %25 {strides = array<i32>} : memref<16x16x36xbf16, #tpu.memory_space<vmem>>, vector<16x16x4xbf16>,
    %c2_43 = arith.constant 2 : index
    %c1_44 = arith.constant 1 : index
    %c0_45 = arith.constant 0 : index
    %27 = vector.load %arg13[%c2_43, %c1_44, %c0_45] : memref<18x18x4xf32, #tpu.memory_space<vmem>>, vector<16x16x4xf32>
    %28 = arith.truncf %27 : vector<16x16x4xf32> to vector<16x16x4xbf16>
    %c0_46 = arith.constant 0 : index
    %c0_47 = arith.constant 0 : index
    %c28 = arith.constant 28 : index
    %29 = vector.load %arg14[%c0_46, %c0_47, %c28] : memref<16x16x36xbf16, #tpu.memory_space<vmem>>, vector<16x16x4xbf16>
    tpu.vector_store %arg14[%c0_46, %c0_47, %c28], %28 {strides = array<i32>} : memref<16x16x36xbf16, #tpu.memory_space<vmem>>, vector<16x16x4xbf16>,
    %c2_48 = arith.constant 2 : index
    %c2_49 = arith.constant 2 : index
    %c0_50 = arith.constant 0 : index
    %30 = vector.load %arg13[%c2_48, %c2_49, %c0_50] : memref<18x18x4xf32, #tpu.memory_space<vmem>>, vector<16x16x4xf32>
    %31 = arith.truncf %30 : vector<16x16x4xf32> to vector<16x16x4xbf16>
    %c0_51 = arith.constant 0 : index
    %c0_52 = arith.constant 0 : index
    %c32 = arith.constant 32 : index
    %32 = vector.load %arg14[%c0_51, %c0_52, %c32] : memref<16x16x36xbf16, #tpu.memory_space<vmem>>, vector<16x16x4xbf16>
    tpu.vector_store %arg14[%c0_51, %c0_52, %c32], %31 {strides = array<i32>} : memref<16x16x36xbf16, #tpu.memory_space<vmem>>, vector<16x16x4xbf16>,
    %c0_53 = arith.constant 0 : index
    %c0_54 = arith.constant 0 : index
    %c0_55 = arith.constant 0 : index
    %33 = vector.load %arg14[%c0_53, %c0_54, %c0_55] : memref<16x16x36xbf16, #tpu.memory_space<vmem>>, vector<16x16x36xbf16>
    %34 = vector.shape_cast %33 : vector<16x16x36xbf16> to vector<256x36xbf16>
    %c0_56 = arith.constant 0 : index
    %c0_57 = arith.constant 0 : index
    %35 = vector.load %arg2[%c0_56, %c0_57] : memref<36x16xbf16, #tpu.memory_space<vmem>>, vector<36x16xbf16>
    %cst_58 = arith.constant dense<0.000000e+00> : vector<256x16xf32>
    %36 = tpu.matmul %34, %35, %cst_58 {dimension_numbers = #tpu.dot_dimension_numbers<[1], [0], [0], [1], [0, 0, 1, 1], [], []>} : vector<256x36xbf16>, vector<36x16xbf16>, vector<256x16xf32> -> vector<256x16xf32>
    %c0_59 = arith.constant 0 : index
    %c0_60 = arith.constant 0 : index
    %37 = vector.load %arg4[%c0_59, %c0_60] : memref<1x16xf32, #tpu.memory_space<vmem>>, vector<1x16xf32>
    %38 = vector.broadcast %37 : vector<1x16xf32> to vector<256x16xf32>
    %39 = arith.mulf %36, %38 : vector<256x16xf32>
    %c0_61 = arith.constant 0 : index
    %c0_62 = arith.constant 0 : index
    %40 = vector.load %arg5[%c0_61, %c0_62] : memref<1x16xf32, #tpu.memory_space<vmem>>, vector<1x16xf32>
    %41 = vector.broadcast %40 : vector<1x16xf32> to vector<256x16xf32>
    %42 = arith.addf %39, %41 : vector<256x16xf32>
    %cst_63 = arith.constant 0.000000e+00 : f32
    %43 = vector.broadcast %cst_63 : f32 to vector<256x16xf32>
    %44 = arith.maximumf %42, %43 : vector<256x16xf32>
    %cst_64 = arith.constant 0.000000e+00 : f32
    %45 = vector.broadcast %cst_64 : f32 to vector<18x18x16xf32>
    %c0_65 = arith.constant 0 : index
    %c0_66 = arith.constant 0 : index
    %c0_67 = arith.constant 0 : index
    %46 = vector.load %arg15[%c0_65, %c0_66, %c0_67] : memref<18x18x16xf32, #tpu.memory_space<vmem>>, vector<18x18x16xf32>
    tpu.vector_store %arg15[%c0_65, %c0_66, %c0_67], %45 {strides = array<i32>} : memref<18x18x16xf32, #tpu.memory_space<vmem>>, vector<18x18x16xf32>,
    %47 = vector.shape_cast %44 : vector<256x16xf32> to vector<16x16x16xf32>
    %c1_68 = arith.constant 1 : index
    %c1_69 = arith.constant 1 : index
    %c0_70 = arith.constant 0 : index
    %48 = vector.load %arg15[%c1_68, %c1_69, %c0_70] : memref<18x18x16xf32, #tpu.memory_space<vmem>>, vector<16x16x16xf32>
    tpu.vector_store %arg15[%c1_68, %c1_69, %c0_70], %47 {strides = array<i32>} : memref<18x18x16xf32, #tpu.memory_space<vmem>>, vector<16x16x16xf32>,
    %c0_71 = arith.constant 0 : index
    %c0_72 = arith.constant 0 : index
    %c0_73 = arith.constant 0 : index
    %49 = vector.load %arg15[%c0_71, %c0_72, %c0_73] : memref<18x18x16xf32, #tpu.memory_space<vmem>>, vector<16x16x16xf32>
    %50 = arith.truncf %49 : vector<16x16x16xf32> to vector<16x16x16xbf16>
    %c0_74 = arith.constant 0 : index
    %c0_75 = arith.constant 0 : index
    %c0_76 = arith.constant 0 : index
    %51 = vector.load %arg16[%c0_74, %c0_75, %c0_76] : memref<16x16x144xbf16, #tpu.memory_space<vmem>>, vector<16x16x16xbf16>
    tpu.vector_store %arg16[%c0_74, %c0_75, %c0_76], %50 {strides = array<i32>} : memref<16x16x144xbf16, #tpu.memory_space<vmem>>, vector<16x16x16xbf16>,
    %c0_77 = arith.constant 0 : index
    %c1_78 = arith.constant 1 : index
    %c0_79 = arith.constant 0 : index
    %52 = vector.load %arg15[%c0_77, %c1_78, %c0_79] : memref<18x18x16xf32, #tpu.memory_space<vmem>>, vector<16x16x16xf32>
    %53 = arith.truncf %52 : vector<16x16x16xf32> to vector<16x16x16xbf16>
    %c0_80 = arith.constant 0 : index
    %c0_81 = arith.constant 0 : index
    %c16_82 = arith.constant 16 : index
    %54 = vector.load %arg16[%c0_80, %c0_81, %c16_82] : memref<16x16x144xbf16, #tpu.memory_space<vmem>>, vector<16x16x16xbf16>
    tpu.vector_store %arg16[%c0_80, %c0_81, %c16_82], %53 {strides = array<i32>} : memref<16x16x144xbf16, #tpu.memory_space<vmem>>, vector<16x16x16xbf16>,
    %c0_83 = arith.constant 0 : index
    %c2_84 = arith.constant 2 : index
    %c0_85 = arith.constant 0 : index
    %55 = vector.load %arg15[%c0_83, %c2_84, %c0_85] : memref<18x18x16xf32, #tpu.memory_space<vmem>>, vector<16x16x16xf32>
    %56 = arith.truncf %55 : vector<16x16x16xf32> to vector<16x16x16xbf16>
    %c0_86 = arith.constant 0 : index
    %c0_87 = arith.constant 0 : index
    %c32_88 = arith.constant 32 : index
    %57 = vector.load %arg16[%c0_86, %c0_87, %c32_88] : memref<16x16x144xbf16, #tpu.memory_space<vmem>>, vector<16x16x16xbf16>
    tpu.vector_store %arg16[%c0_86, %c0_87, %c32_88], %56 {strides = array<i32>} : memref<16x16x144xbf16, #tpu.memory_space<vmem>>, vector<16x16x16xbf16>,
    %c1_89 = arith.constant 1 : index
    %c0_90 = arith.constant 0 : index
    %c0_91 = arith.constant 0 : index
    %58 = vector.load %arg15[%c1_89, %c0_90, %c0_91] : memref<18x18x16xf32, #tpu.memory_space<vmem>>, vector<16x16x16xf32>
    %59 = arith.truncf %58 : vector<16x16x16xf32> to vector<16x16x16xbf16>
    %c0_92 = arith.constant 0 : index
    %c0_93 = arith.constant 0 : index
    %c48 = arith.constant 48 : index
    %60 = vector.load %arg16[%c0_92, %c0_93, %c48] : memref<16x16x144xbf16, #tpu.memory_space<vmem>>, vector<16x16x16xbf16>
    tpu.vector_store %arg16[%c0_92, %c0_93, %c48], %59 {strides = array<i32>} : memref<16x16x144xbf16, #tpu.memory_space<vmem>>, vector<16x16x16xbf16>,
    %c1_94 = arith.constant 1 : index
    %c1_95 = arith.constant 1 : index
    %c0_96 = arith.constant 0 : index
    %61 = vector.load %arg15[%c1_94, %c1_95, %c0_96] : memref<18x18x16xf32, #tpu.memory_space<vmem>>, vector<16x16x16xf32>
    %62 = arith.truncf %61 : vector<16x16x16xf32> to vector<16x16x16xbf16>
    %c0_97 = arith.constant 0 : index
    %c0_98 = arith.constant 0 : index
    %c64 = arith.constant 64 : index
    %63 = vector.load %arg16[%c0_97, %c0_98, %c64] : memref<16x16x144xbf16, #tpu.memory_space<vmem>>, vector<16x16x16xbf16>
    tpu.vector_store %arg16[%c0_97, %c0_98, %c64], %62 {strides = array<i32>} : memref<16x16x144xbf16, #tpu.memory_space<vmem>>, vector<16x16x16xbf16>,
    %c1_99 = arith.constant 1 : index
    %c2_100 = arith.constant 2 : index
    %c0_101 = arith.constant 0 : index
    %64 = vector.load %arg15[%c1_99, %c2_100, %c0_101] : memref<18x18x16xf32, #tpu.memory_space<vmem>>, vector<16x16x16xf32>
    %65 = arith.truncf %64 : vector<16x16x16xf32> to vector<16x16x16xbf16>
    %c0_102 = arith.constant 0 : index
    %c0_103 = arith.constant 0 : index
    %c80 = arith.constant 80 : index
    %66 = vector.load %arg16[%c0_102, %c0_103, %c80] : memref<16x16x144xbf16, #tpu.memory_space<vmem>>, vector<16x16x16xbf16>
    tpu.vector_store %arg16[%c0_102, %c0_103, %c80], %65 {strides = array<i32>} : memref<16x16x144xbf16, #tpu.memory_space<vmem>>, vector<16x16x16xbf16>,
    %c2_104 = arith.constant 2 : index
    %c0_105 = arith.constant 0 : index
    %c0_106 = arith.constant 0 : index
    %67 = vector.load %arg15[%c2_104, %c0_105, %c0_106] : memref<18x18x16xf32, #tpu.memory_space<vmem>>, vector<16x16x16xf32>
    %68 = arith.truncf %67 : vector<16x16x16xf32> to vector<16x16x16xbf16>
    %c0_107 = arith.constant 0 : index
    %c0_108 = arith.constant 0 : index
    %c96 = arith.constant 96 : index
    %69 = vector.load %arg16[%c0_107, %c0_108, %c96] : memref<16x16x144xbf16, #tpu.memory_space<vmem>>, vector<16x16x16xbf16>
    tpu.vector_store %arg16[%c0_107, %c0_108, %c96], %68 {strides = array<i32>} : memref<16x16x144xbf16, #tpu.memory_space<vmem>>, vector<16x16x16xbf16>,
    %c2_109 = arith.constant 2 : index
    %c1_110 = arith.constant 1 : index
    %c0_111 = arith.constant 0 : index
    %70 = vector.load %arg15[%c2_109, %c1_110, %c0_111] : memref<18x18x16xf32, #tpu.memory_space<vmem>>, vector<16x16x16xf32>
    %71 = arith.truncf %70 : vector<16x16x16xf32> to vector<16x16x16xbf16>
    %c0_112 = arith.constant 0 : index
    %c0_113 = arith.constant 0 : index
    %c112 = arith.constant 112 : index
    %72 = vector.load %arg16[%c0_112, %c0_113, %c112] : memref<16x16x144xbf16, #tpu.memory_space<vmem>>, vector<16x16x16xbf16>
    tpu.vector_store %arg16[%c0_112, %c0_113, %c112], %71 {strides = array<i32>} : memref<16x16x144xbf16, #tpu.memory_space<vmem>>, vector<16x16x16xbf16>,
    %c2_114 = arith.constant 2 : index
    %c2_115 = arith.constant 2 : index
    %c0_116 = arith.constant 0 : index
    %73 = vector.load %arg15[%c2_114, %c2_115, %c0_116] : memref<18x18x16xf32, #tpu.memory_space<vmem>>, vector<16x16x16xf32>
    %74 = arith.truncf %73 : vector<16x16x16xf32> to vector<16x16x16xbf16>
    %c0_117 = arith.constant 0 : index
    %c0_118 = arith.constant 0 : index
    %c128 = arith.constant 128 : index
    %75 = vector.load %arg16[%c0_117, %c0_118, %c128] : memref<16x16x144xbf16, #tpu.memory_space<vmem>>, vector<16x16x16xbf16>
    tpu.vector_store %arg16[%c0_117, %c0_118, %c128], %74 {strides = array<i32>} : memref<16x16x144xbf16, #tpu.memory_space<vmem>>, vector<16x16x16xbf16>,
    %c0_119 = arith.constant 0 : index
    %c0_120 = arith.constant 0 : index
    %c0_121 = arith.constant 0 : index
    %76 = vector.load %arg16[%c0_119, %c0_120, %c0_121] : memref<16x16x144xbf16, #tpu.memory_space<vmem>>, vector<16x16x144xbf16>
    %77 = vector.shape_cast %76 : vector<16x16x144xbf16> to vector<256x144xbf16>
    %c0_122 = arith.constant 0 : index
    %c0_123 = arith.constant 0 : index
    %78 = vector.load %arg3[%c0_122, %c0_123] : memref<144x16xbf16, #tpu.memory_space<vmem>>, vector<144x16xbf16>
    %cst_124 = arith.constant dense<0.000000e+00> : vector<256x16xf32>
    %79 = tpu.matmul %77, %78, %cst_124 {dimension_numbers = #tpu.dot_dimension_numbers<[1], [0], [0], [1], [0, 0, 1, 1], [], []>} : vector<256x144xbf16>, vector<144x16xbf16>, vector<256x16xf32> -> vector<256x16xf32>
    %c0_125 = arith.constant 0 : index
    %c0_126 = arith.constant 0 : index
    %80 = vector.load %arg6[%c0_125, %c0_126] : memref<1x16xf32, #tpu.memory_space<vmem>>, vector<1x16xf32>
    %81 = vector.broadcast %80 : vector<1x16xf32> to vector<256x16xf32>
    %82 = arith.addf %79, %81 : vector<256x16xf32>
    %83 = vector.shape_cast %82 : vector<256x16xf32> to vector<1x16x16x16xf32>
    %c0_127 = arith.constant 0 : index
    %c0_128 = arith.constant 0 : index
    %c0_129 = arith.constant 0 : index
    %c0_130 = arith.constant 0 : index
    %84 = vector.load %arg12[%c0_127, %c0_128, %c0_129, %c0_130] : memref<1x16x16x16xf32, #tpu.memory_space<vmem>>, vector<1x16x16x16xf32>
    tpu.vector_store %arg12[%c0_127, %c0_128, %c0_129, %c0_130], %83 {strides = array<i32>} : memref<1x16x16x16xf32, #tpu.memory_space<vmem>>, vector<1x16x16x16xf32>,
    %c0_131 = arith.constant 0 : index
    %c0_132 = arith.constant 0 : index
    %85 = vector.load %arg7[%c0_131, %c0_132] : memref<1x16xf32, #tpu.memory_space<vmem>>, vector<1x16xf32>
    %86 = vector.broadcast %85 : vector<1x16xf32> to vector<256x16xf32>
    %87 = arith.mulf %82, %86 : vector<256x16xf32>
    %c0_133 = arith.constant 0 : index
    %c0_134 = arith.constant 0 : index
    %88 = vector.load %arg8[%c0_133, %c0_134] : memref<1x16xf32, #tpu.memory_space<vmem>>, vector<1x16xf32>
    %89 = vector.broadcast %88 : vector<1x16xf32> to vector<256x16xf32>
    %90 = arith.addf %87, %89 : vector<256x16xf32>
    %cst_135 = arith.constant 0.000000e+00 : f32
    %91 = vector.broadcast %cst_135 : f32 to vector<256x16xf32>
    %92 = arith.maximumf %90, %91 : vector<256x16xf32>
    %cst_136 = arith.constant dense<0.000000e+00> : vector<16xf32>
    %93 = vector.multi_reduction <add>, %92, %cst_136 [0] : vector<256x16xf32> to vector<16xf32>
    %94 = vector.shape_cast %93 : vector<16xf32> to vector<1x16xf32>
    %cst_137 = arith.constant 2.560000e+02 : f32
    %95 = vector.broadcast %cst_137 : f32 to vector<1x16xf32>
    %96 = arith.divf %94, %95 : vector<1x16xf32>
    %c0_138 = arith.constant 0 : index
    %c0_139 = arith.constant 0 : index
    %97 = vector.load %arg9[%c0_138, %c0_139] : memref<16x2xf32, #tpu.memory_space<vmem>>, vector<16x2xf32>
    %cst_140 = arith.constant dense<0.000000e+00> : vector<1x2xf32>
    %98 = tpu.matmul %96, %97, %cst_140 {dimension_numbers = #tpu.dot_dimension_numbers<[1], [0], [0], [1], [0, 0, 1, 1], [], []>} : vector<1x16xf32>, vector<16x2xf32>, vector<1x2xf32> -> vector<1x2xf32>
    %cst_141 = arith.constant 0.000000e+00 : f32
    %99 = vector.broadcast %cst_141 : f32 to vector<1x2xf32>
    %100 = arith.maximumf %98, %99 : vector<1x2xf32>
    %c0_142 = arith.constant 0 : index
    %c0_143 = arith.constant 0 : index
    %101 = vector.load %arg10[%c0_142, %c0_143] : memref<2x16xf32, #tpu.memory_space<vmem>>, vector<2x16xf32>
    %cst_144 = arith.constant dense<0.000000e+00> : vector<1x16xf32>
    %102 = tpu.matmul %100, %101, %cst_144 {dimension_numbers = #tpu.dot_dimension_numbers<[1], [0], [0], [1], [0, 0, 1, 1], [], []>} : vector<1x2xf32>, vector<2x16xf32>, vector<1x16xf32> -> vector<1x16xf32>
    %103 = arith.negf %102 : vector<1x16xf32>
    %104 = math.exp %103 : vector<1x16xf32>
    %cst_145 = arith.constant 1.000000e+00 : f32
    %105 = vector.broadcast %cst_145 : f32 to vector<1x16xf32>
    %106 = arith.addf %105, %104 : vector<1x16xf32>
    %107 = arith.divf %105, %106 : vector<1x16xf32>
    %108 = vector.broadcast %107 : vector<1x16xf32> to vector<256x16xf32>
    %109 = arith.mulf %92, %108 : vector<256x16xf32>
    %110 = vector.shape_cast %109 : vector<256x16xf32> to vector<1x16x16x16xf32>
    %c0_146 = arith.constant 0 : index
    %c0_147 = arith.constant 0 : index
    %c0_148 = arith.constant 0 : index
    %c0_149 = arith.constant 0 : index
    %111 = vector.load %arg11[%c0_146, %c0_147, %c0_148, %c0_149] : memref<1x16x16x16xf32, #tpu.memory_space<vmem>>, vector<1x16x16x16xf32>
    tpu.vector_store %arg11[%c0_146, %c0_147, %c0_148, %c0_149], %110 {strides = array<i32>} : memref<1x16x16x16xf32, #tpu.memory_space<vmem>>, vector<1x16x16x16xf32>,
    return
  }
  func.func @transform_0(%arg0: i32) -> (i32, i32, i32, i32) {
    %c0_i32 = arith.constant 0 : i32
    %c0_i32_0 = arith.constant 0 : i32
    %c0_i32_1 = arith.constant 0 : i32
    %c0_i32_2 = arith.constant 0 : i32
    return %arg0, %c0_i32, %c0_i32_0, %c0_i32_1 : i32, i32, i32, i32
  }
  func.func @transform_1(%arg0: i32) -> (i32, i32) {
    %c0_i32 = arith.constant 0 : i32
    %c0_i32_0 = arith.constant 0 : i32
    %c0_i32_1 = arith.constant 0 : i32
    return %c0_i32, %c0_i32_0 : i32, i32
  }
  func.func @transform_2(%arg0: i32) -> (i32, i32) {
    %c0_i32 = arith.constant 0 : i32
    %c0_i32_0 = arith.constant 0 : i32
    %c0_i32_1 = arith.constant 0 : i32
    return %c0_i32, %c0_i32_0 : i32, i32
  }
  func.func @transform_3(%arg0: i32) -> (i32, i32) {
    %c0_i32 = arith.constant 0 : i32
    %c0_i32_0 = arith.constant 0 : i32
    %c0_i32_1 = arith.constant 0 : i32
    return %c0_i32, %c0_i32_0 : i32, i32
  }
  func.func @transform_4(%arg0: i32) -> (i32, i32) {
    %c0_i32 = arith.constant 0 : i32
    %c0_i32_0 = arith.constant 0 : i32
    %c0_i32_1 = arith.constant 0 : i32
    return %c0_i32, %c0_i32_0 : i32, i32
  }
  func.func @transform_5(%arg0: i32) -> (i32, i32) {
    %c0_i32 = arith.constant 0 : i32
    %c0_i32_0 = arith.constant 0 : i32
    %c0_i32_1 = arith.constant 0 : i32
    return %c0_i32, %c0_i32_0 : i32, i32
  }
  func.func @transform_6(%arg0: i32) -> (i32, i32) {
    %c0_i32 = arith.constant 0 : i32
    %c0_i32_0 = arith.constant 0 : i32
    %c0_i32_1 = arith.constant 0 : i32
    return %c0_i32, %c0_i32_0 : i32, i32
  }
  func.func @transform_7(%arg0: i32) -> (i32, i32) {
    %c0_i32 = arith.constant 0 : i32
    %c0_i32_0 = arith.constant 0 : i32
    %c0_i32_1 = arith.constant 0 : i32
    return %c0_i32, %c0_i32_0 : i32, i32
  }
  func.func @transform_8(%arg0: i32) -> (i32, i32) {
    %c0_i32 = arith.constant 0 : i32
    %c0_i32_0 = arith.constant 0 : i32
    %c0_i32_1 = arith.constant 0 : i32
    return %c0_i32, %c0_i32_0 : i32, i32
  }
  func.func @transform_9(%arg0: i32) -> (i32, i32) {
    %c0_i32 = arith.constant 0 : i32
    %c0_i32_0 = arith.constant 0 : i32
    %c0_i32_1 = arith.constant 0 : i32
    return %c0_i32, %c0_i32_0 : i32, i32
  }
  func.func @transform_10(%arg0: i32) -> (i32, i32, i32, i32) {
    %c0_i32 = arith.constant 0 : i32
    %c0_i32_0 = arith.constant 0 : i32
    %c0_i32_1 = arith.constant 0 : i32
    %c0_i32_2 = arith.constant 0 : i32
    return %arg0, %c0_i32, %c0_i32_0, %c0_i32_1 : i32, i32, i32, i32
  }
  func.func @transform_11(%arg0: i32) -> (i32, i32, i32, i32) {
    %c0_i32 = arith.constant 0 : i32
    %c0_i32_0 = arith.constant 0 : i32
    %c0_i32_1 = arith.constant 0 : i32
    %c0_i32_2 = arith.constant 0 : i32
    return %arg0, %c0_i32, %c0_i32_0, %c0_i32_1 : i32, i32, i32, i32
  }
}

</mosaic_0001>

<llo_original>
// kernel: tpu_custom_call.1
$region0: #{tpu_custom_call.1}
  #allocation0 [shape = 'u32[]', space=smem, size = 0x4, offset = 0x4, fixed_abs, tag = 'smem constant byte address 0x4 - core index']
  #allocation1 [shape = 'u32[144,128]{1,0:T(1,128)}', space=vmem, size = 0x12000, scoped, tag = 'internal scratch']
  #allocation2 [shape = 'f32[18,18,4]{2,1,0:T(8,128)}', space=vmem, size = 0x36000, scoped, tag = 'scratch operand']
  #allocation3 [shape = 'bf16[16,16,36]{2,1,0:T(16,128)(2,1)}', space=vmem, size = 0x10000, scoped, tag = 'scratch operand']
  #allocation4 [shape = 'f32[18,18,16]{2,1,0:T(8,128)}', space=vmem, size = 0x36000, scoped, tag = 'scratch operand']
  #allocation5 [shape = 'bf16[16,16,144]{2,1,0:T(16,128)(2,1)}', space=vmem, size = 0x20000, scoped, tag = 'scratch operand']
  %s0 = inlined_call_operand.vmem [shape: bf16[2,16,16,4], index: 0, kind: input, shape index: {}]
  %s1 = inlined_call_operand.vmem [shape: bf16[36,16], index: 1, kind: input, shape index: {}]
  %s2 = inlined_call_operand.vmem [shape: bf16[144,16], index: 2, kind: input, shape index: {}]
  %s3 = inlined_call_operand.vmem [shape: f32[1,16], index: 3, kind: input, shape index: {}]
  %s4 = inlined_call_operand.vmem [shape: f32[1,16], index: 4, kind: input, shape index: {}]
  %s5 = inlined_call_operand.vmem [shape: f32[1,16], index: 5, kind: input, shape index: {}]
  %s6 = inlined_call_operand.vmem [shape: f32[1,16], index: 6, kind: input, shape index: {}]
  %s7 = inlined_call_operand.vmem [shape: f32[1,16], index: 7, kind: input, shape index: {}]
  %s8 = inlined_call_operand.vmem [shape: f32[16,2], index: 8, kind: input, shape index: {}]
  %s9 = inlined_call_operand.vmem [shape: f32[2,16], index: 9, kind: input, shape index: {}]
  %s10 = inlined_call_operand.hbm [shape: f32[2,16,16,16], index: 10, kind: output, shape index: {0}]
  %s11 = inlined_call_operand.hbm [shape: f32[2,16,16,16], index: 11, kind: output, shape index: {1}]
  %12 = xla_tuple %s10, %s11
  %s13 = sld [smem:[#allocation0]]
  $region81: #{tpu_custom_call.1} parent=0
    _
  %s15 = ssub.s32 1, %s13
  %s16 = scalar_select 0, %s15, %s13
  $region1: #{tpu_custom_call.1} parent=0
    #allocation6 [shape = 'u8[262144]{0}', space=vmem, size = 0x40000, scoped, tag = 'output window, operand 0']
    #allocation7 [shape = 's32[2]{0}', space=sflag, size = 0x8, scoped, tag = 'scoped memory for tpu_custom_call.1']
    #allocation8 [shape = 'u8[262144]{0}', space=vmem, size = 0x40000, scoped, tag = 'output window, operand 1']
    #allocation9 [shape = 's32[2]{0}', space=sflag, size = 0x8, scoped, tag = 'scoped memory for tpu_custom_call.1']
    %17 = vsyncpa [#allocation7], 0
    %s18 = scalar_lea.sflag [#allocation7], 1
    %19 = vsyncpa %s18, 0
    %20 = vsyncpa [#allocation9], 0
    %s21 = scalar_lea.sflag [#allocation9], 1
    %22 = vsyncpa %s21, 0
    loop: start=0, step=1, limit=4
    $region2: #{tpu_custom_call.1} parent=1 // loop_pre_header
      _
    $region3: #{tpu_custom_call.1} parent=1 // loop_header
      %s24 = sphi 0, %s28
      %p25 = scmp.ge.s32.totalorder %s24, 4
      %s34 = sphi 0, %s36
      %s37 = sphi 0, %s34
      %s38 = sphi 0, %s37
      %s54 = sphi 0, %s38
      %s58 = sphi 0, %s58
      %s60 = sphi 0, %s58
      %s61 = sphi 0, %s60
      %s75 = sphi 0, %s61
      %s79 = sphi 0, %s79
      %s81 = sphi 0, %s79
      %s82 = sphi 0, %s81
      %s96 = sphi 0, %s82
      %s100 = sphi 0, %s100
      %s102 = sphi 0, %s100
      %s103 = sphi 0, %s102
      %s117 = sphi 0, %s103
      %s121 = sphi 0, %s121
      %s123 = sphi 0, %s121
      %s124 = sphi 0, %s123
      %s138 = sphi 0, %s124
      %s142 = sphi 0, %s142
      %s144 = sphi 0, %s142
      %s145 = sphi 0, %s144
      %s159 = sphi 0, %s145
      %s163 = sphi 0, %s163
      %s165 = sphi 0, %s163
      %s166 = sphi 0, %s165
      %s180 = sphi 0, %s166
      %s184 = sphi 0, %s184
      %s186 = sphi 0, %s184
      %s187 = sphi 0, %s186
      %s201 = sphi 0, %s187
      %s205 = sphi 0, %s205
      %s207 = sphi 0, %s205
      %s208 = sphi 0, %s207
      %s222 = sphi 0, %s208
      %s226 = sphi 0, %s226
      %s228 = sphi 0, %s226
      %s229 = sphi 0, %s228
      %s243 = sphi 0, %s229
      %s249 = sphi 0, %s251
      %s252 = sphi 0, %s249
      %s253 = sphi 0, %s252
      %s269 = sphi 0, %s253
      %s275 = sphi 0, %s277
      %s278 = sphi 0, %s275
      %s279 = sphi 0, %s278
      %s295 = sphi 0, %s279
    $region4: #{tpu_custom_call.1} parent=1 // loop_header_branch
      %27 = sbr.rel (%p25) target = $region8
    $region5: #{tpu_custom_call.1} parent=1 // loop_body
      %s29 = ssub.s32 %s24, 1
      %s30 = ssub.s32 %s24, 2
      %s31 = sadd.s32 %s24, 1
      %s32 = ssub.s32 %s24, %s31
      %p33 = scmp.eq.s32.totalorder %s32, 0
      %s35 = sadd.s32 %s34, 1
      %s36 = scalar_select %p33, %s34, %s35
      %p39 = pneg %p33
      %p40 = scmp.eq.s32.totalorder %s24, 1
      %p41 = por %p39, %p40
      %p42 = scmp.ne.s32.totalorder %s34, %s37
      %p43 = scmp.eq.s32.totalorder %s24, 0
      %p44 = por %p42, %p43
      %p45 = scmp.ne.s32.totalorder %s34, %s37
      %p46 = scmp.eq.s32.totalorder %s29, 1
      %p47 = por %p45, %p46
      %p48 = scmp.ne.s32.totalorder %s37, %s38
      %p49 = scmp.eq.s32.totalorder %s29, 0
      %p50 = por %p48, %p49
      %p51 = scmp.ne.s32.totalorder %s37, %s38
      %p52 = scmp.eq.s32.totalorder %s30, 1
      %p53 = por %p51, %p52
      %p55 = scmp.ne.s32.totalorder %s38, %s54
      %p56 = scmp.eq.s32.totalorder %s30, 0
      %p57 = por %p55, %p56
      %s59 = sadd.s32 %s58, 1
      %p62 = scmp.eq.s32.totalorder %s24, 1
      %p63 = scmp.ne.s32.totalorder %s58, %s60
      %p64 = scmp.eq.s32.totalorder %s24, 0
      %p65 = por %p63, %p64
      %p66 = scmp.ne.s32.totalorder %s58, %s60
      %p67 = scmp.eq.s32.totalorder %s29, 1
      %p68 = por %p66, %p67
      %p69 = scmp.ne.s32.totalorder %s60, %s61
      %p70 = scmp.eq.s32.totalorder %s29, 0
      %p71 = por %p69, %p70
      %p72 = scmp.ne.s32.totalorder %s60, %s61
      %p73 = scmp.eq.s32.totalorder %s30, 1
      %p74 = por %p72, %p73
      %p76 = scmp.ne.s32.totalorder %s61, %s75
      %p77 = scmp.eq.s32.totalorder %s30, 0
      %p78 = por %p76, %p77
      %s80 = sadd.s32 %s79, 1
      %p83 = scmp.eq.s32.totalorder %s24, 1
      %p84 = scmp.ne.s32.totalorder %s79, %s81
      %p85 = scmp.eq.s32.totalorder %s24, 0
      %p86 = por %p84, %p85
      %p87 = scmp.ne.s32.totalorder %s79, %s81
      %p88 = scmp.eq.s32.totalorder %s29, 1
      %p89 = por %p87, %p88
      %p90 = scmp.ne.s32.totalorder %s81, %s82
      %p91 = scmp.eq.s32.totalorder %s29, 0
      %p92 = por %p90, %p91
      %p93 = scmp.ne.s32.totalorder %s81, %s82
      %p94 = scmp.eq.s32.totalorder %s30, 1
      %p95 = por %p93, %p94
      %p97 = scmp.ne.s32.totalorder %s82, %s96
      %p98 = scmp.eq.s32.totalorder %s30, 0
      %p99 = por %p97, %p98
      %s101 = sadd.s32 %s100, 1
      %p104 = scmp.eq.s32.totalorder %s24, 1
      %p105 = scmp.ne.s32.totalorder %s100, %s102
      %p106 = scmp.eq.s32.totalorder %s24, 0
      %p107 = por %p105, %p106
      %p108 = scmp.ne.s32.totalorder %s100, %s102
      %p109 = scmp.eq.s32.totalorder %s29, 1
      %p110 = por %p108, %p109
      %p111 = scmp.ne.s32.totalorder %s102, %s103
      %p112 = scmp.eq.s32.totalorder %s29, 0
      %p113 = por %p111, %p112
      %p114 = scmp.ne.s32.totalorder %s102, %s103
      %p115 = scmp.eq.s32.totalorder %s30, 1
      %p116 = por %p114, %p115
      %p118 = scmp.ne.s32.totalorder %s103, %s117
      %p119 = scmp.eq.s32.totalorder %s30, 0
      %p120 = por %p118, %p119
      %s122 = sadd.s32 %s121, 1
      %p125 = scmp.eq.s32.totalorder %s24, 1
      %p126 = scmp.ne.s32.totalorder %s121, %s123
      %p127 = scmp.eq.s32.totalorder %s24, 0
      %p128 = por %p126, %p127
      %p129 = scmp.ne.s32.totalorder %s121, %s123
      %p130 = scmp.eq.s32.totalorder %s29, 1
      %p131 = por %p129, %p130
      %p132 = scmp.ne.s32.totalorder %s123, %s124
      %p133 = scmp.eq.s32.totalorder %s29, 0
      %p134 = por %p132, %p133
      %p135 = scmp.ne.s32.totalorder %s123, %s124
      %p136 = scmp.eq.s32.totalorder %s30, 1
      %p137 = por %p135, %p136
      %p139 = scmp.ne.s32.totalorder %s124, %s138
      %p140 = scmp.eq.s32.totalorder %s30, 0
      %p141 = por %p139, %p140
      %s143 = sadd.s32 %s142, 1
      %p146 = scmp.eq.s32.totalorder %s24, 1
      %p147 = scmp.ne.s32.totalorder %s142, %s144
      %p148 = scmp.eq.s32.totalorder %s24, 0
      %p149 = por %p147, %p148
      %p150 = scmp.ne.s32.totalorder %s142, %s144
      %p151 = scmp.eq.s32.totalorder %s29, 1
      %p152 = por %p150, %p151
      %p153 = scmp.ne.s32.totalorder %s144, %s145
      %p154 = scmp.eq.s32.totalorder %s29, 0
      %p155 = por %p153, %p154
      %p156 = scmp.ne.s32.totalorder %s144, %s145
      %p157 = scmp.eq.s32.totalorder %s30, 1
      %p158 = por %p156, %p157
      %p160 = scmp.ne.s32.totalorder %s145, %s159
      %p161 = scmp.eq.s32.totalorder %s30, 0
      %p162 = por %p160, %p161
      %s164 = sadd.s32 %s163, 1
      %p167 = scmp.eq.s32.totalorder %s24, 1
      %p168 = scmp.ne.s32.totalorder %s163, %s165
      %p169 = scmp.eq.s32.totalorder %s24, 0
      %p170 = por %p168, %p169
      %p171 = scmp.ne.s32.totalorder %s163, %s165
      %p172 = scmp.eq.s32.totalorder %s29, 1
      %p173 = por %p171, %p172
      %p174 = scmp.ne.s32.totalorder %s165, %s166
      %p175 = scmp.eq.s32.totalorder %s29, 0
      %p176 = por %p174, %p175
      %p177 = scmp.ne.s32.totalorder %s165, %s166
      %p178 = scmp.eq.s32.totalorder %s30, 1
      %p179 = por %p177, %p178
      %p181 = scmp.ne.s32.totalorder %s166, %s180
      %p182 = scmp.eq.s32.totalorder %s30, 0
      %p183 = por %p181, %p182
      %s185 = sadd.s32 %s184, 1
      %p188 = scmp.eq.s32.totalorder %s24, 1
      %p189 = scmp.ne.s32.totalorder %s184, %s186
      %p190 = scmp.eq.s32.totalorder %s24, 0
      %p191 = por %p189, %p190
      %p192 = scmp.ne.s32.totalorder %s184, %s186
      %p193 = scmp.eq.s32.totalorder %s29, 1
      %p194 = por %p192, %p193
      %p195 = scmp.ne.s32.totalorder %s186, %s187
      %p196 = scmp.eq.s32.totalorder %s29, 0
      %p197 = por %p195, %p196
      %p198 = scmp.ne.s32.totalorder %s186, %s187
      %p199 = scmp.eq.s32.totalorder %s30, 1
      %p200 = por %p198, %p199
      %p202 = scmp.ne.s32.totalorder %s187, %s201
      %p203 = scmp.eq.s32.totalorder %s30, 0
      %p204 = por %p202, %p203
      %s206 = sadd.s32 %s205, 1
      %p209 = scmp.eq.s32.totalorder %s24, 1
      %p210 = scmp.ne.s32.totalorder %s205, %s207
      %p211 = scmp.eq.s32.totalorder %s24, 0
      %p212 = por %p210, %p211
      %p213 = scmp.ne.s32.totalorder %s205, %s207
      %p214 = scmp.eq.s32.totalorder %s29, 1
      %p215 = por %p213, %p214
      %p216 = scmp.ne.s32.totalorder %s207, %s208
      %p217 = scmp.eq.s32.totalorder %s29, 0
      %p218 = por %p216, %p217
      %p219 = scmp.ne.s32.totalorder %s207, %s208
      %p220 = scmp.eq.s32.totalorder %s30, 1
      %p221 = por %p219, %p220
      %p223 = scmp.ne.s32.totalorder %s208, %s222
      %p224 = scmp.eq.s32.totalorder %s30, 0
      %p225 = por %p223, %p224
      %s227 = sadd.s32 %s226, 1
      %p230 = scmp.eq.s32.totalorder %s24, 1
      %p231 = scmp.ne.s32.totalorder %s226, %s228
      %p232 = scmp.eq.s32.totalorder %s24, 0
      %p233 = por %p231, %p232
      %p234 = scmp.ne.s32.totalorder %s226, %s228
      %p235 = scmp.eq.s32.totalorder %s29, 1
      %p236 = por %p234, %p235
      %p237 = scmp.ne.s32.totalorder %s228, %s229
      %p238 = scmp.eq.s32.totalorder %s29, 0
      %p239 = por %p237, %p238
      %p240 = scmp.ne.s32.totalorder %s228, %s229
      %p241 = scmp.eq.s32.totalorder %s30, 1
      %p242 = por %p240, %p241
      %p244 = scmp.ne.s32.totalorder %s229, %s243
      %p245 = scmp.eq.s32.totalorder %s30, 0
      %p246 = por %p244, %p245
      %s247 = ssub.s32 %s24, %s31
      %p248 = scmp.eq.s32.totalorder %s247, 0
      %s250 = sadd.s32 %s249, 1
      %s251 = scalar_select %p248, %s249, %s250
      %p254 = pneg %p248
      %p255 = scmp.eq.s32.totalorder %s24, 1
      %p256 = por %p254, %p255
      %p257 = scmp.ne.s32.totalorder %s249, %s252
      %p258 = scmp.eq.s32.totalorder %s24, 0
      %p259 = por %p257, %p258
      %p260 = scmp.ne.s32.totalorder %s249, %s252
      %p261 = scmp.eq.s32.totalorder %s29, 1
      %p262 = por %p260, %p261
      %p263 = scmp.ne.s32.totalorder %s252, %s253
      %p264 = scmp.eq.s32.totalorder %s29, 0
      %p265 = por %p263, %p264
      %p266 = scmp.ne.s32.totalorder %s252, %s253
      %p267 = scmp.eq.s32.totalorder %s30, 1
      %p268 = por %p266, %p267
      %p270 = scmp.ne.s32.totalorder %s253, %s269
      %p271 = scmp.eq.s32.totalorder %s30, 0
      %p272 = por %p270, %p271
      %s273 = ssub.s32 %s24, %s31
      %p274 = scmp.eq.s32.totalorder %s273, 0
      %s276 = sadd.s32 %s275, 1
      %s277 = scalar_select %p274, %s275, %s276
      %p280 = pneg %p274
      %p281 = scmp.eq.s32.totalorder %s24, 1
      %p282 = por %p280, %p281
      %p283 = scmp.ne.s32.totalorder %s275, %s278
      %p284 = scmp.eq.s32.totalorder %s24, 0
      %p285 = por %p283, %p284
      %p286 = scmp.ne.s32.totalorder %s275, %s278
      %p287 = scmp.eq.s32.totalorder %s29, 1
      %p288 = por %p286, %p287
      %p289 = scmp.ne.s32.totalorder %s278, %s279
      %p290 = scmp.eq.s32.totalorder %s29, 0
      %p291 = por %p289, %p290
      %p292 = scmp.ne.s32.totalorder %s278, %s279
      %p293 = scmp.eq.s32.totalorder %s30, 1
      %p294 = por %p292, %p293
      %p296 = scmp.ne.s32.totalorder %s279, %s295
      %p297 = scmp.eq.s32.totalorder %s30, 0
      %p298 = por %p296, %p297
      %p299 = scmp.le.s32.totalorder 1, %s24
      %p300 = scmp.lt.s32.totalorder %s24, 3
      %p301 = pnand %p299, %p300
      %p302 = pneg %p301
      // Predicated region
      $region9: #{tpu_custom_call.1} parent=5 // pred_check
        _
      $region10: #{tpu_custom_call.1} parent=5 // pred_check_branch
        %304 = sbr.rel (%p301) target = $region12
      $region11: #{tpu_custom_call.1} parent=5 // pred_region
        %s305 = ssub.s32 %s24, 1
        // Predicated region
        $region13: #{tpu_custom_call.1} parent=11 // pred_check
          %p306 = pneg %p71
        $region14: #{tpu_custom_call.1} parent=11 // pred_check_branch
          %308 = sbr.rel (%p306) target = $region16
        $region15: #{tpu_custom_call.1} parent=11 // pred_region
          _
        $region16: #{tpu_custom_call.1} parent=11 // pred_fallthru
          _
        // Predicated region
        $region17: #{tpu_custom_call.1} parent=11 // pred_check
          %p309 = pneg %p92
        $region18: #{tpu_custom_call.1} parent=11 // pred_check_branch
          %311 = sbr.rel (%p309) target = $region20
        $region19: #{tpu_custom_call.1} parent=11 // pred_region
          _
        $region20: #{tpu_custom_call.1} parent=11 // pred_fallthru
          _
        // Predicated region
        $region21: #{tpu_custom_call.1} parent=11 // pred_check
          %p312 = pneg %p113
        $region22: #{tpu_custom_call.1} parent=11 // pred_check_branch
          %314 = sbr.rel (%p312) target = $region24
        $region23: #{tpu_custom_call.1} parent=11 // pred_region
          _
        $region24: #{tpu_custom_call.1} parent=11 // pred_fallthru
          _
        // Predicated region
        $region25: #{tpu_custom_call.1} parent=11 // pred_check
          %p315 = pneg %p134
        $region26: #{tpu_custom_call.1} parent=11 // pred_check_branch
          %317 = sbr.rel (%p315) target = $region28
        $region27: #{tpu_custom_call.1} parent=11 // pred_region
          _
        $region28: #{tpu_custom_call.1} parent=11 // pred_fallthru
          _
        // Predicated region
        $region29: #{tpu_custom_call.1} parent=11 // pred_check
          %p318 = pneg %p155
        $region30: #{tpu_custom_call.1} parent=11 // pred_check_branch
          %320 = sbr.rel (%p318) target = $region32
        $region31: #{tpu_custom_call.1} parent=11 // pred_region
          _
        $region32: #{tpu_custom_call.1} parent=11 // pred_fallthru
          _
        // Predicated region
        $region33: #{tpu_custom_call.1} parent=11 // pred_check
          %p321 = pneg %p176
        $region34: #{tpu_custom_call.1} parent=11 // pred_check_branch
          %323 = sbr.rel (%p321) target = $region36
        $region35: #{tpu_custom_call.1} parent=11 // pred_region
          _
        $region36: #{tpu_custom_call.1} parent=11 // pred_fallthru
          _
        // Predicated region
        $region37: #{tpu_custom_call.1} parent=11 // pred_check
          %p324 = pneg %p197
        $region38: #{tpu_custom_call.1} parent=11 // pred_check_branch
          %326 = sbr.rel (%p324) target = $region40
        $region39: #{tpu_custom_call.1} parent=11 // pred_region
          _
        $region40: #{tpu_custom_call.1} parent=11 // pred_fallthru
          _
        // Predicated region
        $region41: #{tpu_custom_call.1} parent=11 // pred_check
          %p327 = pneg %p218
        $region42: #{tpu_custom_call.1} parent=11 // pred_check_branch
          %329 = sbr.rel (%p327) target = $region44
        $region43: #{tpu_custom_call.1} parent=11 // pred_region
          _
        $region44: #{tpu_custom_call.1} parent=11 // pred_fallthru
          _
        // Predicated region
        $region45: #{tpu_custom_call.1} parent=11 // pred_check
          %p330 = pneg %p239
        $region46: #{tpu_custom_call.1} parent=11 // pred_check_branch
          %332 = sbr.rel (%p330) target = $region48
        $region47: #{tpu_custom_call.1} parent=11 // pred_region
          _
        $region48: #{tpu_custom_call.1} parent=11 // pred_fallthru
          _
      $region12: #{tpu_custom_call.1} parent=5 // pred_fallthru
        _
      %p333 = scmp.lt.s32.totalorder %s24, 2
      // Predicated region
      $region49: #{tpu_custom_call.1} parent=5 // pred_check
        %p334 = pneg %p333
      $region50: #{tpu_custom_call.1} parent=5 // pred_check_branch
        %336 = sbr.rel (%p334) target = $region52
      $region51: #{tpu_custom_call.1} parent=5 // pred_region
        // Predicated region
        $region53: #{tpu_custom_call.1} parent=51 // pred_check
          %p337 = pneg %p44
        $region54: #{tpu_custom_call.1} parent=51 // pred_check_branch
          %339 = sbr.rel (%p337) target = $region56
        $region55: #{tpu_custom_call.1} parent=51 // pred_region
          %p340 = scmp.lt.s32.totalorder %s24, 1
          %s341 = scalar_select %p340, %s24, 1
          %s342 = smul.addr %s341, 32
          %s343 = smul.addr %s342, 4
          %s344 = scalar_lea.vmem %s0, %s343
        $region56: #{tpu_custom_call.1} parent=51 // pred_fallthru
          _
      $region52: #{tpu_custom_call.1} parent=5 // pred_fallthru
        _
      %p345 = scmp.le.s32.totalorder 1, %s24
      %p346 = scmp.lt.s32.totalorder %s24, 3
      %p347 = pnand %p345, %p346
      %p348 = pneg %p347
      // Predicated region
      $region57: #{tpu_custom_call.1} parent=5 // pred_check
        _
      $region58: #{tpu_custom_call.1} parent=5 // pred_check_branch
        %350 = sbr.rel (%p347) target = $region60
      $region59: #{tpu_custom_call.1} parent=5 // pred_region
        %s351 = ssub.s32 %s24, 1
        %p352 = scmp.lt.s32.totalorder %s29, 1
        %s353 = scalar_select %p352, %s29, 1
        %s354 = smul.addr %s353, 32
        %s355 = smul.addr %s354, 4
        %s356 = scalar_lea.vmem %s0, %s355
        %p357 = pneg %p50
        %p358 = pneg %p47
        %p359 = pneg %p71
        %p360 = pneg %p68
        %p361 = pneg %p92
        %p362 = pneg %p89
        %p363 = pneg %p113
        %p364 = pneg %p110
        %p365 = pneg %p134
        %p366 = pneg %p131
        %p367 = pneg %p155
        %p368 = pneg %p152
        %p369 = pneg %p176
        %p370 = pneg %p173
        %p371 = pneg %p197
        %p372 = pneg %p194
        %p373 = pneg %p218
        %p374 = pneg %p215
        %p375 = pneg %p239
        %p376 = pneg %p236
        %p377 = pneg %p265
        %p378 = pneg %p262
        %s379 = sand.u32 %s252, 1
        %s380 = scalar_lea.sflag [#allocation7], %s379
        %s381 = sand.u32 %s252, 1
        %s382 = smul.addr %s381, 256
        %s383 = scalar_lea.vmem [#allocation6], %s382
        %p384 = pneg %p291
        %p385 = pneg %p288
        %s386 = sand.u32 %s278, 1
        %s387 = scalar_lea.sflag [#allocation9], %s386
        %s388 = sand.u32 %s278, 1
        %s389 = smul.addr %s388, 256
        %s390 = scalar_lea.vmem [#allocation8], %s389
        %p391 = scmp.lt.s32.totalorder %s29, 1
        %s392 = scalar_select %p391, %s29, 1
        %s393 = smul.addr %s392, 32
        %s394 = smul.addr %s393, 4
        %s395 = scalar_lea.vmem %s0, %s394
        %vm397 = vcmask 31744
        %398 = vst.msk [vmem:[#allocation2] sm:$0xff] %vm397, 0.0
        %399 = vst.msk [vmem:[#allocation2 + $0x8] sm:$0xff] %vm397, 0.0
        %vm400 = vcmask 25600
        %401 = vst.msk [vmem:[#allocation2 + $0x10] sm:$0x3] %vm400, 0.0
        %402 = vst.msk [vmem:[#allocation2 + $0x18] sm:$0xff] %vm397, 0.0
        %403 = vst.msk [vmem:[#allocation2 + $0x20] sm:$0xff] %vm397, 0.0
        %404 = vst.msk [vmem:[#allocation2 + $0x28] sm:$0x3] %vm400, 0.0
        %405 = vst.msk [vmem:[#allocation2 + $0x30] sm:$0xff] %vm397, 0.0
        %406 = vst.msk [vmem:[#allocation2 + $0x38] sm:$0xff] %vm397, 0.0
        %407 = vst.msk [vmem:[#allocation2 + $0x40] sm:$0x3] %vm400, 0.0
        %408 = vst.msk [vmem:[#allocation2 + $0x48] sm:$0xff] %vm397, 0.0
        %409 = vst.msk [vmem:[#allocation2 + $0x50] sm:$0xff] %vm397, 0.0
        %410 = vst.msk [vmem:[#allocation2 + $0x58] sm:$0x3] %vm400, 0.0
        %411 = vst.msk [vmem:[#allocation2 + $0x60] sm:$0xff] %vm397, 0.0
        %412 = vst.msk [vmem:[#allocation2 + $0x68] sm:$0xff] %vm397, 0.0
        %413 = vst.msk [vmem:[#allocation2 + $0x70] sm:$0x3] %vm400, 0.0
        %414 = vst.msk [vmem:[#allocation2 + $0x78] sm:$0xff] %vm397, 0.0
        %415 = vst.msk [vmem:[#allocation2 + $0x80] sm:$0xff] %vm397, 0.0
        %416 = vst.msk [vmem:[#allocation2 + $0x88] sm:$0x3] %vm400, 0.0
        %417 = vst.msk [vmem:[#allocation2 + $0x90] sm:$0xff] %vm397, 0.0
        %418 = vst.msk [vmem:[#allocation2 + $0x98] sm:$0xff] %vm397, 0.0
        %419 = vst.msk [vmem:[#allocation2 + $0xa0] sm:$0x3] %vm400, 0.0
        %420 = vst.msk [vmem:[#allocation2 + $0xa8] sm:$0xff] %vm397, 0.0
        %421 = vst.msk [vmem:[#allocation2 + $0xb0] sm:$0xff] %vm397, 0.0
        %422 = vst.msk [vmem:[#allocation2 + $0xb8] sm:$0x3] %vm400, 0.0
        %423 = vst.msk [vmem:[#allocation2 + $0xc0] sm:$0xff] %vm397, 0.0
        %424 = vst.msk [vmem:[#allocation2 + $0xc8] sm:$0xff] %vm397, 0.0
        %425 = vst.msk [vmem:[#allocation2 + $0xd0] sm:$0x3] %vm400, 0.0
        %426 = vst.msk [vmem:[#allocation2 + $0xd8] sm:$0xff] %vm397, 0.0
        %427 = vst.msk [vmem:[#allocation2 + $0xe0] sm:$0xff] %vm397, 0.0
        %428 = vst.msk [vmem:[#allocation2 + $0xe8] sm:$0x3] %vm400, 0.0
        %429 = vst.msk [vmem:[#allocation2 + $0xf0] sm:$0xff] %vm397, 0.0
        %430 = vst.msk [vmem:[#allocation2 + $0xf8] sm:$0xff] %vm397, 0.0
        %431 = vst.msk [vmem:[#allocation2 + $0x100] sm:$0x3] %vm400, 0.0
        %432 = vst.msk [vmem:[#allocation2 + $0x108] sm:$0xff] %vm397, 0.0
        %433 = vst.msk [vmem:[#allocation2 + $0x110] sm:$0xff] %vm397, 0.0
        %434 = vst.msk [vmem:[#allocation2 + $0x118] sm:$0x3] %vm400, 0.0
        %435 = vst.msk [vmem:[#allocation2 + $0x120] sm:$0xff] %vm397, 0.0
        %436 = vst.msk [vmem:[#allocation2 + $0x128] sm:$0xff] %vm397, 0.0
        %437 = vst.msk [vmem:[#allocation2 + $0x130] sm:$0x3] %vm400, 0.0
        %438 = vst.msk [vmem:[#allocation2 + $0x138] sm:$0xff] %vm397, 0.0
        %439 = vst.msk [vmem:[#allocation2 + $0x140] sm:$0xff] %vm397, 0.0
        %440 = vst.msk [vmem:[#allocation2 + $0x148] sm:$0x3] %vm400, 0.0
        %441 = vst.msk [vmem:[#allocation2 + $0x150] sm:$0xff] %vm397, 0.0
        %442 = vst.msk [vmem:[#allocation2 + $0x158] sm:$0xff] %vm397, 0.0
        %443 = vst.msk [vmem:[#allocation2 + $0x160] sm:$0x3] %vm400, 0.0
        %444 = vst.msk [vmem:[#allocation2 + $0x168] sm:$0xff] %vm397, 0.0
        %445 = vst.msk [vmem:[#allocation2 + $0x170] sm:$0xff] %vm397, 0.0
        %446 = vst.msk [vmem:[#allocation2 + $0x178] sm:$0x3] %vm400, 0.0
        %447 = vst.msk [vmem:[#allocation2 + $0x180] sm:$0xff] %vm397, 0.0
        %448 = vst.msk [vmem:[#allocation2 + $0x188] sm:$0xff] %vm397, 0.0
        %449 = vst.msk [vmem:[#allocation2 + $0x190] sm:$0x3] %vm400, 0.0
        %450 = vst.msk [vmem:[#allocation2 + $0x198] sm:$0xff] %vm397, 0.0
        %451 = vst.msk [vmem:[#allocation2 + $0x1a0] sm:$0xff] %vm397, 0.0
        %452 = vst.msk [vmem:[#allocation2 + $0x1a8] sm:$0x3] %vm400, 0.0
        %v453 = vld [vmem:[%s395] sm:$0xf]
        %v454 = vld [vmem:[%s395 + $0x4] sm:$0xf]
        %v455 = vld [vmem:[%s395 + $0x8] sm:$0xf]
        %v456 = vld [vmem:[%s395 + $0xc] sm:$0xf]
        %v457 = vld [vmem:[%s395 + $0x10] sm:$0xf]
        %v458 = vld [vmem:[%s395 + $0x14] sm:$0xf]
        %v459 = vld [vmem:[%s395 + $0x18] sm:$0xf]
        %v460 = vld [vmem:[%s395 + $0x1c] sm:$0xf]
        %v461 = vld [vmem:[%s395 + $0x20] sm:$0xf]
        %v462 = vld [vmem:[%s395 + $0x24] sm:$0xf]
        %v463 = vld [vmem:[%s395 + $0x28] sm:$0xf]
        %v464 = vld [vmem:[%s395 + $0x2c] sm:$0xf]
        %v465 = vld [vmem:[%s395 + $0x30] sm:$0xf]
        %v466 = vld [vmem:[%s395 + $0x34] sm:$0xf]
        %v467 = vld [vmem:[%s395 + $0x38] sm:$0xf]
        %v468 = vld [vmem:[%s395 + $0x3c] sm:$0xf]
        %v469 = vld [vmem:[%s395 + $0x40] sm:$0xf]
        %v470 = vld [vmem:[%s395 + $0x44] sm:$0xf]
        %v471 = vld [vmem:[%s395 + $0x48] sm:$0xf]
        %v472 = vld [vmem:[%s395 + $0x4c] sm:$0xf]
        %v473 = vld [vmem:[%s395 + $0x50] sm:$0xf]
        %v474 = vld [vmem:[%s395 + $0x54] sm:$0xf]
        %v475 = vld [vmem:[%s395 + $0x58] sm:$0xf]
        %v476 = vld [vmem:[%s395 + $0x5c] sm:$0xf]
        %v477 = vld [vmem:[%s395 + $0x60] sm:$0xf]
        %v478 = vld [vmem:[%s395 + $0x64] sm:$0xf]
        %v479 = vld [vmem:[%s395 + $0x68] sm:$0xf]
        %v480 = vld [vmem:[%s395 + $0x6c] sm:$0xf]
        %v481 = vld [vmem:[%s395 + $0x70] sm:$0xf]
        %v482 = vld [vmem:[%s395 + $0x74] sm:$0xf]
        %v483 = vld [vmem:[%s395 + $0x78] sm:$0xf]
        %v484 = vld [vmem:[%s395 + $0x7c] sm:$0xf]
        %v485 = vunpack.c.l.bf16 %v453
        %v486 = vunpack.c.l.bf16 %v454
        %v487 = vunpack.c.l.bf16 %v455
        %v488 = vunpack.c.l.bf16 %v456
        %v489 = vunpack.c.l.bf16 %v457
        %v490 = vunpack.c.l.bf16 %v458
        %v491 = vunpack.c.l.bf16 %v459
        %v492 = vunpack.c.l.bf16 %v460
        %v493 = vunpack.c.l.bf16 %v461
        %v494 = vunpack.c.l.bf16 %v462
        %v495 = vunpack.c.l.bf16 %v463
        %v496 = vunpack.c.l.bf16 %v464
        %v497 = vunpack.c.l.bf16 %v465
        %v498 = vunpack.c.l.bf16 %v466
        %v499 = vunpack.c.l.bf16 %v467
        %v500 = vunpack.c.l.bf16 %v468
        %v501 = vunpack.c.l.bf16 %v469
        %v502 = vunpack.c.l.bf16 %v470
        %v503 = vunpack.c.l.bf16 %v471
        %v504 = vunpack.c.l.bf16 %v472
        %v505 = vunpack.c.l.bf16 %v473
        %v506 = vunpack.c.l.bf16 %v474
        %v507 = vunpack.c.l.bf16 %v475
        %v508 = vunpack.c.l.bf16 %v476
        %v509 = vunpack.c.l.bf16 %v477
        %v510 = vunpack.c.l.bf16 %v478
        %v511 = vunpack.c.l.bf16 %v479
        %v512 = vunpack.c.l.bf16 %v480
        %v513 = vunpack.c.l.bf16 %v481
        %v514 = vunpack.c.l.bf16 %v482
        %v515 = vunpack.c.l.bf16 %v483
        %v516 = vunpack.c.l.bf16 %v484
        %s517 = scalar_lea.vmem [#allocation2], 24
        %518 = vst.msk [vmem:[%s517 + $0x1] sm:$0xff] %vm397, %v485
        %519 = vst.msk [vmem:[%s517 + $0x9] sm:$0xff] %vm397, %v486
        %520 = vst.msk [vmem:[%s517 + $0x19] sm:$0xff] %vm397, %v487
        %521 = vst.msk [vmem:[%s517 + $0x21] sm:$0xff] %vm397, %v488
        %522 = vst.msk [vmem:[%s517 + $0x31] sm:$0xff] %vm397, %v489
        %523 = vst.msk [vmem:[%s517 + $0x39] sm:$0xff] %vm397, %v490
        %524 = vst.msk [vmem:[%s517 + $0x49] sm:$0xff] %vm397, %v491
        %525 = vst.msk [vmem:[%s517 + $0x51] sm:$0xff] %vm397, %v492
        %526 = vst.msk [vmem:[%s517 + $0x61] sm:$0xff] %vm397, %v493
        %527 = vst.msk [vmem:[%s517 + $0x69] sm:$0xff] %vm397, %v494
        %528 = vst.msk [vmem:[%s517 + $0x79] sm:$0xff] %vm397, %v495
        %529 = vst.msk [vmem:[%s517 + $0x81] sm:$0xff] %vm397, %v496
        %530 = vst.msk [vmem:[%s517 + $0x91] sm:$0xff] %vm397, %v497
        %531 = vst.msk [vmem:[%s517 + $0x99] sm:$0xff] %vm397, %v498
        %532 = vst.msk [vmem:[%s517 + $0xa9] sm:$0xff] %vm397, %v499
        %533 = vst.msk [vmem:[%s517 + $0xb1] sm:$0xff] %vm397, %v500
        %534 = vst.msk [vmem:[%s517 + $0xc1] sm:$0xff] %vm397, %v501
        %535 = vst.msk [vmem:[%s517 + $0xc9] sm:$0xff] %vm397, %v502
        %536 = vst.msk [vmem:[%s517 + $0xd9] sm:$0xff] %vm397, %v503
        %537 = vst.msk [vmem:[%s517 + $0xe1] sm:$0xff] %vm397, %v504
        %538 = vst.msk [vmem:[%s517 + $0xf1] sm:$0xff] %vm397, %v505
        %539 = vst.msk [vmem:[%s517 + $0xf9] sm:$0xff] %vm397, %v506
        %540 = vst.msk [vmem:[%s517 + $0x109] sm:$0xff] %vm397, %v507
        %541 = vst.msk [vmem:[%s517 + $0x111] sm:$0xff] %vm397, %v508
        %542 = vst.msk [vmem:[%s517 + $0x121] sm:$0xff] %vm397, %v509
        %543 = vst.msk [vmem:[%s517 + $0x129] sm:$0xff] %vm397, %v510
        %544 = vst.msk [vmem:[%s517 + $0x139] sm:$0xff] %vm397, %v511
        %545 = vst.msk [vmem:[%s517 + $0x141] sm:$0xff] %vm397, %v512
        %546 = vst.msk [vmem:[%s517 + $0x151] sm:$0xff] %vm397, %v513
        %547 = vst.msk [vmem:[%s517 + $0x159] sm:$0xff] %vm397, %v514
        %548 = vst.msk [vmem:[%s517 + $0x169] sm:$0xff] %vm397, %v515
        %549 = vst.msk [vmem:[%s517 + $0x171] sm:$0xff] %vm397, %v516
        %v550 = vld [vmem:[#allocation2] sm:$0xff]
        %v551 = vld [vmem:[#allocation2 + $0x8] sm:$0xff]
        %v552 = vld [vmem:[#allocation2 + $0x18] sm:$0xff]
        %v553 = vld [vmem:[#allocation2 + $0x20] sm:$0xff]
        %v554 = vld [vmem:[#allocation2 + $0x30] sm:$0xff]
        %v555 = vld [vmem:[#allocation2 + $0x38] sm:$0xff]
        %v556 = vld [vmem:[#allocation2 + $0x48] sm:$0xff]
        %v557 = vld [vmem:[#allocation2 + $0x50] sm:$0xff]
        %v558 = vld [vmem:[#allocation2 + $0x60] sm:$0xff]
        %v559 = vld [vmem:[#allocation2 + $0x68] sm:$0xff]
        %v560 = vld [vmem:[#allocation2 + $0x78] sm:$0xff]
        %v561 = vld [vmem:[#allocation2 + $0x80] sm:$0xff]
        %v562 = vld [vmem:[#allocation2 + $0x90] sm:$0xff]
        %v563 = vld [vmem:[#allocation2 + $0x98] sm:$0xff]
        %v564 = vld [vmem:[#allocation2 + $0xa8] sm:$0xff]
        %v565 = vld [vmem:[#allocation2 + $0xb0] sm:$0xff]
        %v566 = vld [vmem:[#allocation2 + $0xc0] sm:$0xff]
        %v567 = vld [vmem:[#allocation2 + $0xc8] sm:$0xff]
        %v568 = vld [vmem:[#allocation2 + $0xd8] sm:$0xff]
        %v569 = vld [vmem:[#allocation2 + $0xe0] sm:$0xff]
        %v570 = vld [vmem:[#allocation2 + $0xf0] sm:$0xff]
        %v571 = vld [vmem:[#allocation2 + $0xf8] sm:$0xff]
        %v572 = vld [vmem:[#allocation2 + $0x108] sm:$0xff]
        %v573 = vld [vmem:[#allocation2 + $0x110] sm:$0xff]
        %v574 = vld [vmem:[#allocation2 + $0x120] sm:$0xff]
        %v575 = vld [vmem:[#allocation2 + $0x128] sm:$0xff]
        %v576 = vld [vmem:[#allocation2 + $0x138] sm:$0xff]
        %v577 = vld [vmem:[#allocation2 + $0x140] sm:$0xff]
        %v578 = vld [vmem:[#allocation2 + $0x150] sm:$0xff]
        %v579 = vld [vmem:[#allocation2 + $0x158] sm:$0xff]
        %v580 = vld [vmem:[#allocation2 + $0x168] sm:$0xff]
        %v581 = vld [vmem:[#allocation2 + $0x170] sm:$0xff]
        %v582 = vpack.c.bf16 %v551, %v550
        %v583 = vpack.c.bf16 %v553, %v552
        %v584 = vpack.c.bf16 %v555, %v554
        %v585 = vpack.c.bf16 %v557, %v556
        %v586 = vpack.c.bf16 %v559, %v558
        %v587 = vpack.c.bf16 %v561, %v560
        %v588 = vpack.c.bf16 %v563, %v562
        %v589 = vpack.c.bf16 %v565, %v564
        %v590 = vpack.c.bf16 %v567, %v566
        %v591 = vpack.c.bf16 %v569, %v568
        %v592 = vpack.c.bf16 %v571, %v570
        %v593 = vpack.c.bf16 %v573, %v572
        %v594 = vpack.c.bf16 %v575, %v574
        %v595 = vpack.c.bf16 %v577, %v576
        %v596 = vpack.c.bf16 %v579, %v578
        %v597 = vpack.c.bf16 %v581, %v580
        %598 = vst.msk [vmem:[#allocation3] sm:$0xff] %vm397, %v582
        %599 = vst.msk [vmem:[#allocation3 + $0x8] sm:$0xff] %vm397, %v583
        %600 = vst.msk [vmem:[#allocation3 + $0x10] sm:$0xff] %vm397, %v584
        %601 = vst.msk [vmem:[#allocation3 + $0x18] sm:$0xff] %vm397, %v585
        %602 = vst.msk [vmem:[#allocation3 + $0x20] sm:$0xff] %vm397, %v586
        %603 = vst.msk [vmem:[#allocation3 + $0x28] sm:$0xff] %vm397, %v587
        %604 = vst.msk [vmem:[#allocation3 + $0x30] sm:$0xff] %vm397, %v588
        %605 = vst.msk [vmem:[#allocation3 + $0x38] sm:$0xff] %vm397, %v589
        %606 = vst.msk [vmem:[#allocation3 + $0x40] sm:$0xff] %vm397, %v590
        %607 = vst.msk [vmem:[#allocation3 + $0x48] sm:$0xff] %vm397, %v591
        %608 = vst.msk [vmem:[#allocation3 + $0x50] sm:$0xff] %vm397, %v592
        %609 = vst.msk [vmem:[#allocation3 + $0x58] sm:$0xff] %vm397, %v593
        %610 = vst.msk [vmem:[#allocation3 + $0x60] sm:$0xff] %vm397, %v594
        %611 = vst.msk [vmem:[#allocation3 + $0x68] sm:$0xff] %vm397, %v595
        %612 = vst.msk [vmem:[#allocation3 + $0x70] sm:$0xff] %vm397, %v596
        %613 = vst.msk [vmem:[#allocation3 + $0x78] sm:$0xff] %vm397, %v597
        %v614 = vld [vmem:[#allocation2 + $0x1] sm:$0xff]
        %v615 = vld [vmem:[#allocation2 + $0x9] sm:$0xff]
        %v616 = vld [vmem:[#allocation2 + $0x19] sm:$0xff]
        %v617 = vld [vmem:[#allocation2 + $0x21] sm:$0xff]
        %v618 = vld [vmem:[#allocation2 + $0x31] sm:$0xff]
        %v619 = vld [vmem:[#allocation2 + $0x39] sm:$0xff]
        %v620 = vld [vmem:[#allocation2 + $0x49] sm:$0xff]
        %v621 = vld [vmem:[#allocation2 + $0x51] sm:$0xff]
        %v622 = vld [vmem:[#allocation2 + $0x61] sm:$0xff]
        %v623 = vld [vmem:[#allocation2 + $0x69] sm:$0xff]
        %v624 = vld [vmem:[#allocation2 + $0x79] sm:$0xff]
        %v625 = vld [vmem:[#allocation2 + $0x81] sm:$0xff]
        %v626 = vld [vmem:[#allocation2 + $0x91] sm:$0xff]
        %v627 = vld [vmem:[#allocation2 + $0x99] sm:$0xff]
        %v628 = vld [vmem:[#allocation2 + $0xa9] sm:$0xff]
        %v629 = vld [vmem:[#allocation2 + $0xb1] sm:$0xff]
        %v630 = vld [vmem:[#allocation2 + $0xc1] sm:$0xff]
        %v631 = vld [vmem:[#allocation2 + $0xc9] sm:$0xff]
        %v632 = vld [vmem:[#allocation2 + $0xd9] sm:$0xff]
        %v633 = vld [vmem:[#allocation2 + $0xe1] sm:$0xff]
        %v634 = vld [vmem:[#allocation2 + $0xf1] sm:$0xff]
        %v635 = vld [vmem:[#allocation2 + $0xf9] sm:$0xff]
        %v636 = vld [vmem:[#allocation2 + $0x109] sm:$0xff]
        %v637 = vld [vmem:[#allocation2 + $0x111] sm:$0xff]
        %v638 = vld [vmem:[#allocation2 + $0x121] sm:$0xff]
        %v639 = vld [vmem:[#allocation2 + $0x129] sm:$0xff]
        %v640 = vld [vmem:[#allocation2 + $0x139] sm:$0xff]
        %v641 = vld [vmem:[#allocation2 + $0x141] sm:$0xff]
        %v642 = vld [vmem:[#allocation2 + $0x151] sm:$0xff]
        %v643 = vld [vmem:[#allocation2 + $0x159] sm:$0xff]
        %v644 = vld [vmem:[#allocation2 + $0x169] sm:$0xff]
        %v645 = vld [vmem:[#allocation2 + $0x171] sm:$0xff]
        %v646 = vpack.c.bf16 %v615, %v614
        %v647 = vpack.c.bf16 %v617, %v616
        %v648 = vpack.c.bf16 %v619, %v618
        %v649 = vpack.c.bf16 %v621, %v620
        %v650 = vpack.c.bf16 %v623, %v622
        %v651 = vpack.c.bf16 %v625, %v624
        %v652 = vpack.c.bf16 %v627, %v626
        %v653 = vpack.c.bf16 %v629, %v628
        %v654 = vpack.c.bf16 %v631, %v630
        %v655 = vpack.c.bf16 %v633, %v632
        %v656 = vpack.c.bf16 %v635, %v634
        %v657 = vpack.c.bf16 %v637, %v636
        %v658 = vpack.c.bf16 %v639, %v638
        %v659 = vpack.c.bf16 %v641, %v640
        %v660 = vpack.c.bf16 %v643, %v642
        %v661 = vpack.c.bf16 %v645, %v644
        %678 = vrot.lane.b32.xlu0 %v646, 4
        %v679 = vpop.permute.xlu0 %678
        %680 = vrot.lane.b32.xlu0 %v647, 4
        %v681 = vpop.permute.xlu0 %680
        %682 = vrot.lane.b32.xlu0 %v648, 4
        %v683 = vpop.permute.xlu0 %682
        %684 = vrot.lane.b32.xlu0 %v649, 4
        %v685 = vpop.permute.xlu0 %684
        %686 = vrot.lane.b32.xlu0 %v650, 4
        %v687 = vpop.permute.xlu0 %686
        %688 = vrot.lane.b32.xlu0 %v651, 4
        %v689 = vpop.permute.xlu0 %688
        %690 = vrot.lane.b32.xlu0 %v652, 4
        %v691 = vpop.permute.xlu0 %690
        %692 = vrot.lane.b32.xlu0 %v653, 4
        %v693 = vpop.permute.xlu0 %692
        %694 = vrot.lane.b32.xlu0 %v654, 4
        %v695 = vpop.permute.xlu0 %694
        %696 = vrot.lane.b32.xlu0 %v655, 4
        %v697 = vpop.permute.xlu0 %696
        %698 = vrot.lane.b32.xlu0 %v656, 4
        %v699 = vpop.permute.xlu0 %698
        %700 = vrot.lane.b32.xlu0 %v657, 4
        %v701 = vpop.permute.xlu0 %700
        %702 = vrot.lane.b32.xlu0 %v658, 4
        %v703 = vpop.permute.xlu0 %702
        %704 = vrot.lane.b32.xlu0 %v659, 4
        %v705 = vpop.permute.xlu0 %704
        %706 = vrot.lane.b32.xlu0 %v660, 4
        %v707 = vpop.permute.xlu0 %706
        %708 = vrot.lane.b32.xlu0 %v661, 4
        %v709 = vpop.permute.xlu0 %708
        %vm726 = vcmask 64544
        %727 = vst.msk [vmem:[#allocation3] sm:$0xff] %vm726, %v679
        %728 = vst.msk [vmem:[#allocation3 + $0x8] sm:$0xff] %vm726, %v681
        %729 = vst.msk [vmem:[#allocation3 + $0x10] sm:$0xff] %vm726, %v683
        %730 = vst.msk [vmem:[#allocation3 + $0x18] sm:$0xff] %vm726, %v685
        %731 = vst.msk [vmem:[#allocation3 + $0x20] sm:$0xff] %vm726, %v687
        %732 = vst.msk [vmem:[#allocation3 + $0x28] sm:$0xff] %vm726, %v689
        %733 = vst.msk [vmem:[#allocation3 + $0x30] sm:$0xff] %vm726, %v691
        %734 = vst.msk [vmem:[#allocation3 + $0x38] sm:$0xff] %vm726, %v693
        %735 = vst.msk [vmem:[#allocation3 + $0x40] sm:$0xff] %vm726, %v695
        %736 = vst.msk [vmem:[#allocation3 + $0x48] sm:$0xff] %vm726, %v697
        %737 = vst.msk [vmem:[#allocation3 + $0x50] sm:$0xff] %vm726, %v699
        %738 = vst.msk [vmem:[#allocation3 + $0x58] sm:$0xff] %vm726, %v701
        %739 = vst.msk [vmem:[#allocation3 + $0x60] sm:$0xff] %vm726, %v703
        %740 = vst.msk [vmem:[#allocation3 + $0x68] sm:$0xff] %vm726, %v705
        %741 = vst.msk [vmem:[#allocation3 + $0x70] sm:$0xff] %vm726, %v707
        %742 = vst.msk [vmem:[#allocation3 + $0x78] sm:$0xff] %vm726, %v709
        %v743 = vld [vmem:[#allocation2 + $0x2] sm:$0xff]
        %v744 = vld [vmem:[#allocation2 + $0xa] sm:$0xff]
        %v745 = vld [vmem:[#allocation2 + $0x1a] sm:$0xff]
        %v746 = vld [vmem:[#allocation2 + $0x22] sm:$0xff]
        %v747 = vld [vmem:[#allocation2 + $0x32] sm:$0xff]
        %v748 = vld [vmem:[#allocation2 + $0x3a] sm:$0xff]
        %v749 = vld [vmem:[#allocation2 + $0x4a] sm:$0xff]
        %v750 = vld [vmem:[#allocation2 + $0x52] sm:$0xff]
        %v751 = vld [vmem:[#allocation2 + $0x62] sm:$0xff]
        %v752 = vld [vmem:[#allocation2 + $0x6a] sm:$0xff]
        %v753 = vld [vmem:[#allocation2 + $0x7a] sm:$0xff]
        %v754 = vld [vmem:[#allocation2 + $0x82] sm:$0xff]
        %v755 = vld [vmem:[#allocation2 + $0x92] sm:$0xff]
        %v756 = vld [vmem:[#allocation2 + $0x9a] sm:$0xff]
        %v757 = vld [vmem:[#allocation2 + $0xaa] sm:$0xff]
        %v758 = vld [vmem:[#allocation2 + $0xb2] sm:$0xff]
        %v759 = vld [vmem:[#allocation2 + $0xc2] sm:$0xff]
        %v760 = vld [vmem:[#allocation2 + $0xca] sm:$0xff]
        %v761 = vld [vmem:[#allocation2 + $0xda] sm:$0xff]
        %v762 = vld [vmem:[#allocation2 + $0xe2] sm:$0xff]
        %v763 = vld [vmem:[#allocation2 + $0xf2] sm:$0xff]
        %v764 = vld [vmem:[#allocation2 + $0xfa] sm:$0xff]
        %v765 = vld [vmem:[#allocation2 + $0x10a] sm:$0xff]
        %v766 = vld [vmem:[#allocation2 + $0x112] sm:$0xff]
        %v767 = vld [vmem:[#allocation2 + $0x122] sm:$0xff]
        %v768 = vld [vmem:[#allocation2 + $0x12a] sm:$0xff]
        %v769 = vld [vmem:[#allocation2 + $0x13a] sm:$0xff]
        %v770 = vld [vmem:[#allocation2 + $0x142] sm:$0xff]
        %v771 = vld [vmem:[#allocation2 + $0x152] sm:$0xff]
        %v772 = vld [vmem:[#allocation2 + $0x15a] sm:$0xff]
        %v773 = vld [vmem:[#allocation2 + $0x16a] sm:$0xff]
        %v774 = vld [vmem:[#allocation2 + $0x172] sm:$0xff]
        %v775 = vpack.c.bf16 %v744, %v743
        %v776 = vpack.c.bf16 %v746, %v745
        %v777 = vpack.c.bf16 %v748, %v747
        %v778 = vpack.c.bf16 %v750, %v749
        %v779 = vpack.c.bf16 %v752, %v751
        %v780 = vpack.c.bf16 %v754, %v753
        %v781 = vpack.c.bf16 %v756, %v755
        %v782 = vpack.c.bf16 %v758, %v757
        %v783 = vpack.c.bf16 %v760, %v759
        %v784 = vpack.c.bf16 %v762, %v761
        %v785 = vpack.c.bf16 %v764, %v763
        %v786 = vpack.c.bf16 %v766, %v765
        %v787 = vpack.c.bf16 %v768, %v767
        %v788 = vpack.c.bf16 %v770, %v769
        %v789 = vpack.c.bf16 %v772, %v771
        %v790 = vpack.c.bf16 %v774, %v773
        %807 = vrot.lane.b32.xlu0 %v775, 8
        %v808 = vpop.permute.xlu0 %807
        %809 = vrot.lane.b32.xlu0 %v776, 8
        %v810 = vpop.permute.xlu0 %809
        %811 = vrot.lane.b32.xlu0 %v777, 8
        %v812 = vpop.permute.xlu0 %811
        %813 = vrot.lane.b32.xlu0 %v778, 8
        %v814 = vpop.permute.xlu0 %813
        %815 = vrot.lane.b32.xlu0 %v779, 8
        %v816 = vpop.permute.xlu0 %815
        %817 = vrot.lane.b32.xlu0 %v780, 8
        %v818 = vpop.permute.xlu0 %817
        %819 = vrot.lane.b32.xlu0 %v781, 8
        %v820 = vpop.permute.xlu0 %819
        %821 = vrot.lane.b32.xlu0 %v782, 8
        %v822 = vpop.permute.xlu0 %821
        %823 = vrot.lane.b32.xlu0 %v783, 8
        %v824 = vpop.permute.xlu0 %823
        %825 = vrot.lane.b32.xlu0 %v784, 8
        %v826 = vpop.permute.xlu0 %825
        %827 = vrot.lane.b32.xlu0 %v785, 8
        %v828 = vpop.permute.xlu0 %827
        %829 = vrot.lane.b32.xlu0 %v786, 8
        %v830 = vpop.permute.xlu0 %829
        %831 = vrot.lane.b32.xlu0 %v787, 8
        %v832 = vpop.permute.xlu0 %831
        %833 = vrot.lane.b32.xlu0 %v788, 8
        %v834 = vpop.permute.xlu0 %833
        %835 = vrot.lane.b32.xlu0 %v789, 8
        %v836 = vpop.permute.xlu0 %835
        %837 = vrot.lane.b32.xlu0 %v790, 8
        %v838 = vpop.permute.xlu0 %837
        %vm855 = vcmask 97344
        %856 = vst.msk [vmem:[#allocation3] sm:$0xff] %vm855, %v808
        %857 = vst.msk [vmem:[#allocation3 + $0x8] sm:$0xff] %vm855, %v810
        %858 = vst.msk [vmem:[#allocation3 + $0x10] sm:$0xff] %vm855, %v812
        %859 = vst.msk [vmem:[#allocation3 + $0x18] sm:$0xff] %vm855, %v814
        %860 = vst.msk [vmem:[#allocation3 + $0x20] sm:$0xff] %vm855, %v816
        %861 = vst.msk [vmem:[#allocation3 + $0x28] sm:$0xff] %vm855, %v818
        %862 = vst.msk [vmem:[#allocation3 + $0x30] sm:$0xff] %vm855, %v820
        %863 = vst.msk [vmem:[#allocation3 + $0x38] sm:$0xff] %vm855, %v822
        %864 = vst.msk [vmem:[#allocation3 + $0x40] sm:$0xff] %vm855, %v824
        %865 = vst.msk [vmem:[#allocation3 + $0x48] sm:$0xff] %vm855, %v826
        %866 = vst.msk [vmem:[#allocation3 + $0x50] sm:$0xff] %vm855, %v828
        %867 = vst.msk [vmem:[#allocation3 + $0x58] sm:$0xff] %vm855, %v830
        %868 = vst.msk [vmem:[#allocation3 + $0x60] sm:$0xff] %vm855, %v832
        %869 = vst.msk [vmem:[#allocation3 + $0x68] sm:$0xff] %vm855, %v834
        %870 = vst.msk [vmem:[#allocation3 + $0x70] sm:$0xff] %vm855, %v836
        %871 = vst.msk [vmem:[#allocation3 + $0x78] sm:$0xff] %vm855, %v838
        %v872 = vld [vmem:[%s517] sm:$0xff]
        %v873 = vld [vmem:[%s517 + $0x8] sm:$0xff]
        %v874 = vld [vmem:[%s517 + $0x18] sm:$0xff]
        %v875 = vld [vmem:[%s517 + $0x20] sm:$0xff]
        %v876 = vld [vmem:[%s517 + $0x30] sm:$0xff]
        %v877 = vld [vmem:[%s517 + $0x38] sm:$0xff]
        %v878 = vld [vmem:[%s517 + $0x48] sm:$0xff]
        %v879 = vld [vmem:[%s517 + $0x50] sm:$0xff]
        %v880 = vld [vmem:[%s517 + $0x60] sm:$0xff]
        %v881 = vld [vmem:[%s517 + $0x68] sm:$0xff]
        %v882 = vld [vmem:[%s517 + $0x78] sm:$0xff]
        %v883 = vld [vmem:[%s517 + $0x80] sm:$0xff]
        %v884 = vld [vmem:[%s517 + $0x90] sm:$0xff]
        %v885 = vld [vmem:[%s517 + $0x98] sm:$0xff]
        %v886 = vld [vmem:[%s517 + $0xa8] sm:$0xff]
        %v887 = vld [vmem:[%s517 + $0xb0] sm:$0xff]
        %v888 = vld [vmem:[%s517 + $0xc0] sm:$0xff]
        %v889 = vld [vmem:[%s517 + $0xc8] sm:$0xff]
        %v890 = vld [vmem:[%s517 + $0xd8] sm:$0xff]
        %v891 = vld [vmem:[%s517 + $0xe0] sm:$0xff]
        %v892 = vld [vmem:[%s517 + $0xf0] sm:$0xff]
        %v893 = vld [vmem:[%s517 + $0xf8] sm:$0xff]
        %v894 = vld [vmem:[%s517 + $0x108] sm:$0xff]
        %v895 = vld [vmem:[%s517 + $0x110] sm:$0xff]
        %v896 = vld [vmem:[%s517 + $0x120] sm:$0xff]
        %v897 = vld [vmem:[%s517 + $0x128] sm:$0xff]
        %v898 = vld [vmem:[%s517 + $0x138] sm:$0xff]
        %v899 = vld [vmem:[%s517 + $0x140] sm:$0xff]
        %v900 = vld [vmem:[%s517 + $0x150] sm:$0xff]
        %v901 = vld [vmem:[%s517 + $0x158] sm:$0xff]
        %v902 = vld [vmem:[%s517 + $0x168] sm:$0xff]
        %v903 = vld [vmem:[%s517 + $0x170] sm:$0xff]
        %v904 = vpack.c.bf16 %v873, %v872
        %v905 = vpack.c.bf16 %v875, %v874
        %v906 = vpack.c.bf16 %v877, %v876
        %v907 = vpack.c.bf16 %v879, %v878
        %v908 = vpack.c.bf16 %v881, %v880
        %v909 = vpack.c.bf16 %v883, %v882
        %v910 = vpack.c.bf16 %v885, %v884
        %v911 = vpack.c.bf16 %v887, %v886
        %v912 = vpack.c.bf16 %v889, %v888
        %v913 = vpack.c.bf16 %v891, %v890
        %v914 = vpack.c.bf16 %v893, %v892
        %v915 = vpack.c.bf16 %v895, %v894
        %v916 = vpack.c.bf16 %v897, %v896
        %v917 = vpack.c.bf16 %v899, %v898
        %v918 = vpack.c.bf16 %v901, %v900
        %v919 = vpack.c.bf16 %v903, %v902
        %936 = vrot.lane.b32.xlu0 %v904, 12
        %v937 = vpop.permute.xlu0 %936
        %938 = vrot.lane.b32.xlu0 %v905, 12
        %v939 = vpop.permute.xlu0 %938
        %940 = vrot.lane.b32.xlu0 %v906, 12
        %v941 = vpop.permute.xlu0 %940
        %942 = vrot.lane.b32.xlu0 %v907, 12
        %v943 = vpop.permute.xlu0 %942
        %944 = vrot.lane.b32.xlu0 %v908, 12
        %v945 = vpop.permute.xlu0 %944
        %946 = vrot.lane.b32.xlu0 %v909, 12
        %v947 = vpop.permute.xlu0 %946
        %948 = vrot.lane.b32.xlu0 %v910, 12
        %v949 = vpop.permute.xlu0 %948
        %950 = vrot.lane.b32.xlu0 %v911, 12
        %v951 = vpop.permute.xlu0 %950
        %952 = vrot.lane.b32.xlu0 %v912, 12
        %v953 = vpop.permute.xlu0 %952
        %954 = vrot.lane.b32.xlu0 %v913, 12
        %v955 = vpop.permute.xlu0 %954
        %956 = vrot.lane.b32.xlu0 %v914, 12
        %v957 = vpop.permute.xlu0 %956
        %958 = vrot.lane.b32.xlu0 %v915, 12
        %v959 = vpop.permute.xlu0 %958
        %960 = vrot.lane.b32.xlu0 %v916, 12
        %v961 = vpop.permute.xlu0 %960
        %962 = vrot.lane.b32.xlu0 %v917, 12
        %v963 = vpop.permute.xlu0 %962
        %964 = vrot.lane.b32.xlu0 %v918, 12
        %v965 = vpop.permute.xlu0 %964
        %966 = vrot.lane.b32.xlu0 %v919, 12
        %v967 = vpop.permute.xlu0 %966
        %vm984 = vcmask 130144
        %985 = vst.msk [vmem:[#allocation3] sm:$0xff] %vm984, %v937
        %986 = vst.msk [vmem:[#allocation3 + $0x8] sm:$0xff] %vm984, %v939
        %987 = vst.msk [vmem:[#allocation3 + $0x10] sm:$0xff] %vm984, %v941
        %988 = vst.msk [vmem:[#allocation3 + $0x18] sm:$0xff] %vm984, %v943
        %989 = vst.msk [vmem:[#allocation3 + $0x20] sm:$0xff] %vm984, %v945
        %990 = vst.msk [vmem:[#allocation3 + $0x28] sm:$0xff] %vm984, %v947
        %991 = vst.msk [vmem:[#allocation3 + $0x30] sm:$0xff] %vm984, %v949
        %992 = vst.msk [vmem:[#allocation3 + $0x38] sm:$0xff] %vm984, %v951
        %993 = vst.msk [vmem:[#allocation3 + $0x40] sm:$0xff] %vm984, %v953
        %994 = vst.msk [vmem:[#allocation3 + $0x48] sm:$0xff] %vm984, %v955
        %995 = vst.msk [vmem:[#allocation3 + $0x50] sm:$0xff] %vm984, %v957
        %996 = vst.msk [vmem:[#allocation3 + $0x58] sm:$0xff] %vm984, %v959
        %997 = vst.msk [vmem:[#allocation3 + $0x60] sm:$0xff] %vm984, %v961
        %998 = vst.msk [vmem:[#allocation3 + $0x68] sm:$0xff] %vm984, %v963
        %999 = vst.msk [vmem:[#allocation3 + $0x70] sm:$0xff] %vm984, %v965
        %1000 = vst.msk [vmem:[#allocation3 + $0x78] sm:$0xff] %vm984, %v967
        %v1001 = vld [vmem:[%s517 + $0x1] sm:$0xff]
        %v1002 = vld [vmem:[%s517 + $0x9] sm:$0xff]
        %v1003 = vld [vmem:[%s517 + $0x19] sm:$0xff]
        %v1004 = vld [vmem:[%s517 + $0x21] sm:$0xff]
        %v1005 = vld [vmem:[%s517 + $0x31] sm:$0xff]
        %v1006 = vld [vmem:[%s517 + $0x39] sm:$0xff]
        %v1007 = vld [vmem:[%s517 + $0x49] sm:$0xff]
        %v1008 = vld [vmem:[%s517 + $0x51] sm:$0xff]
        %v1009 = vld [vmem:[%s517 + $0x61] sm:$0xff]
        %v1010 = vld [vmem:[%s517 + $0x69] sm:$0xff]
        %v1011 = vld [vmem:[%s517 + $0x79] sm:$0xff]
        %v1012 = vld [vmem:[%s517 + $0x81] sm:$0xff]
        %v1013 = vld [vmem:[%s517 + $0x91] sm:$0xff]
        %v1014 = vld [vmem:[%s517 + $0x99] sm:$0xff]
        %v1015 = vld [vmem:[%s517 + $0xa9] sm:$0xff]
        %v1016 = vld [vmem:[%s517 + $0xb1] sm:$0xff]
        %v1017 = vld [vmem:[%s517 + $0xc1] sm:$0xff]
        %v1018 = vld [vmem:[%s517 + $0xc9] sm:$0xff]
        %v1019 = vld [vmem:[%s517 + $0xd9] sm:$0xff]
        %v1020 = vld [vmem:[%s517 + $0xe1] sm:$0xff]
        %v1021 = vld [vmem:[%s517 + $0xf1] sm:$0xff]
        %v1022 = vld [vmem:[%s517 + $0xf9] sm:$0xff]
        %v1023 = vld [vmem:[%s517 + $0x109] sm:$0xff]
        %v1024 = vld [vmem:[%s517 + $0x111] sm:$0xff]
        %v1025 = vld [vmem:[%s517 + $0x121] sm:$0xff]
        %v1026 = vld [vmem:[%s517 + $0x129] sm:$0xff]
        %v1027 = vld [vmem:[%s517 + $0x139] sm:$0xff]
        %v1028 = vld [vmem:[%s517 + $0x141] sm:$0xff]
        %v1029 = vld [vmem:[%s517 + $0x151] sm:$0xff]
        %v1030 = vld [vmem:[%s517 + $0x159] sm:$0xff]
        %v1031 = vld [vmem:[%s517 + $0x169] sm:$0xff]
        %v1032 = vld [vmem:[%s517 + $0x171] sm:$0xff]
        %v1033 = vpack.c.bf16 %v1002, %v1001
        %v1034 = vpack.c.bf16 %v1004, %v1003
        %v1035 = vpack.c.bf16 %v1006, %v1005
        %v1036 = vpack.c.bf16 %v1008, %v1007
        %v1037 = vpack.c.bf16 %v1010, %v1009
        %v1038 = vpack.c.bf16 %v1012, %v1011
        %v1039 = vpack.c.bf16 %v1014, %v1013
        %v1040 = vpack.c.bf16 %v1016, %v1015
        %v1041 = vpack.c.bf16 %v1018, %v1017
        %v1042 = vpack.c.bf16 %v1020, %v1019
        %v1043 = vpack.c.bf16 %v1022, %v1021
        %v1044 = vpack.c.bf16 %v1024, %v1023
        %v1045 = vpack.c.bf16 %v1026, %v1025
        %v1046 = vpack.c.bf16 %v1028, %v1027
        %v1047 = vpack.c.bf16 %v1030, %v1029
        %v1048 = vpack.c.bf16 %v1032, %v1031
        %1065 = vrot.lane.b32.xlu0 %v1033, 16
        %v1066 = vpop.permute.xlu0 %1065
        %1067 = vrot.lane.b32.xlu0 %v1034, 16
        %v1068 = vpop.permute.xlu0 %1067
        %1069 = vrot.lane.b32.xlu0 %v1035, 16
        %v1070 = vpop.permute.xlu0 %1069
        %1071 = vrot.lane.b32.xlu0 %v1036, 16
        %v1072 = vpop.permute.xlu0 %1071
        %1073 = vrot.lane.b32.xlu0 %v1037, 16
        %v1074 = vpop.permute.xlu0 %1073
        %1075 = vrot.lane.b32.xlu0 %v1038, 16
        %v1076 = vpop.permute.xlu0 %1075
        %1077 = vrot.lane.b32.xlu0 %v1039, 16
        %v1078 = vpop.permute.xlu0 %1077
        %1079 = vrot.lane.b32.xlu0 %v1040, 16
        %v1080 = vpop.permute.xlu0 %1079
        %1081 = vrot.lane.b32.xlu0 %v1041, 16
        %v1082 = vpop.permute.xlu0 %1081
        %1083 = vrot.lane.b32.xlu0 %v1042, 16
        %v1084 = vpop.permute.xlu0 %1083
        %1085 = vrot.lane.b32.xlu0 %v1043, 16
        %v1086 = vpop.permute.xlu0 %1085
        %1087 = vrot.lane.b32.xlu0 %v1044, 16
        %v1088 = vpop.permute.xlu0 %1087
        %1089 = vrot.lane.b32.xlu0 %v1045, 16
        %v1090 = vpop.permute.xlu0 %1089
        %1091 = vrot.lane.b32.xlu0 %v1046, 16
        %v1092 = vpop.permute.xlu0 %1091
        %1093 = vrot.lane.b32.xlu0 %v1047, 16
        %v1094 = vpop.permute.xlu0 %1093
        %1095 = vrot.lane.b32.xlu0 %v1048, 16
        %v1096 = vpop.permute.xlu0 %1095
        %vm1113 = vcmask 162944
        %1114 = vst.msk [vmem:[#allocation3] sm:$0xff] %vm1113, %v1066
        %1115 = vst.msk [vmem:[#allocation3 + $0x8] sm:$0xff] %vm1113, %v1068
        %1116 = vst.msk [vmem:[#allocation3 + $0x10] sm:$0xff] %vm1113, %v1070
        %1117 = vst.msk [vmem:[#allocation3 + $0x18] sm:$0xff] %vm1113, %v1072
        %1118 = vst.msk [vmem:[#allocation3 + $0x20] sm:$0xff] %vm1113, %v1074
        %1119 = vst.msk [vmem:[#allocation3 + $0x28] sm:$0xff] %vm1113, %v1076
        %1120 = vst.msk [vmem:[#allocation3 + $0x30] sm:$0xff] %vm1113, %v1078
        %1121 = vst.msk [vmem:[#allocation3 + $0x38] sm:$0xff] %vm1113, %v1080
        %1122 = vst.msk [vmem:[#allocation3 + $0x40] sm:$0xff] %vm1113, %v1082
        %1123 = vst.msk [vmem:[#allocation3 + $0x48] sm:$0xff] %vm1113, %v1084
        %1124 = vst.msk [vmem:[#allocation3 + $0x50] sm:$0xff] %vm1113, %v1086
        %1125 = vst.msk [vmem:[#allocation3 + $0x58] sm:$0xff] %vm1113, %v1088
        %1126 = vst.msk [vmem:[#allocation3 + $0x60] sm:$0xff] %vm1113, %v1090
        %1127 = vst.msk [vmem:[#allocation3 + $0x68] sm:$0xff] %vm1113, %v1092
        %1128 = vst.msk [vmem:[#allocation3 + $0x70] sm:$0xff] %vm1113, %v1094
        %1129 = vst.msk [vmem:[#allocation3 + $0x78] sm:$0xff] %vm1113, %v1096
        %v1130 = vld [vmem:[%s517 + $0x2] sm:$0xff]
        %v1131 = vld [vmem:[%s517 + $0xa] sm:$0xff]
        %v1132 = vld [vmem:[%s517 + $0x1a] sm:$0xff]
        %v1133 = vld [vmem:[%s517 + $0x22] sm:$0xff]
        %v1134 = vld [vmem:[%s517 + $0x32] sm:$0xff]
        %v1135 = vld [vmem:[%s517 + $0x3a] sm:$0xff]
        %v1136 = vld [vmem:[%s517 + $0x4a] sm:$0xff]
        %v1137 = vld [vmem:[%s517 + $0x52] sm:$0xff]
        %v1138 = vld [vmem:[%s517 + $0x62] sm:$0xff]
        %v1139 = vld [vmem:[%s517 + $0x6a] sm:$0xff]
        %v1140 = vld [vmem:[%s517 + $0x7a] sm:$0xff]
        %v1141 = vld [vmem:[%s517 + $0x82] sm:$0xff]
        %v1142 = vld [vmem:[%s517 + $0x92] sm:$0xff]
        %v1143 = vld [vmem:[%s517 + $0x9a] sm:$0xff]
        %v1144 = vld [vmem:[%s517 + $0xaa] sm:$0xff]
        %v1145 = vld [vmem:[%s517 + $0xb2] sm:$0xff]
        %v1146 = vld [vmem:[%s517 + $0xc2] sm:$0xff]
        %v1147 = vld [vmem:[%s517 + $0xca] sm:$0xff]
        %v1148 = vld [vmem:[%s517 + $0xda] sm:$0xff]
        %v1149 = vld [vmem:[%s517 + $0xe2] sm:$0xff]
        %v1150 = vld [vmem:[%s517 + $0xf2] sm:$0xff]
        %v1151 = vld [vmem:[%s517 + $0xfa] sm:$0xff]
        %v1152 = vld [vmem:[%s517 + $0x10a] sm:$0xff]
        %v1153 = vld [vmem:[%s517 + $0x112] sm:$0xff]
        %v1154 = vld [vmem:[%s517 + $0x122] sm:$0xff]
        %v1155 = vld [vmem:[%s517 + $0x12a] sm:$0xff]
        %v1156 = vld [vmem:[%s517 + $0x13a] sm:$0xff]
        %v1157 = vld [vmem:[%s517 + $0x142] sm:$0xff]
        %v1158 = vld [vmem:[%s517 + $0x152] sm:$0xff]
        %v1159 = vld [vmem:[%s517 + $0x15a] sm:$0xff]
        %v1160 = vld [vmem:[%s517 + $0x16a] sm:$0xff]
        %v1161 = vld [vmem:[%s517 + $0x172] sm:$0xff]
        %v1162 = vpack.c.bf16 %v1131, %v1130
        %v1163 = vpack.c.bf16 %v1133, %v1132
        %v1164 = vpack.c.bf16 %v1135, %v1134
        %v1165 = vpack.c.bf16 %v1137, %v1136
        %v1166 = vpack.c.bf16 %v1139, %v1138
        %v1167 = vpack.c.bf16 %v1141, %v1140
        %v1168 = vpack.c.bf16 %v1143, %v1142
        %v1169 = vpack.c.bf16 %v1145, %v1144
        %v1170 = vpack.c.bf16 %v1147, %v1146
        %v1171 = vpack.c.bf16 %v1149, %v1148
        %v1172 = vpack.c.bf16 %v1151, %v1150
        %v1173 = vpack.c.bf16 %v1153, %v1152
        %v1174 = vpack.c.bf16 %v1155, %v1154
        %v1175 = vpack.c.bf16 %v1157, %v1156
        %v1176 = vpack.c.bf16 %v1159, %v1158
        %v1177 = vpack.c.bf16 %v1161, %v1160
        %1194 = vrot.lane.b32.xlu0 %v1162, 20
        %v1195 = vpop.permute.xlu0 %1194
        %1196 = vrot.lane.b32.xlu0 %v1163, 20
        %v1197 = vpop.permute.xlu0 %1196
        %1198 = vrot.lane.b32.xlu0 %v1164, 20
        %v1199 = vpop.permute.xlu0 %1198
        %1200 = vrot.lane.b32.xlu0 %v1165, 20
        %v1201 = vpop.permute.xlu0 %1200
        %1202 = vrot.lane.b32.xlu0 %v1166, 20
        %v1203 = vpop.permute.xlu0 %1202
        %1204 = vrot.lane.b32.xlu0 %v1167, 20
        %v1205 = vpop.permute.xlu0 %1204
        %1206 = vrot.lane.b32.xlu0 %v1168, 20
        %v1207 = vpop.permute.xlu0 %1206
        %1208 = vrot.lane.b32.xlu0 %v1169, 20
        %v1209 = vpop.permute.xlu0 %1208
        %1210 = vrot.lane.b32.xlu0 %v1170, 20
        %v1211 = vpop.permute.xlu0 %1210
        %1212 = vrot.lane.b32.xlu0 %v1171, 20
        %v1213 = vpop.permute.xlu0 %1212
        %1214 = vrot.lane.b32.xlu0 %v1172, 20
        %v1215 = vpop.permute.xlu0 %1214
        %1216 = vrot.lane.b32.xlu0 %v1173, 20
        %v1217 = vpop.permute.xlu0 %1216
        %1218 = vrot.lane.b32.xlu0 %v1174, 20
        %v1219 = vpop.permute.xlu0 %1218
        %1220 = vrot.lane.b32.xlu0 %v1175, 20
        %v1221 = vpop.permute.xlu0 %1220
        %1222 = vrot.lane.b32.xlu0 %v1176, 20
        %v1223 = vpop.permute.xlu0 %1222
        %1224 = vrot.lane.b32.xlu0 %v1177, 20
        %v1225 = vpop.permute.xlu0 %1224
        %vm1242 = vcmask 195744
        %1243 = vst.msk [vmem:[#allocation3] sm:$0xff] %vm1242, %v1195
        %1244 = vst.msk [vmem:[#allocation3 + $0x8] sm:$0xff] %vm1242, %v1197
        %1245 = vst.msk [vmem:[#allocation3 + $0x10] sm:$0xff] %vm1242, %v1199
        %1246 = vst.msk [vmem:[#allocation3 + $0x18] sm:$0xff] %vm1242, %v1201
        %1247 = vst.msk [vmem:[#allocation3 + $0x20] sm:$0xff] %vm1242, %v1203
        %1248 = vst.msk [vmem:[#allocation3 + $0x28] sm:$0xff] %vm1242, %v1205
        %1249 = vst.msk [vmem:[#allocation3 + $0x30] sm:$0xff] %vm1242, %v1207
        %1250 = vst.msk [vmem:[#allocation3 + $0x38] sm:$0xff] %vm1242, %v1209
        %1251 = vst.msk [vmem:[#allocation3 + $0x40] sm:$0xff] %vm1242, %v1211
        %1252 = vst.msk [vmem:[#allocation3 + $0x48] sm:$0xff] %vm1242, %v1213
        %1253 = vst.msk [vmem:[#allocation3 + $0x50] sm:$0xff] %vm1242, %v1215
        %1254 = vst.msk [vmem:[#allocation3 + $0x58] sm:$0xff] %vm1242, %v1217
        %1255 = vst.msk [vmem:[#allocation3 + $0x60] sm:$0xff] %vm1242, %v1219
        %1256 = vst.msk [vmem:[#allocation3 + $0x68] sm:$0xff] %vm1242, %v1221
        %1257 = vst.msk [vmem:[#allocation3 + $0x70] sm:$0xff] %vm1242, %v1223
        %1258 = vst.msk [vmem:[#allocation3 + $0x78] sm:$0xff] %vm1242, %v1225
        %s1259 = scalar_lea.vmem [#allocation2], 48
        %v1260 = vld [vmem:[%s1259] sm:$0xff]
        %v1261 = vld [vmem:[%s1259 + $0x8] sm:$0xff]
        %v1262 = vld [vmem:[%s1259 + $0x18] sm:$0xff]
        %v1263 = vld [vmem:[%s1259 + $0x20] sm:$0xff]
        %v1264 = vld [vmem:[%s1259 + $0x30] sm:$0xff]
        %v1265 = vld [vmem:[%s1259 + $0x38] sm:$0xff]
        %v1266 = vld [vmem:[%s1259 + $0x48] sm:$0xff]
        %v1267 = vld [vmem:[%s1259 + $0x50] sm:$0xff]
        %v1268 = vld [vmem:[%s1259 + $0x60] sm:$0xff]
        %v1269 = vld [vmem:[%s1259 + $0x68] sm:$0xff]
        %v1270 = vld [vmem:[%s1259 + $0x78] sm:$0xff]
        %v1271 = vld [vmem:[%s1259 + $0x80] sm:$0xff]
        %v1272 = vld [vmem:[%s1259 + $0x90] sm:$0xff]
        %v1273 = vld [vmem:[%s1259 + $0x98] sm:$0xff]
        %v1274 = vld [vmem:[%s1259 + $0xa8] sm:$0xff]
        %v1275 = vld [vmem:[%s1259 + $0xb0] sm:$0xff]
        %v1276 = vld [vmem:[%s1259 + $0xc0] sm:$0xff]
        %v1277 = vld [vmem:[%s1259 + $0xc8] sm:$0xff]
        %v1278 = vld [vmem:[%s1259 + $0xd8] sm:$0xff]
        %v1279 = vld [vmem:[%s1259 + $0xe0] sm:$0xff]
        %v1280 = vld [vmem:[%s1259 + $0xf0] sm:$0xff]
        %v1281 = vld [vmem:[%s1259 + $0xf8] sm:$0xff]
        %v1282 = vld [vmem:[%s1259 + $0x108] sm:$0xff]
        %v1283 = vld [vmem:[%s1259 + $0x110] sm:$0xff]
        %v1284 = vld [vmem:[%s1259 + $0x120] sm:$0xff]
        %v1285 = vld [vmem:[%s1259 + $0x128] sm:$0xff]
        %v1286 = vld [vmem:[%s1259 + $0x138] sm:$0xff]
        %v1287 = vld [vmem:[%s1259 + $0x140] sm:$0xff]
        %v1288 = vld [vmem:[%s1259 + $0x150] sm:$0xff]
        %v1289 = vld [vmem:[%s1259 + $0x158] sm:$0xff]
        %v1290 = vld [vmem:[%s1259 + $0x168] sm:$0xff]
        %v1291 = vld [vmem:[%s1259 + $0x170] sm:$0xff]
        %v1292 = vpack.c.bf16 %v1261, %v1260
        %v1293 = vpack.c.bf16 %v1263, %v1262
        %v1294 = vpack.c.bf16 %v1265, %v1264
        %v1295 = vpack.c.bf16 %v1267, %v1266
        %v1296 = vpack.c.bf16 %v1269, %v1268
        %v1297 = vpack.c.bf16 %v1271, %v1270
        %v1298 = vpack.c.bf16 %v1273, %v1272
        %v1299 = vpack.c.bf16 %v1275, %v1274
        %v1300 = vpack.c.bf16 %v1277, %v1276
        %v1301 = vpack.c.bf16 %v1279, %v1278
        %v1302 = vpack.c.bf16 %v1281, %v1280
        %v1303 = vpack.c.bf16 %v1283, %v1282
        %v1304 = vpack.c.bf16 %v1285, %v1284
        %v1305 = vpack.c.bf16 %v1287, %v1286
        %v1306 = vpack.c.bf16 %v1289, %v1288
        %v1307 = vpack.c.bf16 %v1291, %v1290
        %1324 = vrot.lane.b32.xlu0 %v1292, 24
        %v1325 = vpop.permute.xlu0 %1324
        %1326 = vrot.lane.b32.xlu0 %v1293, 24
        %v1327 = vpop.permute.xlu0 %1326
        %1328 = vrot.lane.b32.xlu0 %v1294, 24
        %v1329 = vpop.permute.xlu0 %1328
        %1330 = vrot.lane.b32.xlu0 %v1295, 24
        %v1331 = vpop.permute.xlu0 %1330
        %1332 = vrot.lane.b32.xlu0 %v1296, 24
        %v1333 = vpop.permute.xlu0 %1332
        %1334 = vrot.lane.b32.xlu0 %v1297, 24
        %v1335 = vpop.permute.xlu0 %1334
        %1336 = vrot.lane.b32.xlu0 %v1298, 24
        %v1337 = vpop.permute.xlu0 %1336
        %1338 = vrot.lane.b32.xlu0 %v1299, 24
        %v1339 = vpop.permute.xlu0 %1338
        %1340 = vrot.lane.b32.xlu0 %v1300, 24
        %v1341 = vpop.permute.xlu0 %1340
        %1342 = vrot.lane.b32.xlu0 %v1301, 24
        %v1343 = vpop.permute.xlu0 %1342
        %1344 = vrot.lane.b32.xlu0 %v1302, 24
        %v1345 = vpop.permute.xlu0 %1344
        %1346 = vrot.lane.b32.xlu0 %v1303, 24
        %v1347 = vpop.permute.xlu0 %1346
        %1348 = vrot.lane.b32.xlu0 %v1304, 24
        %v1349 = vpop.permute.xlu0 %1348
        %1350 = vrot.lane.b32.xlu0 %v1305, 24
        %v1351 = vpop.permute.xlu0 %1350
        %1352 = vrot.lane.b32.xlu0 %v1306, 24
        %v1353 = vpop.permute.xlu0 %1352
        %1354 = vrot.lane.b32.xlu0 %v1307, 24
        %v1355 = vpop.permute.xlu0 %1354
        %vm1372 = vcmask 228544
        %1373 = vst.msk [vmem:[#allocation3] sm:$0xff] %vm1372, %v1325
        %1374 = vst.msk [vmem:[#allocation3 + $0x8] sm:$0xff] %vm1372, %v1327
        %1375 = vst.msk [vmem:[#allocation3 + $0x10] sm:$0xff] %vm1372, %v1329
        %1376 = vst.msk [vmem:[#allocation3 + $0x18] sm:$0xff] %vm1372, %v1331
        %1377 = vst.msk [vmem:[#allocation3 + $0x20] sm:$0xff] %vm1372, %v1333
        %1378 = vst.msk [vmem:[#allocation3 + $0x28] sm:$0xff] %vm1372, %v1335
        %1379 = vst.msk [vmem:[#allocation3 + $0x30] sm:$0xff] %vm1372, %v1337
        %1380 = vst.msk [vmem:[#allocation3 + $0x38] sm:$0xff] %vm1372, %v1339
        %1381 = vst.msk [vmem:[#allocation3 + $0x40] sm:$0xff] %vm1372, %v1341
        %1382 = vst.msk [vmem:[#allocation3 + $0x48] sm:$0xff] %vm1372, %v1343
        %1383 = vst.msk [vmem:[#allocation3 + $0x50] sm:$0xff] %vm1372, %v1345
        %1384 = vst.msk [vmem:[#allocation3 + $0x58] sm:$0xff] %vm1372, %v1347
        %1385 = vst.msk [vmem:[#allocation3 + $0x60] sm:$0xff] %vm1372, %v1349
        %1386 = vst.msk [vmem:[#allocation3 + $0x68] sm:$0xff] %vm1372, %v1351
        %1387 = vst.msk [vmem:[#allocation3 + $0x70] sm:$0xff] %vm1372, %v1353
        %1388 = vst.msk [vmem:[#allocation3 + $0x78] sm:$0xff] %vm1372, %v1355
        %v1389 = vld [vmem:[%s1259 + $0x1] sm:$0xff]
        %v1390 = vld [vmem:[%s1259 + $0x9] sm:$0xff]
        %v1391 = vld [vmem:[%s1259 + $0x19] sm:$0xff]
        %v1392 = vld [vmem:[%s1259 + $0x21] sm:$0xff]
        %v1393 = vld [vmem:[%s1259 + $0x31] sm:$0xff]
        %v1394 = vld [vmem:[%s1259 + $0x39] sm:$0xff]
        %v1395 = vld [vmem:[%s1259 + $0x49] sm:$0xff]
        %v1396 = vld [vmem:[%s1259 + $0x51] sm:$0xff]
        %v1397 = vld [vmem:[%s1259 + $0x61] sm:$0xff]
        %v1398 = vld [vmem:[%s1259 + $0x69] sm:$0xff]
        %v1399 = vld [vmem:[%s1259 + $0x79] sm:$0xff]
        %v1400 = vld [vmem:[%s1259 + $0x81] sm:$0xff]
        %v1401 = vld [vmem:[%s1259 + $0x91] sm:$0xff]
        %v1402 = vld [vmem:[%s1259 + $0x99] sm:$0xff]
        %v1403 = vld [vmem:[%s1259 + $0xa9] sm:$0xff]
        %v1404 = vld [vmem:[%s1259 + $0xb1] sm:$0xff]
        %v1405 = vld [vmem:[%s1259 + $0xc1] sm:$0xff]
        %v1406 = vld [vmem:[%s1259 + $0xc9] sm:$0xff]
        %v1407 = vld [vmem:[%s1259 + $0xd9] sm:$0xff]
        %v1408 = vld [vmem:[%s1259 + $0xe1] sm:$0xff]
        %v1409 = vld [vmem:[%s1259 + $0xf1] sm:$0xff]
        %v1410 = vld [vmem:[%s1259 + $0xf9] sm:$0xff]
        %v1411 = vld [vmem:[%s1259 + $0x109] sm:$0xff]
        %v1412 = vld [vmem:[%s1259 + $0x111] sm:$0xff]
        %v1413 = vld [vmem:[%s1259 + $0x121] sm:$0xff]
        %v1414 = vld [vmem:[%s1259 + $0x129] sm:$0xff]
        %v1415 = vld [vmem:[%s1259 + $0x139] sm:$0xff]
        %v1416 = vld [vmem:[%s1259 + $0x141] sm:$0xff]
        %v1417 = vld [vmem:[%s1259 + $0x151] sm:$0xff]
        %v1418 = vld [vmem:[%s1259 + $0x159] sm:$0xff]
        %v1419 = vld [vmem:[%s1259 + $0x169] sm:$0xff]
        %v1420 = vld [vmem:[%s1259 + $0x171] sm:$0xff]
        %v1421 = vpack.c.bf16 %v1390, %v1389
        %v1422 = vpack.c.bf16 %v1392, %v1391
        %v1423 = vpack.c.bf16 %v1394, %v1393
        %v1424 = vpack.c.bf16 %v1396, %v1395
        %v1425 = vpack.c.bf16 %v1398, %v1397
        %v1426 = vpack.c.bf16 %v1400, %v1399
        %v1427 = vpack.c.bf16 %v1402, %v1401
        %v1428 = vpack.c.bf16 %v1404, %v1403
        %v1429 = vpack.c.bf16 %v1406, %v1405
        %v1430 = vpack.c.bf16 %v1408, %v1407
        %v1431 = vpack.c.bf16 %v1410, %v1409
        %v1432 = vpack.c.bf16 %v1412, %v1411
        %v1433 = vpack.c.bf16 %v1414, %v1413
        %v1434 = vpack.c.bf16 %v1416, %v1415
        %v1435 = vpack.c.bf16 %v1418, %v1417
        %v1436 = vpack.c.bf16 %v1420, %v1419
        %1453 = vrot.lane.b32.xlu0 %v1421, 28
        %v1454 = vpop.permute.xlu0 %1453
        %1455 = vrot.lane.b32.xlu0 %v1422, 28
        %v1456 = vpop.permute.xlu0 %1455
        %1457 = vrot.lane.b32.xlu0 %v1423, 28
        %v1458 = vpop.permute.xlu0 %1457
        %1459 = vrot.lane.b32.xlu0 %v1424, 28
        %v1460 = vpop.permute.xlu0 %1459
        %1461 = vrot.lane.b32.xlu0 %v1425, 28
        %v1462 = vpop.permute.xlu0 %1461
        %1463 = vrot.lane.b32.xlu0 %v1426, 28
        %v1464 = vpop.permute.xlu0 %1463
        %1465 = vrot.lane.b32.xlu0 %v1427, 28
        %v1466 = vpop.permute.xlu0 %1465
        %1467 = vrot.lane.b32.xlu0 %v1428, 28
        %v1468 = vpop.permute.xlu0 %1467
        %1469 = vrot.lane.b32.xlu0 %v1429, 28
        %v1470 = vpop.permute.xlu0 %1469
        %1471 = vrot.lane.b32.xlu0 %v1430, 28
        %v1472 = vpop.permute.xlu0 %1471
        %1473 = vrot.lane.b32.xlu0 %v1431, 28
        %v1474 = vpop.permute.xlu0 %1473
        %1475 = vrot.lane.b32.xlu0 %v1432, 28
        %v1476 = vpop.permute.xlu0 %1475
        %1477 = vrot.lane.b32.xlu0 %v1433, 28
        %v1478 = vpop.permute.xlu0 %1477
        %1479 = vrot.lane.b32.xlu0 %v1434, 28
        %v1480 = vpop.permute.xlu0 %1479
        %1481 = vrot.lane.b32.xlu0 %v1435, 28
        %v1482 = vpop.permute.xlu0 %1481
        %1483 = vrot.lane.b32.xlu0 %v1436, 28
        %v1484 = vpop.permute.xlu0 %1483
        %vm1501 = vcmask 261344
        %1502 = vst.msk [vmem:[#allocation3] sm:$0xff] %vm1501, %v1454
        %1503 = vst.msk [vmem:[#allocation3 + $0x8] sm:$0xff] %vm1501, %v1456
        %1504 = vst.msk [vmem:[#allocation3 + $0x10] sm:$0xff] %vm1501, %v1458
        %1505 = vst.msk [vmem:[#allocation3 + $0x18] sm:$0xff] %vm1501, %v1460
        %1506 = vst.msk [vmem:[#allocation3 + $0x20] sm:$0xff] %vm1501, %v1462
        %1507 = vst.msk [vmem:[#allocation3 + $0x28] sm:$0xff] %vm1501, %v1464
        %1508 = vst.msk [vmem:[#allocation3 + $0x30] sm:$0xff] %vm1501, %v1466
        %1509 = vst.msk [vmem:[#allocation3 + $0x38] sm:$0xff] %vm1501, %v1468
        %1510 = vst.msk [vmem:[#allocation3 + $0x40] sm:$0xff] %vm1501, %v1470
        %1511 = vst.msk [vmem:[#allocation3 + $0x48] sm:$0xff] %vm1501, %v1472
        %1512 = vst.msk [vmem:[#allocation3 + $0x50] sm:$0xff] %vm1501, %v1474
        %1513 = vst.msk [vmem:[#allocation3 + $0x58] sm:$0xff] %vm1501, %v1476
        %1514 = vst.msk [vmem:[#allocation3 + $0x60] sm:$0xff] %vm1501, %v1478
        %1515 = vst.msk [vmem:[#allocation3 + $0x68] sm:$0xff] %vm1501, %v1480
        %1516 = vst.msk [vmem:[#allocation3 + $0x70] sm:$0xff] %vm1501, %v1482
        %1517 = vst.msk [vmem:[#allocation3 + $0x78] sm:$0xff] %vm1501, %v1484
        %v1518 = vld [vmem:[%s1259 + $0x2] sm:$0xff]
        %v1519 = vld [vmem:[%s1259 + $0xa] sm:$0xff]
        %v1520 = vld [vmem:[%s1259 + $0x1a] sm:$0xff]
        %v1521 = vld [vmem:[%s1259 + $0x22] sm:$0xff]
        %v1522 = vld [vmem:[%s1259 + $0x32] sm:$0xff]
        %v1523 = vld [vmem:[%s1259 + $0x3a] sm:$0xff]
        %v1524 = vld [vmem:[%s1259 + $0x4a] sm:$0xff]
        %v1525 = vld [vmem:[%s1259 + $0x52] sm:$0xff]
        %v1526 = vld [vmem:[%s1259 + $0x62] sm:$0xff]
        %v1527 = vld [vmem:[%s1259 + $0x6a] sm:$0xff]
        %v1528 = vld [vmem:[%s1259 + $0x7a] sm:$0xff]
        %v1529 = vld [vmem:[%s1259 + $0x82] sm:$0xff]
        %v1530 = vld [vmem:[%s1259 + $0x92] sm:$0xff]
        %v1531 = vld [vmem:[%s1259 + $0x9a] sm:$0xff]
        %v1532 = vld [vmem:[%s1259 + $0xaa] sm:$0xff]
        %v1533 = vld [vmem:[%s1259 + $0xb2] sm:$0xff]
        %v1534 = vld [vmem:[%s1259 + $0xc2] sm:$0xff]
        %v1535 = vld [vmem:[%s1259 + $0xca] sm:$0xff]
        %v1536 = vld [vmem:[%s1259 + $0xda] sm:$0xff]
        %v1537 = vld [vmem:[%s1259 + $0xe2] sm:$0xff]
        %v1538 = vld [vmem:[%s1259 + $0xf2] sm:$0xff]
        %v1539 = vld [vmem:[%s1259 + $0xfa] sm:$0xff]
        %v1540 = vld [vmem:[%s1259 + $0x10a] sm:$0xff]
        %v1541 = vld [vmem:[%s1259 + $0x112] sm:$0xff]
        %v1542 = vld [vmem:[%s1259 + $0x122] sm:$0xff]
        %v1543 = vld [vmem:[%s1259 + $0x12a] sm:$0xff]
        %v1544 = vld [vmem:[%s1259 + $0x13a] sm:$0xff]
        %v1545 = vld [vmem:[%s1259 + $0x142] sm:$0xff]
        %v1546 = vld [vmem:[%s1259 + $0x152] sm:$0xff]
        %v1547 = vld [vmem:[%s1259 + $0x15a] sm:$0xff]
        %v1548 = vld [vmem:[%s1259 + $0x16a] sm:$0xff]
        %v1549 = vld [vmem:[%s1259 + $0x172] sm:$0xff]
        %v1550 = vpack.c.bf16 %v1519, %v1518
        %v1551 = vpack.c.bf16 %v1521, %v1520
        %v1552 = vpack.c.bf16 %v1523, %v1522
        %v1553 = vpack.c.bf16 %v1525, %v1524
        %v1554 = vpack.c.bf16 %v1527, %v1526
        %v1555 = vpack.c.bf16 %v1529, %v1528
        %v1556 = vpack.c.bf16 %v1531, %v1530
        %v1557 = vpack.c.bf16 %v1533, %v1532
        %v1558 = vpack.c.bf16 %v1535, %v1534
        %v1559 = vpack.c.bf16 %v1537, %v1536
        %v1560 = vpack.c.bf16 %v1539, %v1538
        %v1561 = vpack.c.bf16 %v1541, %v1540
        %v1562 = vpack.c.bf16 %v1543, %v1542
        %v1563 = vpack.c.bf16 %v1545, %v1544
        %v1564 = vpack.c.bf16 %v1547, %v1546
        %v1565 = vpack.c.bf16 %v1549, %v1548
        %1582 = vrot.lane.b32.xlu0 %v1550, 32
        %v1583 = vpop.permute.xlu0 %1582
        %1584 = vrot.lane.b32.xlu0 %v1551, 32
        %v1585 = vpop.permute.xlu0 %1584
        %1586 = vrot.lane.b32.xlu0 %v1552, 32
        %v1587 = vpop.permute.xlu0 %1586
        %1588 = vrot.lane.b32.xlu0 %v1553, 32
        %v1589 = vpop.permute.xlu0 %1588
        %1590 = vrot.lane.b32.xlu0 %v1554, 32
        %v1591 = vpop.permute.xlu0 %1590
        %1592 = vrot.lane.b32.xlu0 %v1555, 32
        %v1593 = vpop.permute.xlu0 %1592
        %1594 = vrot.lane.b32.xlu0 %v1556, 32
        %v1595 = vpop.permute.xlu0 %1594
        %1596 = vrot.lane.b32.xlu0 %v1557, 32
        %v1597 = vpop.permute.xlu0 %1596
        %1598 = vrot.lane.b32.xlu0 %v1558, 32
        %v1599 = vpop.permute.xlu0 %1598
        %1600 = vrot.lane.b32.xlu0 %v1559, 32
        %v1601 = vpop.permute.xlu0 %1600
        %1602 = vrot.lane.b32.xlu0 %v1560, 32
        %v1603 = vpop.permute.xlu0 %1602
        %1604 = vrot.lane.b32.xlu0 %v1561, 32
        %v1605 = vpop.permute.xlu0 %1604
        %1606 = vrot.lane.b32.xlu0 %v1562, 32
        %v1607 = vpop.permute.xlu0 %1606
        %1608 = vrot.lane.b32.xlu0 %v1563, 32
        %v1609 = vpop.permute.xlu0 %1608
        %1610 = vrot.lane.b32.xlu0 %v1564, 32
        %v1611 = vpop.permute.xlu0 %1610
        %1612 = vrot.lane.b32.xlu0 %v1565, 32
        %v1613 = vpop.permute.xlu0 %1612
        %vm1630 = vcmask 294144
        %1631 = vst.msk [vmem:[#allocation3] sm:$0xff] %vm1630, %v1583
        %1632 = vst.msk [vmem:[#allocation3 + $0x8] sm:$0xff] %vm1630, %v1585
        %1633 = vst.msk [vmem:[#allocation3 + $0x10] sm:$0xff] %vm1630, %v1587
        %1634 = vst.msk [vmem:[#allocation3 + $0x18] sm:$0xff] %vm1630, %v1589
        %1635 = vst.msk [vmem:[#allocation3 + $0x20] sm:$0xff] %vm1630, %v1591
        %1636 = vst.msk [vmem:[#allocation3 + $0x28] sm:$0xff] %vm1630, %v1593
        %1637 = vst.msk [vmem:[#allocation3 + $0x30] sm:$0xff] %vm1630, %v1595
        %1638 = vst.msk [vmem:[#allocation3 + $0x38] sm:$0xff] %vm1630, %v1597
        %1639 = vst.msk [vmem:[#allocation3 + $0x40] sm:$0xff] %vm1630, %v1599
        %1640 = vst.msk [vmem:[#allocation3 + $0x48] sm:$0xff] %vm1630, %v1601
        %1641 = vst.msk [vmem:[#allocation3 + $0x50] sm:$0xff] %vm1630, %v1603
        %1642 = vst.msk [vmem:[#allocation3 + $0x58] sm:$0xff] %vm1630, %v1605
        %1643 = vst.msk [vmem:[#allocation3 + $0x60] sm:$0xff] %vm1630, %v1607
        %1644 = vst.msk [vmem:[#allocation3 + $0x68] sm:$0xff] %vm1630, %v1609
        %1645 = vst.msk [vmem:[#allocation3 + $0x70] sm:$0xff] %vm1630, %v1611
        %1646 = vst.msk [vmem:[#allocation3 + $0x78] sm:$0xff] %vm1630, %v1613
        %v1647 = vld [vmem:[#allocation3] sm:$0xff]
        %v1648 = vld [vmem:[#allocation3 + $0x8] sm:$0xff]
        %v1649 = vld [vmem:[#allocation3 + $0x10] sm:$0xff]
        %v1650 = vld [vmem:[#allocation3 + $0x18] sm:$0xff]
        %v1651 = vld [vmem:[#allocation3 + $0x20] sm:$0xff]
        %v1652 = vld [vmem:[#allocation3 + $0x28] sm:$0xff]
        %v1653 = vld [vmem:[#allocation3 + $0x30] sm:$0xff]
        %v1654 = vld [vmem:[#allocation3 + $0x38] sm:$0xff]
        %v1655 = vld [vmem:[#allocation3 + $0x40] sm:$0xff]
        %v1656 = vld [vmem:[#allocation3 + $0x48] sm:$0xff]
        %v1657 = vld [vmem:[#allocation3 + $0x50] sm:$0xff]
        %v1658 = vld [vmem:[#allocation3 + $0x58] sm:$0xff]
        %v1659 = vld [vmem:[#allocation3 + $0x60] sm:$0xff]
        %v1660 = vld [vmem:[#allocation3 + $0x68] sm:$0xff]
        %v1661 = vld [vmem:[#allocation3 + $0x70] sm:$0xff]
        %v1662 = vld [vmem:[#allocation3 + $0x78] sm:$0xff]
        %v1663 = vld [vmem:[%s1] sm:$0xf]
        %v1664 = vld [vmem:[%s1 + $0x4] sm:$0xf]
        %v1665 = vld [vmem:[%s1 + $0x8] sm:$0xf]
        %v1666 = vld [vmem:[%s1 + $0xc] sm:$0xf]
        %v1667 = vld [vmem:[%s1 + $0x10] sm:$0x3]
        %v1673 = vunpack.c.l.b16 %v1663
        %v1674 = vunpack.c.l.b16 %v1664
        %v1675 = vunpack.c.l.b16 %v1665
        %v1676 = vunpack.c.l.b16 %v1666
        %v1677 = vunpack.c.l.b16 %v1667
        %v1678 = vpack.c.b16 %v1674, %v1673
        %v1679 = vpack.c.b16 %v1676, %v1675
        %v1680 = vpack.c.b16 %v1677, %v1677
        %vm1683 = vcmask 293888
        %v1685 = vsel %vm1683, %v1647, 0
        %v1688 = vsel %vm1683, %v1648, 0
        %v1691 = vsel %vm1683, %v1649, 0
        %v1694 = vsel %vm1683, %v1650, 0
        %v1697 = vsel %vm1683, %v1651, 0
        %v1700 = vsel %vm1683, %v1652, 0
        %v1703 = vsel %vm1683, %v1653, 0
        %v1706 = vsel %vm1683, %v1654, 0
        %v1709 = vsel %vm1683, %v1655, 0
        %v1712 = vsel %vm1683, %v1656, 0
        %v1715 = vsel %vm1683, %v1657, 0
        %v1718 = vsel %vm1683, %v1658, 0
        %v1721 = vsel %vm1683, %v1659, 0
        %v1724 = vsel %vm1683, %v1660, 0
        %v1727 = vsel %vm1683, %v1661, 0
        %v1730 = vsel %vm1683, %v1662, 0
        %vm1732 = vcmask 1041408
        %v1734 = vsel %vm1732, %v1680, 0
        %1736 = vmatprep.subr.bf16.mxu0 0
        %1737 = vmatpush1.bf16.msra.mxu0 %v1678
        %1738 = vmatprep.subr.bf16.mxu0 0
        %1739 = vmatpush1.bf16.msra.mxu0 %v1679
        %1740 = vmatprep.subr.bf16.mxu0 0
        %1741 = vmatpush1.bf16.msra.mxu0 %v1734
        %1742 = vmatprep.subr.bf16.mxu0 0
        %1743 = vmatpush1.bf16.msra.mxu0 0
        %1744 = vmatprep.subr.bf16.mxu0 0
        %1745 = vmatpush1.bf16.msra.mxu0 0
        %1746 = vmatprep.subr.bf16.mxu0 0
        %1747 = vmatpush1.bf16.msra.mxu0 0
        %1748 = vmatprep.subr.bf16.mxu0 0
        %1749 = vmatpush1.bf16.msra.mxu0 0
        %1750 = vmatprep.subr.bf16.mxu0 0
        %1751 = vmatpush1.bf16.msra.mxu0 0
        %1752 = vmatprep.subr.bf16.mxu0 0
        %1753 = vmatpush1.bf16.msra.mxu0 0
        %1754 = vmatprep.subr.bf16.mxu0 0
        %1755 = vmatpush1.bf16.msra.mxu0 0
        %1756 = vmatprep.subr.bf16.mxu0 0
        %1757 = vmatpush1.bf16.msra.mxu0 0
        %1758 = vmatprep.subr.bf16.mxu0 0
        %1759 = vmatpush1.bf16.msra.mxu0 0
        %1760 = vmatprep.subr.bf16.mxu0 0
        %1761 = vmatpush1.bf16.msra.mxu0 0
        %1762 = vmatprep.subr.bf16.mxu0 0
        %1763 = vmatpush1.bf16.msra.mxu0 0
        %1764 = vmatprep.subr.bf16.mxu0 0
        %1765 = vmatpush1.bf16.msra.mxu0 0
        %1766 = vmatprep.subr.bf16.mxu0 0
        %1767 = vmatpush1.bf16.msra.mxu0 0
        %1768 = vmatprep.mubr.bf16.mxu0 0
        %1769 = vmatmul.mubr.bf16.gmra.mrb[0].mxu0 %v1685
        %v1770 = vpop.f32.mrb[0].mxu0
        %v1771 = vadd.f32 0.0, %v1770
        %v1772 = vpop.f32.mrb[0].mxu0
        %v1773 = vpop.f32.mrb[0].mxu0
        %v1774 = vadd.f32 0.0, %v1773
        %v1775 = vpop.f32.mrb[0].mxu0
        %1776 = vmatprep.mubr.bf16.mxu0 0
        %1777 = vmatmul.mubr.bf16.gmra.mrb[0].mxu0 %v1688
        %v1778 = vpop.f32.mrb[0].mxu0
        %v1779 = vadd.f32 0.0, %v1778
        %v1780 = vpop.f32.mrb[0].mxu0
        %v1781 = vpop.f32.mrb[0].mxu0
        %v1782 = vadd.f32 0.0, %v1781
        %v1783 = vpop.f32.mrb[0].mxu0
        %1784 = vmatprep.mubr.bf16.mxu0 0
        %1785 = vmatmul.mubr.bf16.gmra.mrb[0].mxu0 %v1691
        %v1786 = vpop.f32.mrb[0].mxu0
        %v1787 = vadd.f32 0.0, %v1786
        %v1788 = vpop.f32.mrb[0].mxu0
        %v1789 = vpop.f32.mrb[0].mxu0
        %v1790 = vadd.f32 0.0, %v1789
        %v1791 = vpop.f32.mrb[0].mxu0
        %1792 = vmatprep.mubr.bf16.mxu0 0
        %1793 = vmatmul.mubr.bf16.gmra.mrb[0].mxu0 %v1694
        %v1794 = vpop.f32.mrb[0].mxu0
        %v1795 = vadd.f32 0.0, %v1794
        %v1796 = vpop.f32.mrb[0].mxu0
        %v1797 = vpop.f32.mrb[0].mxu0
        %v1798 = vadd.f32 0.0, %v1797
        %v1799 = vpop.f32.mrb[0].mxu0
        %1800 = vmatprep.mubr.bf16.mxu0 0
        %1801 = vmatmul.mubr.bf16.gmra.mrb[0].mxu0 %v1697
        %v1802 = vpop.f32.mrb[0].mxu0
        %v1803 = vadd.f32 0.0, %v1802
        %v1804 = vpop.f32.mrb[0].mxu0
        %v1805 = vpop.f32.mrb[0].mxu0
        %v1806 = vadd.f32 0.0, %v1805
        %v1807 = vpop.f32.mrb[0].mxu0
        %1808 = vmatprep.mubr.bf16.mxu0 0
        %1809 = vmatmul.mubr.bf16.gmra.mrb[0].mxu0 %v1700
        %v1810 = vpop.f32.mrb[0].mxu0
        %v1811 = vadd.f32 0.0, %v1810
        %v1812 = vpop.f32.mrb[0].mxu0
        %v1813 = vpop.f32.mrb[0].mxu0
        %v1814 = vadd.f32 0.0, %v1813
        %v1815 = vpop.f32.mrb[0].mxu0
        %1816 = vmatprep.mubr.bf16.mxu0 0
        %1817 = vmatmul.mubr.bf16.gmra.mrb[0].mxu0 %v1703
        %v1818 = vpop.f32.mrb[0].mxu0
        %v1819 = vadd.f32 0.0, %v1818
        %v1820 = vpop.f32.mrb[0].mxu0
        %v1821 = vpop.f32.mrb[0].mxu0
        %v1822 = vadd.f32 0.0, %v1821
        %v1823 = vpop.f32.mrb[0].mxu0
        %1824 = vmatprep.mubr.bf16.mxu0 0
        %1825 = vmatmul.mubr.bf16.gmra.mrb[0].mxu0 %v1706
        %v1826 = vpop.f32.mrb[0].mxu0
        %v1827 = vadd.f32 0.0, %v1826
        %v1828 = vpop.f32.mrb[0].mxu0
        %v1829 = vpop.f32.mrb[0].mxu0
        %v1830 = vadd.f32 0.0, %v1829
        %v1831 = vpop.f32.mrb[0].mxu0
        %1832 = vmatprep.mubr.bf16.mxu0 0
        %1833 = vmatmul.mubr.bf16.gmra.mrb[0].mxu0 %v1709
        %v1834 = vpop.f32.mrb[0].mxu0
        %v1835 = vadd.f32 0.0, %v1834
        %v1836 = vpop.f32.mrb[0].mxu0
        %v1837 = vpop.f32.mrb[0].mxu0
        %v1838 = vadd.f32 0.0, %v1837
        %v1839 = vpop.f32.mrb[0].mxu0
        %1840 = vmatprep.mubr.bf16.mxu0 0
        %1841 = vmatmul.mubr.bf16.gmra.mrb[0].mxu0 %v1712
        %v1842 = vpop.f32.mrb[0].mxu0
        %v1843 = vadd.f32 0.0, %v1842
        %v1844 = vpop.f32.mrb[0].mxu0
        %v1845 = vpop.f32.mrb[0].mxu0
        %v1846 = vadd.f32 0.0, %v1845
        %v1847 = vpop.f32.mrb[0].mxu0
        %1848 = vmatprep.mubr.bf16.mxu0 0
        %1849 = vmatmul.mubr.bf16.gmra.mrb[0].mxu0 %v1715
        %v1850 = vpop.f32.mrb[0].mxu0
        %v1851 = vadd.f32 0.0, %v1850
        %v1852 = vpop.f32.mrb[0].mxu0
        %v1853 = vpop.f32.mrb[0].mxu0
        %v1854 = vadd.f32 0.0, %v1853
        %v1855 = vpop.f32.mrb[0].mxu0
        %1856 = vmatprep.mubr.bf16.mxu0 0
        %1857 = vmatmul.mubr.bf16.gmra.mrb[0].mxu0 %v1718
        %v1858 = vpop.f32.mrb[0].mxu0
        %v1859 = vadd.f32 0.0, %v1858
        %v1860 = vpop.f32.mrb[0].mxu0
        %v1861 = vpop.f32.mrb[0].mxu0
        %v1862 = vadd.f32 0.0, %v1861
        %v1863 = vpop.f32.mrb[0].mxu0
        %1864 = vmatprep.mubr.bf16.mxu0 0
        %1865 = vmatmul.mubr.bf16.gmra.mrb[0].mxu0 %v1721
        %v1866 = vpop.f32.mrb[0].mxu0
        %v1867 = vadd.f32 0.0, %v1866
        %v1868 = vpop.f32.mrb[0].mxu0
        %v1869 = vpop.f32.mrb[0].mxu0
        %v1870 = vadd.f32 0.0, %v1869
        %v1871 = vpop.f32.mrb[0].mxu0
        %1872 = vmatprep.mubr.bf16.mxu0 0
        %1873 = vmatmul.mubr.bf16.gmra.mrb[0].mxu0 %v1724
        %v1874 = vpop.f32.mrb[0].mxu0
        %v1875 = vadd.f32 0.0, %v1874
        %v1876 = vpop.f32.mrb[0].mxu0
        %v1877 = vpop.f32.mrb[0].mxu0
        %v1878 = vadd.f32 0.0, %v1877
        %v1879 = vpop.f32.mrb[0].mxu0
        %1880 = vmatprep.mubr.bf16.mxu0 0
        %1881 = vmatmul.mubr.bf16.gmra.mrb[0].mxu0 %v1727
        %v1882 = vpop.f32.mrb[0].mxu0
        %v1883 = vadd.f32 0.0, %v1882
        %v1884 = vpop.f32.mrb[0].mxu0
        %v1885 = vpop.f32.mrb[0].mxu0
        %v1886 = vadd.f32 0.0, %v1885
        %v1887 = vpop.f32.mrb[0].mxu0
        %1888 = vmatprep.mubr.bf16.mxu0 0
        %1889 = vmatmul.mubr.bf16.gmra.mrb[0].mxu0 %v1730
        %v1890 = vpop.f32.mrb[0].mxu0
        %v1891 = vadd.f32 0.0, %v1890
        %v1892 = vpop.f32.mrb[0].mxu0
        %v1893 = vpop.f32.mrb[0].mxu0
        %v1894 = vadd.f32 0.0, %v1893
        %v1895 = vpop.f32.mrb[0].mxu0
        %1896 = vdwg.mxu0
        %v1897 = vld [vmem:[%s3] sm:$0x1]
        %v1899 = vlaneseq
        %v1900 = vshrl.u32 %v1899, 7
        %v1901 = vsub.s32 0, %v1900
        %v1902 = vrot.slane %v1897, %v1901
        %v1904 = vmul.f32 %v1771, %v1902
        %v1905 = vmul.f32 %v1774, %v1902
        %v1906 = vmul.f32 %v1779, %v1902
        %v1907 = vmul.f32 %v1782, %v1902
        %v1908 = vmul.f32 %v1787, %v1902
        %v1909 = vmul.f32 %v1790, %v1902
        %v1910 = vmul.f32 %v1795, %v1902
        %v1911 = vmul.f32 %v1798, %v1902
        %v1912 = vmul.f32 %v1803, %v1902
        %v1913 = vmul.f32 %v1806, %v1902
        %v1914 = vmul.f32 %v1811, %v1902
        %v1915 = vmul.f32 %v1814, %v1902
        %v1916 = vmul.f32 %v1819, %v1902
        %v1917 = vmul.f32 %v1822, %v1902
        %v1918 = vmul.f32 %v1827, %v1902
        %v1919 = vmul.f32 %v1830, %v1902
        %v1920 = vmul.f32 %v1835, %v1902
        %v1921 = vmul.f32 %v1838, %v1902
        %v1922 = vmul.f32 %v1843, %v1902
        %v1923 = vmul.f32 %v1846, %v1902
        %v1924 = vmul.f32 %v1851, %v1902
        %v1925 = vmul.f32 %v1854, %v1902
        %v1926 = vmul.f32 %v1859, %v1902
        %v1927 = vmul.f32 %v1862, %v1902
        %v1928 = vmul.f32 %v1867, %v1902
        %v1929 = vmul.f32 %v1870, %v1902
        %v1930 = vmul.f32 %v1875, %v1902
        %v1931 = vmul.f32 %v1878, %v1902
        %v1932 = vmul.f32 %v1883, %v1902
        %v1933 = vmul.f32 %v1886, %v1902
        %v1934 = vmul.f32 %v1891, %v1902
        %v1935 = vmul.f32 %v1894, %v1902
        %v1936 = vld [vmem:[%s4] sm:$0x1]
        %v1938 = vlaneseq
        %v1939 = vshrl.u32 %v1938, 7
        %v1940 = vsub.s32 0, %v1939
        %v1941 = vrot.slane %v1936, %v1940
        %v1943 = vadd.f32 %v1904, %v1941
        %v1944 = vadd.f32 %v1905, %v1941
        %v1945 = vadd.f32 %v1906, %v1941
        %v1946 = vadd.f32 %v1907, %v1941
        %v1947 = vadd.f32 %v1908, %v1941
        %v1948 = vadd.f32 %v1909, %v1941
        %v1949 = vadd.f32 %v1910, %v1941
        %v1950 = vadd.f32 %v1911, %v1941
        %v1951 = vadd.f32 %v1912, %v1941
        %v1952 = vadd.f32 %v1913, %v1941
        %v1953 = vadd.f32 %v1914, %v1941
        %v1954 = vadd.f32 %v1915, %v1941
        %v1955 = vadd.f32 %v1916, %v1941
        %v1956 = vadd.f32 %v1917, %v1941
        %v1957 = vadd.f32 %v1918, %v1941
        %v1958 = vadd.f32 %v1919, %v1941
        %v1959 = vadd.f32 %v1920, %v1941
        %v1960 = vadd.f32 %v1921, %v1941
        %v1961 = vadd.f32 %v1922, %v1941
        %v1962 = vadd.f32 %v1923, %v1941
        %v1963 = vadd.f32 %v1924, %v1941
        %v1964 = vadd.f32 %v1925, %v1941
        %v1965 = vadd.f32 %v1926, %v1941
        %v1966 = vadd.f32 %v1927, %v1941
        %v1967 = vadd.f32 %v1928, %v1941
        %v1968 = vadd.f32 %v1929, %v1941
        %v1969 = vadd.f32 %v1930, %v1941
        %v1970 = vadd.f32 %v1931, %v1941
        %v1971 = vadd.f32 %v1932, %v1941
        %v1972 = vadd.f32 %v1933, %v1941
        %v1973 = vadd.f32 %v1934, %v1941
        %v1974 = vadd.f32 %v1935, %v1941
        %v1975 = vmax.f32 %v1943, 0.0
        %v1976 = vmax.f32 %v1944, 0.0
        %v1977 = vmax.f32 %v1945, 0.0
        %v1978 = vmax.f32 %v1946, 0.0
        %v1979 = vmax.f32 %v1947, 0.0
        %v1980 = vmax.f32 %v1948, 0.0
        %v1981 = vmax.f32 %v1949, 0.0
        %v1982 = vmax.f32 %v1950, 0.0
        %v1983 = vmax.f32 %v1951, 0.0
        %v1984 = vmax.f32 %v1952, 0.0
        %v1985 = vmax.f32 %v1953, 0.0
        %v1986 = vmax.f32 %v1954, 0.0
        %v1987 = vmax.f32 %v1955, 0.0
        %v1988 = vmax.f32 %v1956, 0.0
        %v1989 = vmax.f32 %v1957, 0.0
        %v1990 = vmax.f32 %v1958, 0.0
        %v1991 = vmax.f32 %v1959, 0.0
        %v1992 = vmax.f32 %v1960, 0.0
        %v1993 = vmax.f32 %v1961, 0.0
        %v1994 = vmax.f32 %v1962, 0.0
        %v1995 = vmax.f32 %v1963, 0.0
        %v1996 = vmax.f32 %v1964, 0.0
        %v1997 = vmax.f32 %v1965, 0.0
        %v1998 = vmax.f32 %v1966, 0.0
        %v1999 = vmax.f32 %v1967, 0.0
        %v2000 = vmax.f32 %v1968, 0.0
        %v2001 = vmax.f32 %v1969, 0.0
        %v2002 = vmax.f32 %v1970, 0.0
        %v2003 = vmax.f32 %v1971, 0.0
        %v2004 = vmax.f32 %v1972, 0.0
        %v2005 = vmax.f32 %v1973, 0.0
        %v2006 = vmax.f32 %v1974, 0.0
        %vm2007 = vcmask 130048
        %2008 = vst.msk [vmem:[#allocation4] sm:$0xff] %vm2007, 0.0
        %2009 = vst.msk [vmem:[#allocation4 + $0x8] sm:$0xff] %vm2007, 0.0
        %vm2010 = vcmask 123904
        %2011 = vst.msk [vmem:[#allocation4 + $0x10] sm:$0x3] %vm2010, 0.0
        %2012 = vst.msk [vmem:[#allocation4 + $0x18] sm:$0xff] %vm2007, 0.0
        %2013 = vst.msk [vmem:[#allocation4 + $0x20] sm:$0xff] %vm2007, 0.0
        %2014 = vst.msk [vmem:[#allocation4 + $0x28] sm:$0x3] %vm2010, 0.0
        %2015 = vst.msk [vmem:[#allocation4 + $0x30] sm:$0xff] %vm2007, 0.0
        %2016 = vst.msk [vmem:[#allocation4 + $0x38] sm:$0xff] %vm2007, 0.0
        %2017 = vst.msk [vmem:[#allocation4 + $0x40] sm:$0x3] %vm2010, 0.0
        %2018 = vst.msk [vmem:[#allocation4 + $0x48] sm:$0xff] %vm2007, 0.0
        %2019 = vst.msk [vmem:[#allocation4 + $0x50] sm:$0xff] %vm2007, 0.0
        %2020 = vst.msk [vmem:[#allocation4 + $0x58] sm:$0x3] %vm2010, 0.0
        %2021 = vst.msk [vmem:[#allocation4 + $0x60] sm:$0xff] %vm2007, 0.0
        %2022 = vst.msk [vmem:[#allocation4 + $0x68] sm:$0xff] %vm2007, 0.0
        %2023 = vst.msk [vmem:[#allocation4 + $0x70] sm:$0x3] %vm2010, 0.0
        %2024 = vst.msk [vmem:[#allocation4 + $0x78] sm:$0xff] %vm2007, 0.0
        %2025 = vst.msk [vmem:[#allocation4 + $0x80] sm:$0xff] %vm2007, 0.0
        %2026 = vst.msk [vmem:[#allocation4 + $0x88] sm:$0x3] %vm2010, 0.0
        %2027 = vst.msk [vmem:[#allocation4 + $0x90] sm:$0xff] %vm2007, 0.0
        %2028 = vst.msk [vmem:[#allocation4 + $0x98] sm:$0xff] %vm2007, 0.0
        %2029 = vst.msk [vmem:[#allocation4 + $0xa0] sm:$0x3] %vm2010, 0.0
        %2030 = vst.msk [vmem:[#allocation4 + $0xa8] sm:$0xff] %vm2007, 0.0
        %2031 = vst.msk [vmem:[#allocation4 + $0xb0] sm:$0xff] %vm2007, 0.0
        %2032 = vst.msk [vmem:[#allocation4 + $0xb8] sm:$0x3] %vm2010, 0.0
        %2033 = vst.msk [vmem:[#allocation4 + $0xc0] sm:$0xff] %vm2007, 0.0
        %2034 = vst.msk [vmem:[#allocation4 + $0xc8] sm:$0xff] %vm2007, 0.0
        %2035 = vst.msk [vmem:[#allocation4 + $0xd0] sm:$0x3] %vm2010, 0.0
        %2036 = vst.msk [vmem:[#allocation4 + $0xd8] sm:$0xff] %vm2007, 0.0
        %2037 = vst.msk [vmem:[#allocation4 + $0xe0] sm:$0xff] %vm2007, 0.0
        %2038 = vst.msk [vmem:[#allocation4 + $0xe8] sm:$0x3] %vm2010, 0.0
        %2039 = vst.msk [vmem:[#allocation4 + $0xf0] sm:$0xff] %vm2007, 0.0
        %2040 = vst.msk [vmem:[#allocation4 + $0xf8] sm:$0xff] %vm2007, 0.0
        %2041 = vst.msk [vmem:[#allocation4 + $0x100] sm:$0x3] %vm2010, 0.0
        %2042 = vst.msk [vmem:[#allocation4 + $0x108] sm:$0xff] %vm2007, 0.0
        %2043 = vst.msk [vmem:[#allocation4 + $0x110] sm:$0xff] %vm2007, 0.0
        %2044 = vst.msk [vmem:[#allocation4 + $0x118] sm:$0x3] %vm2010, 0.0
        %2045 = vst.msk [vmem:[#allocation4 + $0x120] sm:$0xff] %vm2007, 0.0
        %2046 = vst.msk [vmem:[#allocation4 + $0x128] sm:$0xff] %vm2007, 0.0
        %2047 = vst.msk [vmem:[#allocation4 + $0x130] sm:$0x3] %vm2010, 0.0
        %2048 = vst.msk [vmem:[#allocation4 + $0x138] sm:$0xff] %vm2007, 0.0
        %2049 = vst.msk [vmem:[#allocation4 + $0x140] sm:$0xff] %vm2007, 0.0
        %2050 = vst.msk [vmem:[#allocation4 + $0x148] sm:$0x3] %vm2010, 0.0
        %2051 = vst.msk [vmem:[#allocation4 + $0x150] sm:$0xff] %vm2007, 0.0
        %2052 = vst.msk [vmem:[#allocation4 + $0x158] sm:$0xff] %vm2007, 0.0
        %2053 = vst.msk [vmem:[#allocation4 + $0x160] sm:$0x3] %vm2010, 0.0
        %2054 = vst.msk [vmem:[#allocation4 + $0x168] sm:$0xff] %vm2007, 0.0
        %2055 = vst.msk [vmem:[#allocation4 + $0x170] sm:$0xff] %vm2007, 0.0
        %2056 = vst.msk [vmem:[#allocation4 + $0x178] sm:$0x3] %vm2010, 0.0
        %2057 = vst.msk [vmem:[#allocation4 + $0x180] sm:$0xff] %vm2007, 0.0
        %2058 = vst.msk [vmem:[#allocation4 + $0x188] sm:$0xff] %vm2007, 0.0
        %2059 = vst.msk [vmem:[#allocation4 + $0x190] sm:$0x3] %vm2010, 0.0
        %2060 = vst.msk [vmem:[#allocation4 + $0x198] sm:$0xff] %vm2007, 0.0
        %2061 = vst.msk [vmem:[#allocation4 + $0x1a0] sm:$0xff] %vm2007, 0.0
        %2062 = vst.msk [vmem:[#allocation4 + $0x1a8] sm:$0x3] %vm2010, 0.0
        %s2063 = scalar_lea.vmem [#allocation4], 24
        %2064 = vst.msk [vmem:[%s2063 + $0x1] sm:$0xff] %vm2007, %v1975
        %2065 = vst.msk [vmem:[%s2063 + $0x9] sm:$0xff] %vm2007, %v1976
        %2066 = vst.msk [vmem:[%s2063 + $0x19] sm:$0xff] %vm2007, %v1977
        %2067 = vst.msk [vmem:[%s2063 + $0x21] sm:$0xff] %vm2007, %v1978
        %2068 = vst.msk [vmem:[%s2063 + $0x31] sm:$0xff] %vm2007, %v1979
        %2069 = vst.msk [vmem:[%s2063 + $0x39] sm:$0xff] %vm2007, %v1980
        %2070 = vst.msk [vmem:[%s2063 + $0x49] sm:$0xff] %vm2007, %v1981
        %2071 = vst.msk [vmem:[%s2063 + $0x51] sm:$0xff] %vm2007, %v1982
        %2072 = vst.msk [vmem:[%s2063 + $0x61] sm:$0xff] %vm2007, %v1983
        %2073 = vst.msk [vmem:[%s2063 + $0x69] sm:$0xff] %vm2007, %v1984
        %2074 = vst.msk [vmem:[%s2063 + $0x79] sm:$0xff] %vm2007, %v1985
        %2075 = vst.msk [vmem:[%s2063 + $0x81] sm:$0xff] %vm2007, %v1986
        %2076 = vst.msk [vmem:[%s2063 + $0x91] sm:$0xff] %vm2007, %v1987
        %2077 = vst.msk [vmem:[%s2063 + $0x99] sm:$0xff] %vm2007, %v1988
        %2078 = vst.msk [vmem:[%s2063 + $0xa9] sm:$0xff] %vm2007, %v1989
        %2079 = vst.msk [vmem:[%s2063 + $0xb1] sm:$0xff] %vm2007, %v1990
        %2080 = vst.msk [vmem:[%s2063 + $0xc1] sm:$0xff] %vm2007, %v1991
        %2081 = vst.msk [vmem:[%s2063 + $0xc9] sm:$0xff] %vm2007, %v1992
        %2082 = vst.msk [vmem:[%s2063 + $0xd9] sm:$0xff] %vm2007, %v1993
        %2083 = vst.msk [vmem:[%s2063 + $0xe1] sm:$0xff] %vm2007, %v1994
        %2084 = vst.msk [vmem:[%s2063 + $0xf1] sm:$0xff] %vm2007, %v1995
        %2085 = vst.msk [vmem:[%s2063 + $0xf9] sm:$0xff] %vm2007, %v1996
        %2086 = vst.msk [vmem:[%s2063 + $0x109] sm:$0xff] %vm2007, %v1997
        %2087 = vst.msk [vmem:[%s2063 + $0x111] sm:$0xff] %vm2007, %v1998
        %2088 = vst.msk [vmem:[%s2063 + $0x121] sm:$0xff] %vm2007, %v1999
        %2089 = vst.msk [vmem:[%s2063 + $0x129] sm:$0xff] %vm2007, %v2000
        %2090 = vst.msk [vmem:[%s2063 + $0x139] sm:$0xff] %vm2007, %v2001
        %2091 = vst.msk [vmem:[%s2063 + $0x141] sm:$0xff] %vm2007, %v2002
        %2092 = vst.msk [vmem:[%s2063 + $0x151] sm:$0xff] %vm2007, %v2003
        %2093 = vst.msk [vmem:[%s2063 + $0x159] sm:$0xff] %vm2007, %v2004
        %2094 = vst.msk [vmem:[%s2063 + $0x169] sm:$0xff] %vm2007, %v2005
        %2095 = vst.msk [vmem:[%s2063 + $0x171] sm:$0xff] %vm2007, %v2006
        %v2096 = vld [vmem:[#allocation4] sm:$0xff]
        %v2097 = vld [vmem:[#allocation4 + $0x8] sm:$0xff]
        %v2098 = vld [vmem:[#allocation4 + $0x18] sm:$0xff]
        %v2099 = vld [vmem:[#allocation4 + $0x20] sm:$0xff]
        %v2100 = vld [vmem:[#allocation4 + $0x30] sm:$0xff]
        %v2101 = vld [vmem:[#allocation4 + $0x38] sm:$0xff]
        %v2102 = vld [vmem:[#allocation4 + $0x48] sm:$0xff]
        %v2103 = vld [vmem:[#allocation4 + $0x50] sm:$0xff]
        %v2104 = vld [vmem:[#allocation4 + $0x60] sm:$0xff]
        %v2105 = vld [vmem:[#allocation4 + $0x68] sm:$0xff]
        %v2106 = vld [vmem:[#allocation4 + $0x78] sm:$0xff]
        %v2107 = vld [vmem:[#allocation4 + $0x80] sm:$0xff]
        %v2108 = vld [vmem:[#allocation4 + $0x90] sm:$0xff]
        %v2109 = vld [vmem:[#allocation4 + $0x98] sm:$0xff]
        %v2110 = vld [vmem:[#allocation4 + $0xa8] sm:$0xff]
        %v2111 = vld [vmem:[#allocation4 + $0xb0] sm:$0xff]
        %v2112 = vld [vmem:[#allocation4 + $0xc0] sm:$0xff]
        %v2113 = vld [vmem:[#allocation4 + $0xc8] sm:$0xff]
        %v2114 = vld [vmem:[#allocation4 + $0xd8] sm:$0xff]
        %v2115 = vld [vmem:[#allocation4 + $0xe0] sm:$0xff]
        %v2116 = vld [vmem:[#allocation4 + $0xf0] sm:$0xff]
        %v2117 = vld [vmem:[#allocation4 + $0xf8] sm:$0xff]
        %v2118 = vld [vmem:[#allocation4 + $0x108] sm:$0xff]
        %v2119 = vld [vmem:[#allocation4 + $0x110] sm:$0xff]
        %v2120 = vld [vmem:[#allocation4 + $0x120] sm:$0xff]
        %v2121 = vld [vmem:[#allocation4 + $0x128] sm:$0xff]
        %v2122 = vld [vmem:[#allocation4 + $0x138] sm:$0xff]
        %v2123 = vld [vmem:[#allocation4 + $0x140] sm:$0xff]
        %v2124 = vld [vmem:[#allocation4 + $0x150] sm:$0xff]
        %v2125 = vld [vmem:[#allocation4 + $0x158] sm:$0xff]
        %v2126 = vld [vmem:[#allocation4 + $0x168] sm:$0xff]
        %v2127 = vld [vmem:[#allocation4 + $0x170] sm:$0xff]
        %v2128 = vpack.c.bf16 %v2097, %v2096
        %v2129 = vpack.c.bf16 %v2099, %v2098
        %v2130 = vpack.c.bf16 %v2101, %v2100
        %v2131 = vpack.c.bf16 %v2103, %v2102
        %v2132 = vpack.c.bf16 %v2105, %v2104
        %v2133 = vpack.c.bf16 %v2107, %v2106
        %v2134 = vpack.c.bf16 %v2109, %v2108
        %v2135 = vpack.c.bf16 %v2111, %v2110
        %v2136 = vpack.c.bf16 %v2113, %v2112
        %v2137 = vpack.c.bf16 %v2115, %v2114
        %v2138 = vpack.c.bf16 %v2117, %v2116
        %v2139 = vpack.c.bf16 %v2119, %v2118
        %v2140 = vpack.c.bf16 %v2121, %v2120
        %v2141 = vpack.c.bf16 %v2123, %v2122
        %v2142 = vpack.c.bf16 %v2125, %v2124
        %v2143 = vpack.c.bf16 %v2127, %v2126
        %2144 = vst.msk [vmem:[#allocation5] sm:$0xff] %vm2007, %v2128
        %2145 = vst.msk [vmem:[#allocation5 + $0x10] sm:$0xff] %vm2007, %v2129
        %2146 = vst.msk [vmem:[#allocation5 + $0x20] sm:$0xff] %vm2007, %v2130
        %2147 = vst.msk [vmem:[#allocation5 + $0x30] sm:$0xff] %vm2007, %v2131
        %2148 = vst.msk [vmem:[#allocation5 + $0x40] sm:$0xff] %vm2007, %v2132
        %2149 = vst.msk [vmem:[#allocation5 + $0x50] sm:$0xff] %vm2007, %v2133
        %2150 = vst.msk [vmem:[#allocation5 + $0x60] sm:$0xff] %vm2007, %v2134
        %2151 = vst.msk [vmem:[#allocation5 + $0x70] sm:$0xff] %vm2007, %v2135
        %2152 = vst.msk [vmem:[#allocation5 + $0x80] sm:$0xff] %vm2007, %v2136
        %2153 = vst.msk [vmem:[#allocation5 + $0x90] sm:$0xff] %vm2007, %v2137
        %2154 = vst.msk [vmem:[#allocation5 + $0xa0] sm:$0xff] %vm2007, %v2138
        %2155 = vst.msk [vmem:[#allocation5 + $0xb0] sm:$0xff] %vm2007, %v2139
        %2156 = vst.msk [vmem:[#allocation5 + $0xc0] sm:$0xff] %vm2007, %v2140
        %2157 = vst.msk [vmem:[#allocation5 + $0xd0] sm:$0xff] %vm2007, %v2141
        %2158 = vst.msk [vmem:[#allocation5 + $0xe0] sm:$0xff] %vm2007, %v2142
        %2159 = vst.msk [vmem:[#allocation5 + $0xf0] sm:$0xff] %vm2007, %v2143
        %v2160 = vld [vmem:[#allocation4 + $0x1] sm:$0xff]
        %v2161 = vld [vmem:[#allocation4 + $0x9] sm:$0xff]
        %v2162 = vld [vmem:[#allocation4 + $0x19] sm:$0xff]
        %v2163 = vld [vmem:[#allocation4 + $0x21] sm:$0xff]
        %v2164 = vld [vmem:[#allocation4 + $0x31] sm:$0xff]
        %v2165 = vld [vmem:[#allocation4 + $0x39] sm:$0xff]
        %v2166 = vld [vmem:[#allocation4 + $0x49] sm:$0xff]
        %v2167 = vld [vmem:[#allocation4 + $0x51] sm:$0xff]
        %v2168 = vld [vmem:[#allocation4 + $0x61] sm:$0xff]
        %v2169 = vld [vmem:[#allocation4 + $0x69] sm:$0xff]
        %v2170 = vld [vmem:[#allocation4 + $0x79] sm:$0xff]
        %v2171 = vld [vmem:[#allocation4 + $0x81] sm:$0xff]
        %v2172 = vld [vmem:[#allocation4 + $0x91] sm:$0xff]
        %v2173 = vld [vmem:[#allocation4 + $0x99] sm:$0xff]
        %v2174 = vld [vmem:[#allocation4 + $0xa9] sm:$0xff]
        %v2175 = vld [vmem:[#allocation4 + $0xb1] sm:$0xff]
        %v2176 = vld [vmem:[#allocation4 + $0xc1] sm:$0xff]
        %v2177 = vld [vmem:[#allocation4 + $0xc9] sm:$0xff]
        %v2178 = vld [vmem:[#allocation4 + $0xd9] sm:$0xff]
        %v2179 = vld [vmem:[#allocation4 + $0xe1] sm:$0xff]
        %v2180 = vld [vmem:[#allocation4 + $0xf1] sm:$0xff]
        %v2181 = vld [vmem:[#allocation4 + $0xf9] sm:$0xff]
        %v2182 = vld [vmem:[#allocation4 + $0x109] sm:$0xff]
        %v2183 = vld [vmem:[#allocation4 + $0x111] sm:$0xff]
        %v2184 = vld [vmem:[#allocation4 + $0x121] sm:$0xff]
        %v2185 = vld [vmem:[#allocation4 + $0x129] sm:$0xff]
        %v2186 = vld [vmem:[#allocation4 + $0x139] sm:$0xff]
        %v2187 = vld [vmem:[#allocation4 + $0x141] sm:$0xff]
        %v2188 = vld [vmem:[#allocation4 + $0x151] sm:$0xff]
        %v2189 = vld [vmem:[#allocation4 + $0x159] sm:$0xff]
        %v2190 = vld [vmem:[#allocation4 + $0x169] sm:$0xff]
        %v2191 = vld [vmem:[#allocation4 + $0x171] sm:$0xff]
        %v2192 = vpack.c.bf16 %v2161, %v2160
        %v2193 = vpack.c.bf16 %v2163, %v2162
        %v2194 = vpack.c.bf16 %v2165, %v2164
        %v2195 = vpack.c.bf16 %v2167, %v2166
        %v2196 = vpack.c.bf16 %v2169, %v2168
        %v2197 = vpack.c.bf16 %v2171, %v2170
        %v2198 = vpack.c.bf16 %v2173, %v2172
        %v2199 = vpack.c.bf16 %v2175, %v2174
        %v2200 = vpack.c.bf16 %v2177, %v2176
        %v2201 = vpack.c.bf16 %v2179, %v2178
        %v2202 = vpack.c.bf16 %v2181, %v2180
        %v2203 = vpack.c.bf16 %v2183, %v2182
        %v2204 = vpack.c.bf16 %v2185, %v2184
        %v2205 = vpack.c.bf16 %v2187, %v2186
        %v2206 = vpack.c.bf16 %v2189, %v2188
        %v2207 = vpack.c.bf16 %v2191, %v2190
        %2224 = vrot.lane.b32.xlu0 %v2192, 16
        %v2225 = vpop.permute.xlu0 %2224
        %2226 = vrot.lane.b32.xlu0 %v2193, 16
        %v2227 = vpop.permute.xlu0 %2226
        %2228 = vrot.lane.b32.xlu0 %v2194, 16
        %v2229 = vpop.permute.xlu0 %2228
        %2230 = vrot.lane.b32.xlu0 %v2195, 16
        %v2231 = vpop.permute.xlu0 %2230
        %2232 = vrot.lane.b32.xlu0 %v2196, 16
        %v2233 = vpop.permute.xlu0 %2232
        %2234 = vrot.lane.b32.xlu0 %v2197, 16
        %v2235 = vpop.permute.xlu0 %2234
        %2236 = vrot.lane.b32.xlu0 %v2198, 16
        %v2237 = vpop.permute.xlu0 %2236
        %2238 = vrot.lane.b32.xlu0 %v2199, 16
        %v2239 = vpop.permute.xlu0 %2238
        %2240 = vrot.lane.b32.xlu0 %v2200, 16
        %v2241 = vpop.permute.xlu0 %2240
        %2242 = vrot.lane.b32.xlu0 %v2201, 16
        %v2243 = vpop.permute.xlu0 %2242
        %2244 = vrot.lane.b32.xlu0 %v2202, 16
        %v2245 = vpop.permute.xlu0 %2244
        %2246 = vrot.lane.b32.xlu0 %v2203, 16
        %v2247 = vpop.permute.xlu0 %2246
        %2248 = vrot.lane.b32.xlu0 %v2204, 16
        %v2249 = vpop.permute.xlu0 %2248
        %2250 = vrot.lane.b32.xlu0 %v2205, 16
        %v2251 = vpop.permute.xlu0 %2250
        %2252 = vrot.lane.b32.xlu0 %v2206, 16
        %v2253 = vpop.permute.xlu0 %2252
        %2254 = vrot.lane.b32.xlu0 %v2207, 16
        %v2255 = vpop.permute.xlu0 %2254
        %vm2272 = vcmask 261248
        %2273 = vst.msk [vmem:[#allocation5] sm:$0xff] %vm2272, %v2225
        %2274 = vst.msk [vmem:[#allocation5 + $0x10] sm:$0xff] %vm2272, %v2227
        %2275 = vst.msk [vmem:[#allocation5 + $0x20] sm:$0xff] %vm2272, %v2229
        %2276 = vst.msk [vmem:[#allocation5 + $0x30] sm:$0xff] %vm2272, %v2231
        %2277 = vst.msk [vmem:[#allocation5 + $0x40] sm:$0xff] %vm2272, %v2233
        %2278 = vst.msk [vmem:[#allocation5 + $0x50] sm:$0xff] %vm2272, %v2235
        %2279 = vst.msk [vmem:[#allocation5 + $0x60] sm:$0xff] %vm2272, %v2237
        %2280 = vst.msk [vmem:[#allocation5 + $0x70] sm:$0xff] %vm2272, %v2239
        %2281 = vst.msk [vmem:[#allocation5 + $0x80] sm:$0xff] %vm2272, %v2241
        %2282 = vst.msk [vmem:[#allocation5 + $0x90] sm:$0xff] %vm2272, %v2243
        %2283 = vst.msk [vmem:[#allocation5 + $0xa0] sm:$0xff] %vm2272, %v2245
        %2284 = vst.msk [vmem:[#allocation5 + $0xb0] sm:$0xff] %vm2272, %v2247
        %2285 = vst.msk [vmem:[#allocation5 + $0xc0] sm:$0xff] %vm2272, %v2249
        %2286 = vst.msk [vmem:[#allocation5 + $0xd0] sm:$0xff] %vm2272, %v2251
        %2287 = vst.msk [vmem:[#allocation5 + $0xe0] sm:$0xff] %vm2272, %v2253
        %2288 = vst.msk [vmem:[#allocation5 + $0xf0] sm:$0xff] %vm2272, %v2255
        %v2289 = vld [vmem:[#allocation4 + $0x2] sm:$0xff]
        %v2290 = vld [vmem:[#allocation4 + $0xa] sm:$0xff]
        %v2291 = vld [vmem:[#allocation4 + $0x1a] sm:$0xff]
        %v2292 = vld [vmem:[#allocation4 + $0x22] sm:$0xff]
        %v2293 = vld [vmem:[#allocation4 + $0x32] sm:$0xff]
        %v2294 = vld [vmem:[#allocation4 + $0x3a] sm:$0xff]
        %v2295 = vld [vmem:[#allocation4 + $0x4a] sm:$0xff]
        %v2296 = vld [vmem:[#allocation4 + $0x52] sm:$0xff]
        %v2297 = vld [vmem:[#allocation4 + $0x62] sm:$0xff]
        %v2298 = vld [vmem:[#allocation4 + $0x6a] sm:$0xff]
        %v2299 = vld [vmem:[#allocation4 + $0x7a] sm:$0xff]
        %v2300 = vld [vmem:[#allocation4 + $0x82] sm:$0xff]
        %v2301 = vld [vmem:[#allocation4 + $0x92] sm:$0xff]
        %v2302 = vld [vmem:[#allocation4 + $0x9a] sm:$0xff]
        %v2303 = vld [vmem:[#allocation4 + $0xaa] sm:$0xff]
        %v2304 = vld [vmem:[#allocation4 + $0xb2] sm:$0xff]
        %v2305 = vld [vmem:[#allocation4 + $0xc2] sm:$0xff]
        %v2306 = vld [vmem:[#allocation4 + $0xca] sm:$0xff]
        %v2307 = vld [vmem:[#allocation4 + $0xda] sm:$0xff]
        %v2308 = vld [vmem:[#allocation4 + $0xe2] sm:$0xff]
        %v2309 = vld [vmem:[#allocation4 + $0xf2] sm:$0xff]
        %v2310 = vld [vmem:[#allocation4 + $0xfa] sm:$0xff]
        %v2311 = vld [vmem:[#allocation4 + $0x10a] sm:$0xff]
        %v2312 = vld [vmem:[#allocation4 + $0x112] sm:$0xff]
        %v2313 = vld [vmem:[#allocation4 + $0x122] sm:$0xff]
        %v2314 = vld [vmem:[#allocation4 + $0x12a] sm:$0xff]
        %v2315 = vld [vmem:[#allocation4 + $0x13a] sm:$0xff]
        %v2316 = vld [vmem:[#allocation4 + $0x142] sm:$0xff]
        %v2317 = vld [vmem:[#allocation4 + $0x152] sm:$0xff]
        %v2318 = vld [vmem:[#allocation4 + $0x15a] sm:$0xff]
        %v2319 = vld [vmem:[#allocation4 + $0x16a] sm:$0xff]
        %v2320 = vld [vmem:[#allocation4 + $0x172] sm:$0xff]
        %v2321 = vpack.c.bf16 %v2290, %v2289
        %v2322 = vpack.c.bf16 %v2292, %v2291
        %v2323 = vpack.c.bf16 %v2294, %v2293
        %v2324 = vpack.c.bf16 %v2296, %v2295
        %v2325 = vpack.c.bf16 %v2298, %v2297
        %v2326 = vpack.c.bf16 %v2300, %v2299
        %v2327 = vpack.c.bf16 %v2302, %v2301
        %v2328 = vpack.c.bf16 %v2304, %v2303
        %v2329 = vpack.c.bf16 %v2306, %v2305
        %v2330 = vpack.c.bf16 %v2308, %v2307
        %v2331 = vpack.c.bf16 %v2310, %v2309
        %v2332 = vpack.c.bf16 %v2312, %v2311
        %v2333 = vpack.c.bf16 %v2314, %v2313
        %v2334 = vpack.c.bf16 %v2316, %v2315
        %v2335 = vpack.c.bf16 %v2318, %v2317
        %v2336 = vpack.c.bf16 %v2320, %v2319
        %2353 = vrot.lane.b32.xlu0 %v2321, 32
        %v2354 = vpop.permute.xlu0 %2353
        %2355 = vrot.lane.b32.xlu0 %v2322, 32
        %v2356 = vpop.permute.xlu0 %2355
        %2357 = vrot.lane.b32.xlu0 %v2323, 32
        %v2358 = vpop.permute.xlu0 %2357
        %2359 = vrot.lane.b32.xlu0 %v2324, 32
        %v2360 = vpop.permute.xlu0 %2359
        %2361 = vrot.lane.b32.xlu0 %v2325, 32
        %v2362 = vpop.permute.xlu0 %2361
        %2363 = vrot.lane.b32.xlu0 %v2326, 32
        %v2364 = vpop.permute.xlu0 %2363
        %2365 = vrot.lane.b32.xlu0 %v2327, 32
        %v2366 = vpop.permute.xlu0 %2365
        %2367 = vrot.lane.b32.xlu0 %v2328, 32
        %v2368 = vpop.permute.xlu0 %2367
        %2369 = vrot.lane.b32.xlu0 %v2329, 32
        %v2370 = vpop.permute.xlu0 %2369
        %2371 = vrot.lane.b32.xlu0 %v2330, 32
        %v2372 = vpop.permute.xlu0 %2371
        %2373 = vrot.lane.b32.xlu0 %v2331, 32
        %v2374 = vpop.permute.xlu0 %2373
        %2375 = vrot.lane.b32.xlu0 %v2332, 32
        %v2376 = vpop.permute.xlu0 %2375
        %2377 = vrot.lane.b32.xlu0 %v2333, 32
        %v2378 = vpop.permute.xlu0 %2377
        %2379 = vrot.lane.b32.xlu0 %v2334, 32
        %v2380 = vpop.permute.xlu0 %2379
        %2381 = vrot.lane.b32.xlu0 %v2335, 32
        %v2382 = vpop.permute.xlu0 %2381
        %2383 = vrot.lane.b32.xlu0 %v2336, 32
        %v2384 = vpop.permute.xlu0 %2383
        %vm2401 = vcmask 392448
        %2402 = vst.msk [vmem:[#allocation5] sm:$0xff] %vm2401, %v2354
        %2403 = vst.msk [vmem:[#allocation5 + $0x10] sm:$0xff] %vm2401, %v2356
        %2404 = vst.msk [vmem:[#allocation5 + $0x20] sm:$0xff] %vm2401, %v2358
        %2405 = vst.msk [vmem:[#allocation5 + $0x30] sm:$0xff] %vm2401, %v2360
        %2406 = vst.msk [vmem:[#allocation5 + $0x40] sm:$0xff] %vm2401, %v2362
        %2407 = vst.msk [vmem:[#allocation5 + $0x50] sm:$0xff] %vm2401, %v2364
        %2408 = vst.msk [vmem:[#allocation5 + $0x60] sm:$0xff] %vm2401, %v2366
        %2409 = vst.msk [vmem:[#allocation5 + $0x70] sm:$0xff] %vm2401, %v2368
        %2410 = vst.msk [vmem:[#allocation5 + $0x80] sm:$0xff] %vm2401, %v2370
        %2411 = vst.msk [vmem:[#allocation5 + $0x90] sm:$0xff] %vm2401, %v2372
        %2412 = vst.msk [vmem:[#allocation5 + $0xa0] sm:$0xff] %vm2401, %v2374
        %2413 = vst.msk [vmem:[#allocation5 + $0xb0] sm:$0xff] %vm2401, %v2376
        %2414 = vst.msk [vmem:[#allocation5 + $0xc0] sm:$0xff] %vm2401, %v2378
        %2415 = vst.msk [vmem:[#allocation5 + $0xd0] sm:$0xff] %vm2401, %v2380
        %2416 = vst.msk [vmem:[#allocation5 + $0xe0] sm:$0xff] %vm2401, %v2382
        %2417 = vst.msk [vmem:[#allocation5 + $0xf0] sm:$0xff] %vm2401, %v2384
        %v2418 = vld [vmem:[%s2063] sm:$0xff]
        %v2419 = vld [vmem:[%s2063 + $0x8] sm:$0xff]
        %v2420 = vld [vmem:[%s2063 + $0x18] sm:$0xff]
        %v2421 = vld [vmem:[%s2063 + $0x20] sm:$0xff]
        %v2422 = vld [vmem:[%s2063 + $0x30] sm:$0xff]
        %v2423 = vld [vmem:[%s2063 + $0x38] sm:$0xff]
        %v2424 = vld [vmem:[%s2063 + $0x48] sm:$0xff]
        %v2425 = vld [vmem:[%s2063 + $0x50] sm:$0xff]
        %v2426 = vld [vmem:[%s2063 + $0x60] sm:$0xff]
        %v2427 = vld [vmem:[%s2063 + $0x68] sm:$0xff]
        %v2428 = vld [vmem:[%s2063 + $0x78] sm:$0xff]
        %v2429 = vld [vmem:[%s2063 + $0x80] sm:$0xff]
        %v2430 = vld [vmem:[%s2063 + $0x90] sm:$0xff]
        %v2431 = vld [vmem:[%s2063 + $0x98] sm:$0xff]
        %v2432 = vld [vmem:[%s2063 + $0xa8] sm:$0xff]
        %v2433 = vld [vmem:[%s2063 + $0xb0] sm:$0xff]
        %v2434 = vld [vmem:[%s2063 + $0xc0] sm:$0xff]
        %v2435 = vld [vmem:[%s2063 + $0xc8] sm:$0xff]
        %v2436 = vld [vmem:[%s2063 + $0xd8] sm:$0xff]
        %v2437 = vld [vmem:[%s2063 + $0xe0] sm:$0xff]
        %v2438 = vld [vmem:[%s2063 + $0xf0] sm:$0xff]
        %v2439 = vld [vmem:[%s2063 + $0xf8] sm:$0xff]
        %v2440 = vld [vmem:[%s2063 + $0x108] sm:$0xff]
        %v2441 = vld [vmem:[%s2063 + $0x110] sm:$0xff]
        %v2442 = vld [vmem:[%s2063 + $0x120] sm:$0xff]
        %v2443 = vld [vmem:[%s2063 + $0x128] sm:$0xff]
        %v2444 = vld [vmem:[%s2063 + $0x138] sm:$0xff]
        %v2445 = vld [vmem:[%s2063 + $0x140] sm:$0xff]
        %v2446 = vld [vmem:[%s2063 + $0x150] sm:$0xff]
        %v2447 = vld [vmem:[%s2063 + $0x158] sm:$0xff]
        %v2448 = vld [vmem:[%s2063 + $0x168] sm:$0xff]
        %v2449 = vld [vmem:[%s2063 + $0x170] sm:$0xff]
        %v2450 = vpack.c.bf16 %v2419, %v2418
        %v2451 = vpack.c.bf16 %v2421, %v2420
        %v2452 = vpack.c.bf16 %v2423, %v2422
        %v2453 = vpack.c.bf16 %v2425, %v2424
        %v2454 = vpack.c.bf16 %v2427, %v2426
        %v2455 = vpack.c.bf16 %v2429, %v2428
        %v2456 = vpack.c.bf16 %v2431, %v2430
        %v2457 = vpack.c.bf16 %v2433, %v2432
        %v2458 = vpack.c.bf16 %v2435, %v2434
        %v2459 = vpack.c.bf16 %v2437, %v2436
        %v2460 = vpack.c.bf16 %v2439, %v2438
        %v2461 = vpack.c.bf16 %v2441, %v2440
        %v2462 = vpack.c.bf16 %v2443, %v2442
        %v2463 = vpack.c.bf16 %v2445, %v2444
        %v2464 = vpack.c.bf16 %v2447, %v2446
        %v2465 = vpack.c.bf16 %v2449, %v2448
        %2482 = vrot.lane.b32.xlu0 %v2450, 48
        %v2483 = vpop.permute.xlu0 %2482
        %2484 = vrot.lane.b32.xlu0 %v2451, 48
        %v2485 = vpop.permute.xlu0 %2484
        %2486 = vrot.lane.b32.xlu0 %v2452, 48
        %v2487 = vpop.permute.xlu0 %2486
        %2488 = vrot.lane.b32.xlu0 %v2453, 48
        %v2489 = vpop.permute.xlu0 %2488
        %2490 = vrot.lane.b32.xlu0 %v2454, 48
        %v2491 = vpop.permute.xlu0 %2490
        %2492 = vrot.lane.b32.xlu0 %v2455, 48
        %v2493 = vpop.permute.xlu0 %2492
        %2494 = vrot.lane.b32.xlu0 %v2456, 48
        %v2495 = vpop.permute.xlu0 %2494
        %2496 = vrot.lane.b32.xlu0 %v2457, 48
        %v2497 = vpop.permute.xlu0 %2496
        %2498 = vrot.lane.b32.xlu0 %v2458, 48
        %v2499 = vpop.permute.xlu0 %2498
        %2500 = vrot.lane.b32.xlu0 %v2459, 48
        %v2501 = vpop.permute.xlu0 %2500
        %2502 = vrot.lane.b32.xlu0 %v2460, 48
        %v2503 = vpop.permute.xlu0 %2502
        %2504 = vrot.lane.b32.xlu0 %v2461, 48
        %v2505 = vpop.permute.xlu0 %2504
        %2506 = vrot.lane.b32.xlu0 %v2462, 48
        %v2507 = vpop.permute.xlu0 %2506
        %2508 = vrot.lane.b32.xlu0 %v2463, 48
        %v2509 = vpop.permute.xlu0 %2508
        %2510 = vrot.lane.b32.xlu0 %v2464, 48
        %v2511 = vpop.permute.xlu0 %2510
        %2512 = vrot.lane.b32.xlu0 %v2465, 48
        %v2513 = vpop.permute.xlu0 %2512
        %vm2530 = vcmask 523648
        %2531 = vst.msk [vmem:[#allocation5] sm:$0xff] %vm2530, %v2483
        %2532 = vst.msk [vmem:[#allocation5 + $0x10] sm:$0xff] %vm2530, %v2485
        %2533 = vst.msk [vmem:[#allocation5 + $0x20] sm:$0xff] %vm2530, %v2487
        %2534 = vst.msk [vmem:[#allocation5 + $0x30] sm:$0xff] %vm2530, %v2489
        %2535 = vst.msk [vmem:[#allocation5 + $0x40] sm:$0xff] %vm2530, %v2491
        %2536 = vst.msk [vmem:[#allocation5 + $0x50] sm:$0xff] %vm2530, %v2493
        %2537 = vst.msk [vmem:[#allocation5 + $0x60] sm:$0xff] %vm2530, %v2495
        %2538 = vst.msk [vmem:[#allocation5 + $0x70] sm:$0xff] %vm2530, %v2497
        %2539 = vst.msk [vmem:[#allocation5 + $0x80] sm:$0xff] %vm2530, %v2499
        %2540 = vst.msk [vmem:[#allocation5 + $0x90] sm:$0xff] %vm2530, %v2501
        %2541 = vst.msk [vmem:[#allocation5 + $0xa0] sm:$0xff] %vm2530, %v2503
        %2542 = vst.msk [vmem:[#allocation5 + $0xb0] sm:$0xff] %vm2530, %v2505
        %2543 = vst.msk [vmem:[#allocation5 + $0xc0] sm:$0xff] %vm2530, %v2507
        %2544 = vst.msk [vmem:[#allocation5 + $0xd0] sm:$0xff] %vm2530, %v2509
        %2545 = vst.msk [vmem:[#allocation5 + $0xe0] sm:$0xff] %vm2530, %v2511
        %2546 = vst.msk [vmem:[#allocation5 + $0xf0] sm:$0xff] %vm2530, %v2513
        %v2547 = vld [vmem:[%s2063 + $0x1] sm:$0xff]
        %v2548 = vld [vmem:[%s2063 + $0x9] sm:$0xff]
        %v2549 = vld [vmem:[%s2063 + $0x19] sm:$0xff]
        %v2550 = vld [vmem:[%s2063 + $0x21] sm:$0xff]
        %v2551 = vld [vmem:[%s2063 + $0x31] sm:$0xff]
        %v2552 = vld [vmem:[%s2063 + $0x39] sm:$0xff]
        %v2553 = vld [vmem:[%s2063 + $0x49] sm:$0xff]
        %v2554 = vld [vmem:[%s2063 + $0x51] sm:$0xff]
        %v2555 = vld [vmem:[%s2063 + $0x61] sm:$0xff]
        %v2556 = vld [vmem:[%s2063 + $0x69] sm:$0xff]
        %v2557 = vld [vmem:[%s2063 + $0x79] sm:$0xff]
        %v2558 = vld [vmem:[%s2063 + $0x81] sm:$0xff]
        %v2559 = vld [vmem:[%s2063 + $0x91] sm:$0xff]
        %v2560 = vld [vmem:[%s2063 + $0x99] sm:$0xff]
        %v2561 = vld [vmem:[%s2063 + $0xa9] sm:$0xff]
        %v2562 = vld [vmem:[%s2063 + $0xb1] sm:$0xff]
        %v2563 = vld [vmem:[%s2063 + $0xc1] sm:$0xff]
        %v2564 = vld [vmem:[%s2063 + $0xc9] sm:$0xff]
        %v2565 = vld [vmem:[%s2063 + $0xd9] sm:$0xff]
        %v2566 = vld [vmem:[%s2063 + $0xe1] sm:$0xff]
        %v2567 = vld [vmem:[%s2063 + $0xf1] sm:$0xff]
        %v2568 = vld [vmem:[%s2063 + $0xf9] sm:$0xff]
        %v2569 = vld [vmem:[%s2063 + $0x109] sm:$0xff]
        %v2570 = vld [vmem:[%s2063 + $0x111] sm:$0xff]
        %v2571 = vld [vmem:[%s2063 + $0x121] sm:$0xff]
        %v2572 = vld [vmem:[%s2063 + $0x129] sm:$0xff]
        %v2573 = vld [vmem:[%s2063 + $0x139] sm:$0xff]
        %v2574 = vld [vmem:[%s2063 + $0x141] sm:$0xff]
        %v2575 = vld [vmem:[%s2063 + $0x151] sm:$0xff]
        %v2576 = vld [vmem:[%s2063 + $0x159] sm:$0xff]
        %v2577 = vld [vmem:[%s2063 + $0x169] sm:$0xff]
        %v2578 = vld [vmem:[%s2063 + $0x171] sm:$0xff]
        %v2579 = vpack.c.bf16 %v2548, %v2547
        %v2580 = vpack.c.bf16 %v2550, %v2549
        %v2581 = vpack.c.bf16 %v2552, %v2551
        %v2582 = vpack.c.bf16 %v2554, %v2553
        %v2583 = vpack.c.bf16 %v2556, %v2555
        %v2584 = vpack.c.bf16 %v2558, %v2557
        %v2585 = vpack.c.bf16 %v2560, %v2559
        %v2586 = vpack.c.bf16 %v2562, %v2561
        %v2587 = vpack.c.bf16 %v2564, %v2563
        %v2588 = vpack.c.bf16 %v2566, %v2565
        %v2589 = vpack.c.bf16 %v2568, %v2567
        %v2590 = vpack.c.bf16 %v2570, %v2569
        %v2591 = vpack.c.bf16 %v2572, %v2571
        %v2592 = vpack.c.bf16 %v2574, %v2573
        %v2593 = vpack.c.bf16 %v2576, %v2575
        %v2594 = vpack.c.bf16 %v2578, %v2577
        %2611 = vrot.lane.b32.xlu0 %v2579, 64
        %v2612 = vpop.permute.xlu0 %2611
        %2613 = vrot.lane.b32.xlu0 %v2580, 64
        %v2614 = vpop.permute.xlu0 %2613
        %2615 = vrot.lane.b32.xlu0 %v2581, 64
        %v2616 = vpop.permute.xlu0 %2615
        %2617 = vrot.lane.b32.xlu0 %v2582, 64
        %v2618 = vpop.permute.xlu0 %2617
        %2619 = vrot.lane.b32.xlu0 %v2583, 64
        %v2620 = vpop.permute.xlu0 %2619
        %2621 = vrot.lane.b32.xlu0 %v2584, 64
        %v2622 = vpop.permute.xlu0 %2621
        %2623 = vrot.lane.b32.xlu0 %v2585, 64
        %v2624 = vpop.permute.xlu0 %2623
        %2625 = vrot.lane.b32.xlu0 %v2586, 64
        %v2626 = vpop.permute.xlu0 %2625
        %2627 = vrot.lane.b32.xlu0 %v2587, 64
        %v2628 = vpop.permute.xlu0 %2627
        %2629 = vrot.lane.b32.xlu0 %v2588, 64
        %v2630 = vpop.permute.xlu0 %2629
        %2631 = vrot.lane.b32.xlu0 %v2589, 64
        %v2632 = vpop.permute.xlu0 %2631
        %2633 = vrot.lane.b32.xlu0 %v2590, 64
        %v2634 = vpop.permute.xlu0 %2633
        %2635 = vrot.lane.b32.xlu0 %v2591, 64
        %v2636 = vpop.permute.xlu0 %2635
        %2637 = vrot.lane.b32.xlu0 %v2592, 64
        %v2638 = vpop.permute.xlu0 %2637
        %2639 = vrot.lane.b32.xlu0 %v2593, 64
        %v2640 = vpop.permute.xlu0 %2639
        %2641 = vrot.lane.b32.xlu0 %v2594, 64
        %v2642 = vpop.permute.xlu0 %2641
        %vm2659 = vcmask 654848
        %2660 = vst.msk [vmem:[#allocation5] sm:$0xff] %vm2659, %v2612
        %2661 = vst.msk [vmem:[#allocation5 + $0x10] sm:$0xff] %vm2659, %v2614
        %2662 = vst.msk [vmem:[#allocation5 + $0x20] sm:$0xff] %vm2659, %v2616
        %2663 = vst.msk [vmem:[#allocation5 + $0x30] sm:$0xff] %vm2659, %v2618
        %2664 = vst.msk [vmem:[#allocation5 + $0x40] sm:$0xff] %vm2659, %v2620
        %2665 = vst.msk [vmem:[#allocation5 + $0x50] sm:$0xff] %vm2659, %v2622
        %2666 = vst.msk [vmem:[#allocation5 + $0x60] sm:$0xff] %vm2659, %v2624
        %2667 = vst.msk [vmem:[#allocation5 + $0x70] sm:$0xff] %vm2659, %v2626
        %2668 = vst.msk [vmem:[#allocation5 + $0x80] sm:$0xff] %vm2659, %v2628
        %2669 = vst.msk [vmem:[#allocation5 + $0x90] sm:$0xff] %vm2659, %v2630
        %2670 = vst.msk [vmem:[#allocation5 + $0xa0] sm:$0xff] %vm2659, %v2632
        %2671 = vst.msk [vmem:[#allocation5 + $0xb0] sm:$0xff] %vm2659, %v2634
        %2672 = vst.msk [vmem:[#allocation5 + $0xc0] sm:$0xff] %vm2659, %v2636
        %2673 = vst.msk [vmem:[#allocation5 + $0xd0] sm:$0xff] %vm2659, %v2638
        %2674 = vst.msk [vmem:[#allocation5 + $0xe0] sm:$0xff] %vm2659, %v2640
        %2675 = vst.msk [vmem:[#allocation5 + $0xf0] sm:$0xff] %vm2659, %v2642
        %v2676 = vld [vmem:[%s2063 + $0x2] sm:$0xff]
        %v2677 = vld [vmem:[%s2063 + $0xa] sm:$0xff]
        %v2678 = vld [vmem:[%s2063 + $0x1a] sm:$0xff]
        %v2679 = vld [vmem:[%s2063 + $0x22] sm:$0xff]
        %v2680 = vld [vmem:[%s2063 + $0x32] sm:$0xff]
        %v2681 = vld [vmem:[%s2063 + $0x3a] sm:$0xff]
        %v2682 = vld [vmem:[%s2063 + $0x4a] sm:$0xff]
        %v2683 = vld [vmem:[%s2063 + $0x52] sm:$0xff]
        %v2684 = vld [vmem:[%s2063 + $0x62] sm:$0xff]
        %v2685 = vld [vmem:[%s2063 + $0x6a] sm:$0xff]
        %v2686 = vld [vmem:[%s2063 + $0x7a] sm:$0xff]
        %v2687 = vld [vmem:[%s2063 + $0x82] sm:$0xff]
        %v2688 = vld [vmem:[%s2063 + $0x92] sm:$0xff]
        %v2689 = vld [vmem:[%s2063 + $0x9a] sm:$0xff]
        %v2690 = vld [vmem:[%s2063 + $0xaa] sm:$0xff]
        %v2691 = vld [vmem:[%s2063 + $0xb2] sm:$0xff]
        %v2692 = vld [vmem:[%s2063 + $0xc2] sm:$0xff]
        %v2693 = vld [vmem:[%s2063 + $0xca] sm:$0xff]
        %v2694 = vld [vmem:[%s2063 + $0xda] sm:$0xff]
        %v2695 = vld [vmem:[%s2063 + $0xe2] sm:$0xff]
        %v2696 = vld [vmem:[%s2063 + $0xf2] sm:$0xff]
        %v2697 = vld [vmem:[%s2063 + $0xfa] sm:$0xff]
        %v2698 = vld [vmem:[%s2063 + $0x10a] sm:$0xff]
        %v2699 = vld [vmem:[%s2063 + $0x112] sm:$0xff]
        %v2700 = vld [vmem:[%s2063 + $0x122] sm:$0xff]
        %v2701 = vld [vmem:[%s2063 + $0x12a] sm:$0xff]
        %v2702 = vld [vmem:[%s2063 + $0x13a] sm:$0xff]
        %v2703 = vld [vmem:[%s2063 + $0x142] sm:$0xff]
        %v2704 = vld [vmem:[%s2063 + $0x152] sm:$0xff]
        %v2705 = vld [vmem:[%s2063 + $0x15a] sm:$0xff]
        %v2706 = vld [vmem:[%s2063 + $0x16a] sm:$0xff]
        %v2707 = vld [vmem:[%s2063 + $0x172] sm:$0xff]
        %v2708 = vpack.c.bf16 %v2677, %v2676
        %v2709 = vpack.c.bf16 %v2679, %v2678
        %v2710 = vpack.c.bf16 %v2681, %v2680
        %v2711 = vpack.c.bf16 %v2683, %v2682
        %v2712 = vpack.c.bf16 %v2685, %v2684
        %v2713 = vpack.c.bf16 %v2687, %v2686
        %v2714 = vpack.c.bf16 %v2689, %v2688
        %v2715 = vpack.c.bf16 %v2691, %v2690
        %v2716 = vpack.c.bf16 %v2693, %v2692
        %v2717 = vpack.c.bf16 %v2695, %v2694
        %v2718 = vpack.c.bf16 %v2697, %v2696
        %v2719 = vpack.c.bf16 %v2699, %v2698
        %v2720 = vpack.c.bf16 %v2701, %v2700
        %v2721 = vpack.c.bf16 %v2703, %v2702
        %v2722 = vpack.c.bf16 %v2705, %v2704
        %v2723 = vpack.c.bf16 %v2707, %v2706
        %2740 = vrot.lane.b32.xlu0 %v2708, 80
        %v2741 = vpop.permute.xlu0 %2740
        %2742 = vrot.lane.b32.xlu0 %v2709, 80
        %v2743 = vpop.permute.xlu0 %2742
        %2744 = vrot.lane.b32.xlu0 %v2710, 80
        %v2745 = vpop.permute.xlu0 %2744
        %2746 = vrot.lane.b32.xlu0 %v2711, 80
        %v2747 = vpop.permute.xlu0 %2746
        %2748 = vrot.lane.b32.xlu0 %v2712, 80
        %v2749 = vpop.permute.xlu0 %2748
        %2750 = vrot.lane.b32.xlu0 %v2713, 80
        %v2751 = vpop.permute.xlu0 %2750
        %2752 = vrot.lane.b32.xlu0 %v2714, 80
        %v2753 = vpop.permute.xlu0 %2752
        %2754 = vrot.lane.b32.xlu0 %v2715, 80
        %v2755 = vpop.permute.xlu0 %2754
        %2756 = vrot.lane.b32.xlu0 %v2716, 80
        %v2757 = vpop.permute.xlu0 %2756
        %2758 = vrot.lane.b32.xlu0 %v2717, 80
        %v2759 = vpop.permute.xlu0 %2758
        %2760 = vrot.lane.b32.xlu0 %v2718, 80
        %v2761 = vpop.permute.xlu0 %2760
        %2762 = vrot.lane.b32.xlu0 %v2719, 80
        %v2763 = vpop.permute.xlu0 %2762
        %2764 = vrot.lane.b32.xlu0 %v2720, 80
        %v2765 = vpop.permute.xlu0 %2764
        %2766 = vrot.lane.b32.xlu0 %v2721, 80
        %v2767 = vpop.permute.xlu0 %2766
        %2768 = vrot.lane.b32.xlu0 %v2722, 80
        %v2769 = vpop.permute.xlu0 %2768
        %2770 = vrot.lane.b32.xlu0 %v2723, 80
        %v2771 = vpop.permute.xlu0 %2770
        %vm2788 = vcmask 786048
        %2789 = vst.msk [vmem:[#allocation5] sm:$0xff] %vm2788, %v2741
        %2790 = vst.msk [vmem:[#allocation5 + $0x10] sm:$0xff] %vm2788, %v2743
        %2791 = vst.msk [vmem:[#allocation5 + $0x20] sm:$0xff] %vm2788, %v2745
        %2792 = vst.msk [vmem:[#allocation5 + $0x30] sm:$0xff] %vm2788, %v2747
        %2793 = vst.msk [vmem:[#allocation5 + $0x40] sm:$0xff] %vm2788, %v2749
        %2794 = vst.msk [vmem:[#allocation5 + $0x50] sm:$0xff] %vm2788, %v2751
        %2795 = vst.msk [vmem:[#allocation5 + $0x60] sm:$0xff] %vm2788, %v2753
        %2796 = vst.msk [vmem:[#allocation5 + $0x70] sm:$0xff] %vm2788, %v2755
        %2797 = vst.msk [vmem:[#allocation5 + $0x80] sm:$0xff] %vm2788, %v2757
        %2798 = vst.msk [vmem:[#allocation5 + $0x90] sm:$0xff] %vm2788, %v2759
        %2799 = vst.msk [vmem:[#allocation5 + $0xa0] sm:$0xff] %vm2788, %v2761
        %2800 = vst.msk [vmem:[#allocation5 + $0xb0] sm:$0xff] %vm2788, %v2763
        %2801 = vst.msk [vmem:[#allocation5 + $0xc0] sm:$0xff] %vm2788, %v2765
        %2802 = vst.msk [vmem:[#allocation5 + $0xd0] sm:$0xff] %vm2788, %v2767
        %2803 = vst.msk [vmem:[#allocation5 + $0xe0] sm:$0xff] %vm2788, %v2769
        %2804 = vst.msk [vmem:[#allocation5 + $0xf0] sm:$0xff] %vm2788, %v2771
        %s2805 = scalar_lea.vmem [#allocation4], 48
        %v2806 = vld [vmem:[%s2805] sm:$0xff]
        %v2807 = vld [vmem:[%s2805 + $0x8] sm:$0xff]
        %v2808 = vld [vmem:[%s2805 + $0x18] sm:$0xff]
        %v2809 = vld [vmem:[%s2805 + $0x20] sm:$0xff]
        %v2810 = vld [vmem:[%s2805 + $0x30] sm:$0xff]
        %v2811 = vld [vmem:[%s2805 + $0x38] sm:$0xff]
        %v2812 = vld [vmem:[%s2805 + $0x48] sm:$0xff]
        %v2813 = vld [vmem:[%s2805 + $0x50] sm:$0xff]
        %v2814 = vld [vmem:[%s2805 + $0x60] sm:$0xff]
        %v2815 = vld [vmem:[%s2805 + $0x68] sm:$0xff]
        %v2816 = vld [vmem:[%s2805 + $0x78] sm:$0xff]
        %v2817 = vld [vmem:[%s2805 + $0x80] sm:$0xff]
        %v2818 = vld [vmem:[%s2805 + $0x90] sm:$0xff]
        %v2819 = vld [vmem:[%s2805 + $0x98] sm:$0xff]
        %v2820 = vld [vmem:[%s2805 + $0xa8] sm:$0xff]
        %v2821 = vld [vmem:[%s2805 + $0xb0] sm:$0xff]
        %v2822 = vld [vmem:[%s2805 + $0xc0] sm:$0xff]
        %v2823 = vld [vmem:[%s2805 + $0xc8] sm:$0xff]
        %v2824 = vld [vmem:[%s2805 + $0xd8] sm:$0xff]
        %v2825 = vld [vmem:[%s2805 + $0xe0] sm:$0xff]
        %v2826 = vld [vmem:[%s2805 + $0xf0] sm:$0xff]
        %v2827 = vld [vmem:[%s2805 + $0xf8] sm:$0xff]
        %v2828 = vld [vmem:[%s2805 + $0x108] sm:$0xff]
        %v2829 = vld [vmem:[%s2805 + $0x110] sm:$0xff]
        %v2830 = vld [vmem:[%s2805 + $0x120] sm:$0xff]
        %v2831 = vld [vmem:[%s2805 + $0x128] sm:$0xff]
        %v2832 = vld [vmem:[%s2805 + $0x138] sm:$0xff]
        %v2833 = vld [vmem:[%s2805 + $0x140] sm:$0xff]
        %v2834 = vld [vmem:[%s2805 + $0x150] sm:$0xff]
        %v2835 = vld [vmem:[%s2805 + $0x158] sm:$0xff]
        %v2836 = vld [vmem:[%s2805 + $0x168] sm:$0xff]
        %v2837 = vld [vmem:[%s2805 + $0x170] sm:$0xff]
        %v2838 = vpack.c.bf16 %v2807, %v2806
        %v2839 = vpack.c.bf16 %v2809, %v2808
        %v2840 = vpack.c.bf16 %v2811, %v2810
        %v2841 = vpack.c.bf16 %v2813, %v2812
        %v2842 = vpack.c.bf16 %v2815, %v2814
        %v2843 = vpack.c.bf16 %v2817, %v2816
        %v2844 = vpack.c.bf16 %v2819, %v2818
        %v2845 = vpack.c.bf16 %v2821, %v2820
        %v2846 = vpack.c.bf16 %v2823, %v2822
        %v2847 = vpack.c.bf16 %v2825, %v2824
        %v2848 = vpack.c.bf16 %v2827, %v2826
        %v2849 = vpack.c.bf16 %v2829, %v2828
        %v2850 = vpack.c.bf16 %v2831, %v2830
        %v2851 = vpack.c.bf16 %v2833, %v2832
        %v2852 = vpack.c.bf16 %v2835, %v2834
        %v2853 = vpack.c.bf16 %v2837, %v2836
        %2870 = vrot.lane.b32.xlu0 %v2838, 96
        %v2871 = vpop.permute.xlu0 %2870
        %2872 = vrot.lane.b32.xlu0 %v2839, 96
        %v2873 = vpop.permute.xlu0 %2872
        %2874 = vrot.lane.b32.xlu0 %v2840, 96
        %v2875 = vpop.permute.xlu0 %2874
        %2876 = vrot.lane.b32.xlu0 %v2841, 96
        %v2877 = vpop.permute.xlu0 %2876
        %2878 = vrot.lane.b32.xlu0 %v2842, 96
        %v2879 = vpop.permute.xlu0 %2878
        %2880 = vrot.lane.b32.xlu0 %v2843, 96
        %v2881 = vpop.permute.xlu0 %2880
        %2882 = vrot.lane.b32.xlu0 %v2844, 96
        %v2883 = vpop.permute.xlu0 %2882
        %2884 = vrot.lane.b32.xlu0 %v2845, 96
        %v2885 = vpop.permute.xlu0 %2884
        %2886 = vrot.lane.b32.xlu0 %v2846, 96
        %v2887 = vpop.permute.xlu0 %2886
        %2888 = vrot.lane.b32.xlu0 %v2847, 96
        %v2889 = vpop.permute.xlu0 %2888
        %2890 = vrot.lane.b32.xlu0 %v2848, 96
        %v2891 = vpop.permute.xlu0 %2890
        %2892 = vrot.lane.b32.xlu0 %v2849, 96
        %v2893 = vpop.permute.xlu0 %2892
        %2894 = vrot.lane.b32.xlu0 %v2850, 96
        %v2895 = vpop.permute.xlu0 %2894
        %2896 = vrot.lane.b32.xlu0 %v2851, 96
        %v2897 = vpop.permute.xlu0 %2896
        %2898 = vrot.lane.b32.xlu0 %v2852, 96
        %v2899 = vpop.permute.xlu0 %2898
        %2900 = vrot.lane.b32.xlu0 %v2853, 96
        %v2901 = vpop.permute.xlu0 %2900
        %vm2918 = vcmask 917248
        %2919 = vst.msk [vmem:[#allocation5] sm:$0xff] %vm2918, %v2871
        %2920 = vst.msk [vmem:[#allocation5 + $0x10] sm:$0xff] %vm2918, %v2873
        %2921 = vst.msk [vmem:[#allocation5 + $0x20] sm:$0xff] %vm2918, %v2875
        %2922 = vst.msk [vmem:[#allocation5 + $0x30] sm:$0xff] %vm2918, %v2877
        %2923 = vst.msk [vmem:[#allocation5 + $0x40] sm:$0xff] %vm2918, %v2879
        %2924 = vst.msk [vmem:[#allocation5 + $0x50] sm:$0xff] %vm2918, %v2881
        %2925 = vst.msk [vmem:[#allocation5 + $0x60] sm:$0xff] %vm2918, %v2883
        %2926 = vst.msk [vmem:[#allocation5 + $0x70] sm:$0xff] %vm2918, %v2885
        %2927 = vst.msk [vmem:[#allocation5 + $0x80] sm:$0xff] %vm2918, %v2887
        %2928 = vst.msk [vmem:[#allocation5 + $0x90] sm:$0xff] %vm2918, %v2889
        %2929 = vst.msk [vmem:[#allocation5 + $0xa0] sm:$0xff] %vm2918, %v2891
        %2930 = vst.msk [vmem:[#allocation5 + $0xb0] sm:$0xff] %vm2918, %v2893
        %2931 = vst.msk [vmem:[#allocation5 + $0xc0] sm:$0xff] %vm2918, %v2895
        %2932 = vst.msk [vmem:[#allocation5 + $0xd0] sm:$0xff] %vm2918, %v2897
        %2933 = vst.msk [vmem:[#allocation5 + $0xe0] sm:$0xff] %vm2918, %v2899
        %2934 = vst.msk [vmem:[#allocation5 + $0xf0] sm:$0xff] %vm2918, %v2901
        %v2935 = vld [vmem:[%s2805 + $0x1] sm:$0xff]
        %v2936 = vld [vmem:[%s2805 + $0x9] sm:$0xff]
        %v2937 = vld [vmem:[%s2805 + $0x19] sm:$0xff]
        %v2938 = vld [vmem:[%s2805 + $0x21] sm:$0xff]
        %v2939 = vld [vmem:[%s2805 + $0x31] sm:$0xff]
        %v2940 = vld [vmem:[%s2805 + $0x39] sm:$0xff]
        %v2941 = vld [vmem:[%s2805 + $0x49] sm:$0xff]
        %v2942 = vld [vmem:[%s2805 + $0x51] sm:$0xff]
        %v2943 = vld [vmem:[%s2805 + $0x61] sm:$0xff]
        %v2944 = vld [vmem:[%s2805 + $0x69] sm:$0xff]
        %v2945 = vld [vmem:[%s2805 + $0x79] sm:$0xff]
        %v2946 = vld [vmem:[%s2805 + $0x81] sm:$0xff]
        %v2947 = vld [vmem:[%s2805 + $0x91] sm:$0xff]
        %v2948 = vld [vmem:[%s2805 + $0x99] sm:$0xff]
        %v2949 = vld [vmem:[%s2805 + $0xa9] sm:$0xff]
        %v2950 = vld [vmem:[%s2805 + $0xb1] sm:$0xff]
        %v2951 = vld [vmem:[%s2805 + $0xc1] sm:$0xff]
        %v2952 = vld [vmem:[%s2805 + $0xc9] sm:$0xff]
        %v2953 = vld [vmem:[%s2805 + $0xd9] sm:$0xff]
        %v2954 = vld [vmem:[%s2805 + $0xe1] sm:$0xff]
        %v2955 = vld [vmem:[%s2805 + $0xf1] sm:$0xff]
        %v2956 = vld [vmem:[%s2805 + $0xf9] sm:$0xff]
        %v2957 = vld [vmem:[%s2805 + $0x109] sm:$0xff]
        %v2958 = vld [vmem:[%s2805 + $0x111] sm:$0xff]
        %v2959 = vld [vmem:[%s2805 + $0x121] sm:$0xff]
        %v2960 = vld [vmem:[%s2805 + $0x129] sm:$0xff]
        %v2961 = vld [vmem:[%s2805 + $0x139] sm:$0xff]
        %v2962 = vld [vmem:[%s2805 + $0x141] sm:$0xff]
        %v2963 = vld [vmem:[%s2805 + $0x151] sm:$0xff]
        %v2964 = vld [vmem:[%s2805 + $0x159] sm:$0xff]
        %v2965 = vld [vmem:[%s2805 + $0x169] sm:$0xff]
        %v2966 = vld [vmem:[%s2805 + $0x171] sm:$0xff]
        %v2967 = vpack.c.bf16 %v2936, %v2935
        %v2968 = vpack.c.bf16 %v2938, %v2937
        %v2969 = vpack.c.bf16 %v2940, %v2939
        %v2970 = vpack.c.bf16 %v2942, %v2941
        %v2971 = vpack.c.bf16 %v2944, %v2943
        %v2972 = vpack.c.bf16 %v2946, %v2945
        %v2973 = vpack.c.bf16 %v2948, %v2947
        %v2974 = vpack.c.bf16 %v2950, %v2949
        %v2975 = vpack.c.bf16 %v2952, %v2951
        %v2976 = vpack.c.bf16 %v2954, %v2953
        %v2977 = vpack.c.bf16 %v2956, %v2955
        %v2978 = vpack.c.bf16 %v2958, %v2957
        %v2979 = vpack.c.bf16 %v2960, %v2959
        %v2980 = vpack.c.bf16 %v2962, %v2961
        %v2981 = vpack.c.bf16 %v2964, %v2963
        %v2982 = vpack.c.bf16 %v2966, %v2965
        %2999 = vrot.lane.b32.xlu0 %v2967, 112
        %v3000 = vpop.permute.xlu0 %2999
        %3001 = vrot.lane.b32.xlu0 %v2968, 112
        %v3002 = vpop.permute.xlu0 %3001
        %3003 = vrot.lane.b32.xlu0 %v2969, 112
        %v3004 = vpop.permute.xlu0 %3003
        %3005 = vrot.lane.b32.xlu0 %v2970, 112
        %v3006 = vpop.permute.xlu0 %3005
        %3007 = vrot.lane.b32.xlu0 %v2971, 112
        %v3008 = vpop.permute.xlu0 %3007
        %3009 = vrot.lane.b32.xlu0 %v2972, 112
        %v3010 = vpop.permute.xlu0 %3009
        %3011 = vrot.lane.b32.xlu0 %v2973, 112
        %v3012 = vpop.permute.xlu0 %3011
        %3013 = vrot.lane.b32.xlu0 %v2974, 112
        %v3014 = vpop.permute.xlu0 %3013
        %3015 = vrot.lane.b32.xlu0 %v2975, 112
        %v3016 = vpop.permute.xlu0 %3015
        %3017 = vrot.lane.b32.xlu0 %v2976, 112
        %v3018 = vpop.permute.xlu0 %3017
        %3019 = vrot.lane.b32.xlu0 %v2977, 112
        %v3020 = vpop.permute.xlu0 %3019
        %3021 = vrot.lane.b32.xlu0 %v2978, 112
        %v3022 = vpop.permute.xlu0 %3021
        %3023 = vrot.lane.b32.xlu0 %v2979, 112
        %v3024 = vpop.permute.xlu0 %3023
        %3025 = vrot.lane.b32.xlu0 %v2980, 112
        %v3026 = vpop.permute.xlu0 %3025
        %3027 = vrot.lane.b32.xlu0 %v2981, 112
        %v3028 = vpop.permute.xlu0 %3027
        %3029 = vrot.lane.b32.xlu0 %v2982, 112
        %v3030 = vpop.permute.xlu0 %3029
        %vm3047 = vcmask 1048448
        %3048 = vst.msk [vmem:[#allocation5] sm:$0xff] %vm3047, %v3000
        %3049 = vst.msk [vmem:[#allocation5 + $0x10] sm:$0xff] %vm3047, %v3002
        %3050 = vst.msk [vmem:[#allocation5 + $0x20] sm:$0xff] %vm3047, %v3004
        %3051 = vst.msk [vmem:[#allocation5 + $0x30] sm:$0xff] %vm3047, %v3006
        %3052 = vst.msk [vmem:[#allocation5 + $0x40] sm:$0xff] %vm3047, %v3008
        %3053 = vst.msk [vmem:[#allocation5 + $0x50] sm:$0xff] %vm3047, %v3010
        %3054 = vst.msk [vmem:[#allocation5 + $0x60] sm:$0xff] %vm3047, %v3012
        %3055 = vst.msk [vmem:[#allocation5 + $0x70] sm:$0xff] %vm3047, %v3014
        %3056 = vst.msk [vmem:[#allocation5 + $0x80] sm:$0xff] %vm3047, %v3016
        %3057 = vst.msk [vmem:[#allocation5 + $0x90] sm:$0xff] %vm3047, %v3018
        %3058 = vst.msk [vmem:[#allocation5 + $0xa0] sm:$0xff] %vm3047, %v3020
        %3059 = vst.msk [vmem:[#allocation5 + $0xb0] sm:$0xff] %vm3047, %v3022
        %3060 = vst.msk [vmem:[#allocation5 + $0xc0] sm:$0xff] %vm3047, %v3024
        %3061 = vst.msk [vmem:[#allocation5 + $0xd0] sm:$0xff] %vm3047, %v3026
        %3062 = vst.msk [vmem:[#allocation5 + $0xe0] sm:$0xff] %vm3047, %v3028
        %3063 = vst.msk [vmem:[#allocation5 + $0xf0] sm:$0xff] %vm3047, %v3030
        %v3064 = vld [vmem:[%s2805 + $0x2] sm:$0xff]
        %v3065 = vld [vmem:[%s2805 + $0xa] sm:$0xff]
        %v3066 = vld [vmem:[%s2805 + $0x1a] sm:$0xff]
        %v3067 = vld [vmem:[%s2805 + $0x22] sm:$0xff]
        %v3068 = vld [vmem:[%s2805 + $0x32] sm:$0xff]
        %v3069 = vld [vmem:[%s2805 + $0x3a] sm:$0xff]
        %v3070 = vld [vmem:[%s2805 + $0x4a] sm:$0xff]
        %v3071 = vld [vmem:[%s2805 + $0x52] sm:$0xff]
        %v3072 = vld [vmem:[%s2805 + $0x62] sm:$0xff]
        %v3073 = vld [vmem:[%s2805 + $0x6a] sm:$0xff]
        %v3074 = vld [vmem:[%s2805 + $0x7a] sm:$0xff]
        %v3075 = vld [vmem:[%s2805 + $0x82] sm:$0xff]
        %v3076 = vld [vmem:[%s2805 + $0x92] sm:$0xff]
        %v3077 = vld [vmem:[%s2805 + $0x9a] sm:$0xff]
        %v3078 = vld [vmem:[%s2805 + $0xaa] sm:$0xff]
        %v3079 = vld [vmem:[%s2805 + $0xb2] sm:$0xff]
        %v3080 = vld [vmem:[%s2805 + $0xc2] sm:$0xff]
        %v3081 = vld [vmem:[%s2805 + $0xca] sm:$0xff]
        %v3082 = vld [vmem:[%s2805 + $0xda] sm:$0xff]
        %v3083 = vld [vmem:[%s2805 + $0xe2] sm:$0xff]
        %v3084 = vld [vmem:[%s2805 + $0xf2] sm:$0xff]
        %v3085 = vld [vmem:[%s2805 + $0xfa] sm:$0xff]
        %v3086 = vld [vmem:[%s2805 + $0x10a] sm:$0xff]
        %v3087 = vld [vmem:[%s2805 + $0x112] sm:$0xff]
        %v3088 = vld [vmem:[%s2805 + $0x122] sm:$0xff]
        %v3089 = vld [vmem:[%s2805 + $0x12a] sm:$0xff]
        %v3090 = vld [vmem:[%s2805 + $0x13a] sm:$0xff]
        %v3091 = vld [vmem:[%s2805 + $0x142] sm:$0xff]
        %v3092 = vld [vmem:[%s2805 + $0x152] sm:$0xff]
        %v3093 = vld [vmem:[%s2805 + $0x15a] sm:$0xff]
        %v3094 = vld [vmem:[%s2805 + $0x16a] sm:$0xff]
        %v3095 = vld [vmem:[%s2805 + $0x172] sm:$0xff]
        %v3096 = vpack.c.bf16 %v3065, %v3064
        %v3097 = vpack.c.bf16 %v3067, %v3066
        %v3098 = vpack.c.bf16 %v3069, %v3068
        %v3099 = vpack.c.bf16 %v3071, %v3070
        %v3100 = vpack.c.bf16 %v3073, %v3072
        %v3101 = vpack.c.bf16 %v3075, %v3074
        %v3102 = vpack.c.bf16 %v3077, %v3076
        %v3103 = vpack.c.bf16 %v3079, %v3078
        %v3104 = vpack.c.bf16 %v3081, %v3080
        %v3105 = vpack.c.bf16 %v3083, %v3082
        %v3106 = vpack.c.bf16 %v3085, %v3084
        %v3107 = vpack.c.bf16 %v3087, %v3086
        %v3108 = vpack.c.bf16 %v3089, %v3088
        %v3109 = vpack.c.bf16 %v3091, %v3090
        %v3110 = vpack.c.bf16 %v3093, %v3092
        %v3111 = vpack.c.bf16 %v3095, %v3094
        %3112 = vst.msk [vmem:[#allocation5 + $0x8] sm:$0xff] %vm2007, %v3096
        %3113 = vst.msk [vmem:[#allocation5 + $0x18] sm:$0xff] %vm2007, %v3097
        %3114 = vst.msk [vmem:[#allocation5 + $0x28] sm:$0xff] %vm2007, %v3098
        %3115 = vst.msk [vmem:[#allocation5 + $0x38] sm:$0xff] %vm2007, %v3099
        %3116 = vst.msk [vmem:[#allocation5 + $0x48] sm:$0xff] %vm2007, %v3100
        %3117 = vst.msk [vmem:[#allocation5 + $0x58] sm:$0xff] %vm2007, %v3101
        %3118 = vst.msk [vmem:[#allocation5 + $0x68] sm:$0xff] %vm2007, %v3102
        %3119 = vst.msk [vmem:[#allocation5 + $0x78] sm:$0xff] %vm2007, %v3103
        %3120 = vst.msk [vmem:[#allocation5 + $0x88] sm:$0xff] %vm2007, %v3104
        %3121 = vst.msk [vmem:[#allocation5 + $0x98] sm:$0xff] %vm2007, %v3105
        %3122 = vst.msk [vmem:[#allocation5 + $0xa8] sm:$0xff] %vm2007, %v3106
        %3123 = vst.msk [vmem:[#allocation5 + $0xb8] sm:$0xff] %vm2007, %v3107
        %3124 = vst.msk [vmem:[#allocation5 + $0xc8] sm:$0xff] %vm2007, %v3108
        %3125 = vst.msk [vmem:[#allocation5 + $0xd8] sm:$0xff] %vm2007, %v3109
        %3126 = vst.msk [vmem:[#allocation5 + $0xe8] sm:$0xff] %vm2007, %v3110
        %3127 = vst.msk [vmem:[#allocation5 + $0xf8] sm:$0xff] %vm2007, %v3111
        %v3128 = vld [vmem:[#allocation5] sm:$0xff]
        %v3129 = vld [vmem:[#allocation5 + $0x8] sm:$0xff]
        %v3130 = vld [vmem:[#allocation5 + $0x10] sm:$0xff]
        %v3131 = vld [vmem:[#allocation5 + $0x18] sm:$0xff]
        %v3132 = vld [vmem:[#allocation5 + $0x20] sm:$0xff]
        %v3133 = vld [vmem:[#allocation5 + $0x28] sm:$0xff]
        %v3134 = vld [vmem:[#allocation5 + $0x30] sm:$0xff]
        %v3135 = vld [vmem:[#allocation5 + $0x38] sm:$0xff]
        %v3136 = vld [vmem:[#allocation5 + $0x40] sm:$0xff]
        %v3137 = vld [vmem:[#allocation5 + $0x48] sm:$0xff]
        %v3138 = vld [vmem:[#allocation5 + $0x50] sm:$0xff]
        %v3139 = vld [vmem:[#allocation5 + $0x58] sm:$0xff]
        %v3140 = vld [vmem:[#allocation5 + $0x60] sm:$0xff]
        %v3141 = vld [vmem:[#allocation5 + $0x68] sm:$0xff]
        %v3142 = vld [vmem:[#allocation5 + $0x70] sm:$0xff]
        %v3143 = vld [vmem:[#allocation5 + $0x78] sm:$0xff]
        %v3144 = vld [vmem:[#allocation5 + $0x80] sm:$0xff]
        %v3145 = vld [vmem:[#allocation5 + $0x88] sm:$0xff]
        %v3146 = vld [vmem:[#allocation5 + $0x90] sm:$0xff]
        %v3147 = vld [vmem:[#allocation5 + $0x98] sm:$0xff]
        %v3148 = vld [vmem:[#allocation5 + $0xa0] sm:$0xff]
        %v3149 = vld [vmem:[#allocation5 + $0xa8] sm:$0xff]
        %v3150 = vld [vmem:[#allocation5 + $0xb0] sm:$0xff]
        %v3151 = vld [vmem:[#allocation5 + $0xb8] sm:$0xff]
        %v3152 = vld [vmem:[#allocation5 + $0xc0] sm:$0xff]
        %v3153 = vld [vmem:[#allocation5 + $0xc8] sm:$0xff]
        %v3154 = vld [vmem:[#allocation5 + $0xd0] sm:$0xff]
        %v3155 = vld [vmem:[#allocation5 + $0xd8] sm:$0xff]
        %v3156 = vld [vmem:[#allocation5 + $0xe0] sm:$0xff]
        %v3157 = vld [vmem:[#allocation5 + $0xe8] sm:$0xff]
        %v3158 = vld [vmem:[#allocation5 + $0xf0] sm:$0xff]
        %v3159 = vld [vmem:[#allocation5 + $0xf8] sm:$0xff]
        %v3160 = vld [vmem:[%s2] sm:$0xf]
        %v3161 = vld [vmem:[%s2 + $0x4] sm:$0xf]
        %v3162 = vld [vmem:[%s2 + $0x8] sm:$0xf]
        %v3163 = vld [vmem:[%s2 + $0xc] sm:$0xf]
        %v3164 = vld [vmem:[%s2 + $0x10] sm:$0xf]
        %v3165 = vld [vmem:[%s2 + $0x14] sm:$0xf]
        %v3166 = vld [vmem:[%s2 + $0x18] sm:$0xf]
        %v3167 = vld [vmem:[%s2 + $0x1c] sm:$0xf]
        %v3168 = vld [vmem:[%s2 + $0x20] sm:$0xf]
        %v3169 = vld [vmem:[%s2 + $0x24] sm:$0xf]
        %v3170 = vld [vmem:[%s2 + $0x28] sm:$0xf]
        %v3171 = vld [vmem:[%s2 + $0x2c] sm:$0xf]
        %v3172 = vld [vmem:[%s2 + $0x30] sm:$0xf]
        %v3173 = vld [vmem:[%s2 + $0x34] sm:$0xf]
        %v3174 = vld [vmem:[%s2 + $0x38] sm:$0xf]
        %v3175 = vld [vmem:[%s2 + $0x3c] sm:$0xf]
        %v3176 = vld [vmem:[%s2 + $0x40] sm:$0xf]
        %v3177 = vld [vmem:[%s2 + $0x44] sm:$0xf]
        %v3178 = vld [vmem:[%s5] sm:$0x1]
        %v3180 = vlaneseq
        %v3181 = vshrl.u32 %v3180, 7
        %v3182 = vsub.s32 0, %v3181
        %v3183 = vrot.slane %v3178, %v3182
        %v3203 = vunpack.c.l.b16 %v3160
        %v3204 = vunpack.c.l.b16 %v3161
        %v3205 = vunpack.c.l.b16 %v3162
        %v3206 = vunpack.c.l.b16 %v3163
        %v3207 = vunpack.c.l.b16 %v3164
        %v3208 = vunpack.c.l.b16 %v3165
        %v3209 = vunpack.c.l.b16 %v3166
        %v3210 = vunpack.c.l.b16 %v3167
        %v3211 = vunpack.c.l.b16 %v3168
        %v3212 = vunpack.c.l.b16 %v3169
        %v3213 = vunpack.c.l.b16 %v3170
        %v3214 = vunpack.c.l.b16 %v3171
        %v3215 = vunpack.c.l.b16 %v3172
        %v3216 = vunpack.c.l.b16 %v3173
        %v3217 = vunpack.c.l.b16 %v3174
        %v3218 = vunpack.c.l.b16 %v3175
        %v3219 = vunpack.c.l.b16 %v3176
        %v3220 = vunpack.c.l.b16 %v3177
        %v3221 = vpack.c.b16 %v3204, %v3203
        %v3222 = vpack.c.b16 %v3206, %v3205
        %v3223 = vpack.c.b16 %v3208, %v3207
        %v3224 = vpack.c.b16 %v3210, %v3209
        %v3225 = vpack.c.b16 %v3212, %v3211
        %v3226 = vpack.c.b16 %v3214, %v3213
        %v3227 = vpack.c.b16 %v3216, %v3215
        %v3228 = vpack.c.b16 %v3218, %v3217
        %v3229 = vpack.c.b16 %v3220, %v3219
        %v3240 = vsel %vm2007, %v3129, 0
        %v3243 = vsel %vm2007, %v3131, 0
        %v3246 = vsel %vm2007, %v3133, 0
        %v3249 = vsel %vm2007, %v3135, 0
        %v3252 = vsel %vm2007, %v3137, 0
        %v3255 = vsel %vm2007, %v3139, 0
        %v3258 = vsel %vm2007, %v3141, 0
        %v3261 = vsel %vm2007, %v3143, 0
        %v3264 = vsel %vm2007, %v3145, 0
        %v3267 = vsel %vm2007, %v3147, 0
        %v3270 = vsel %vm2007, %v3149, 0
        %v3273 = vsel %vm2007, %v3151, 0
        %v3276 = vsel %vm2007, %v3153, 0
        %v3279 = vsel %vm2007, %v3155, 0
        %v3282 = vsel %vm2007, %v3157, 0
        %v3285 = vsel %vm2007, %v3159, 0
        %3287 = vmatprep.subr.bf16.mxu0 0
        %3288 = vmatpush1.bf16.msra.mxu0 %v3221
        %3289 = vmatprep.subr.bf16.mxu0 0
        %3290 = vmatpush1.bf16.msra.mxu0 %v3222
        %3291 = vmatprep.subr.bf16.mxu0 0
        %3292 = vmatpush1.bf16.msra.mxu0 %v3223
        %3293 = vmatprep.subr.bf16.mxu0 0
        %3294 = vmatpush1.bf16.msra.mxu0 %v3224
        %3295 = vmatprep.subr.bf16.mxu0 0
        %3296 = vmatpush1.bf16.msra.mxu0 %v3225
        %3297 = vmatprep.subr.bf16.mxu0 0
        %3298 = vmatpush1.bf16.msra.mxu0 %v3226
        %3299 = vmatprep.subr.bf16.mxu0 0
        %3300 = vmatpush1.bf16.msra.mxu0 %v3227
        %3301 = vmatprep.subr.bf16.mxu0 0
        %3302 = vmatpush1.bf16.msra.mxu0 %v3228
        %3303 = vmatprep.subr.bf16.mxu0 0
        %3304 = vmatpush1.bf16.msra.mxu0 %v3229
        %3305 = vmatprep.subr.bf16.mxu0 0
        %3306 = vmatpush1.bf16.msra.mxu0 0
        %3307 = vmatprep.subr.bf16.mxu0 0
        %3308 = vmatpush1.bf16.msra.mxu0 0
        %3309 = vmatprep.subr.bf16.mxu0 0
        %3310 = vmatpush1.bf16.msra.mxu0 0
        %3311 = vmatprep.subr.bf16.mxu0 0
        %3312 = vmatpush1.bf16.msra.mxu0 0
        %3313 = vmatprep.subr.bf16.mxu0 0
        %3314 = vmatpush1.bf16.msra.mxu0 0
        %3315 = vmatprep.subr.bf16.mxu0 0
        %3316 = vmatpush1.bf16.msra.mxu0 0
        %3317 = vmatprep.subr.bf16.mxu0 0
        %3318 = vmatpush1.bf16.msra.mxu0 0
        %3319 = vmatprep.mubr.bf16.mxu0 %v3240
        %3320 = vmatmul.mubr.bf16.gmra.mrb[0].mxu0 %v3128
        %v3321 = vpop.f32.mrb[0].mxu0
        %v3322 = vadd.f32 %v3183, %v3321
        %v3323 = vpop.f32.mrb[0].mxu0
        %v3324 = vpop.f32.mrb[0].mxu0
        %v3325 = vadd.f32 %v3183, %v3324
        %v3326 = vpop.f32.mrb[0].mxu0
        %3327 = vmatprep.mubr.bf16.mxu0 %v3243
        %3328 = vmatmul.mubr.bf16.gmra.mrb[0].mxu0 %v3130
        %v3329 = vpop.f32.mrb[0].mxu0
        %v3330 = vadd.f32 %v3183, %v3329
        %v3331 = vpop.f32.mrb[0].mxu0
        %v3332 = vpop.f32.mrb[0].mxu0
        %v3333 = vadd.f32 %v3183, %v3332
        %v3334 = vpop.f32.mrb[0].mxu0
        %3335 = vmatprep.mubr.bf16.mxu0 %v3246
        %3336 = vmatmul.mubr.bf16.gmra.mrb[0].mxu0 %v3132
        %v3337 = vpop.f32.mrb[0].mxu0
        %v3338 = vadd.f32 %v3183, %v3337
        %v3339 = vpop.f32.mrb[0].mxu0
        %v3340 = vpop.f32.mrb[0].mxu0
        %v3341 = vadd.f32 %v3183, %v3340
        %v3342 = vpop.f32.mrb[0].mxu0
        %3343 = vmatprep.mubr.bf16.mxu0 %v3249
        %3344 = vmatmul.mubr.bf16.gmra.mrb[0].mxu0 %v3134
        %v3345 = vpop.f32.mrb[0].mxu0
        %v3346 = vadd.f32 %v3183, %v3345
        %v3347 = vpop.f32.mrb[0].mxu0
        %v3348 = vpop.f32.mrb[0].mxu0
        %v3349 = vadd.f32 %v3183, %v3348
        %v3350 = vpop.f32.mrb[0].mxu0
        %3351 = vmatprep.mubr.bf16.mxu0 %v3252
        %3352 = vmatmul.mubr.bf16.gmra.mrb[0].mxu0 %v3136
        %v3353 = vpop.f32.mrb[0].mxu0
        %v3354 = vadd.f32 %v3183, %v3353
        %v3355 = vpop.f32.mrb[0].mxu0
        %v3356 = vpop.f32.mrb[0].mxu0
        %v3357 = vadd.f32 %v3183, %v3356
        %v3358 = vpop.f32.mrb[0].mxu0
        %3359 = vmatprep.mubr.bf16.mxu0 %v3255
        %3360 = vmatmul.mubr.bf16.gmra.mrb[0].mxu0 %v3138
        %v3361 = vpop.f32.mrb[0].mxu0
        %v3362 = vadd.f32 %v3183, %v3361
        %v3363 = vpop.f32.mrb[0].mxu0
        %v3364 = vpop.f32.mrb[0].mxu0
        %v3365 = vadd.f32 %v3183, %v3364
        %v3366 = vpop.f32.mrb[0].mxu0
        %3367 = vmatprep.mubr.bf16.mxu0 %v3258
        %3368 = vmatmul.mubr.bf16.gmra.mrb[0].mxu0 %v3140
        %v3369 = vpop.f32.mrb[0].mxu0
        %v3370 = vadd.f32 %v3183, %v3369
        %v3371 = vpop.f32.mrb[0].mxu0
        %v3372 = vpop.f32.mrb[0].mxu0
        %v3373 = vadd.f32 %v3183, %v3372
        %v3374 = vpop.f32.mrb[0].mxu0
        %3375 = vmatprep.mubr.bf16.mxu0 %v3261
        %3376 = vmatmul.mubr.bf16.gmra.mrb[0].mxu0 %v3142
        %v3377 = vpop.f32.mrb[0].mxu0
        %v3378 = vadd.f32 %v3183, %v3377
        %v3379 = vpop.f32.mrb[0].mxu0
        %v3380 = vpop.f32.mrb[0].mxu0
        %v3381 = vadd.f32 %v3183, %v3380
        %v3382 = vpop.f32.mrb[0].mxu0
        %3383 = vmatprep.mubr.bf16.mxu0 %v3264
        %3384 = vmatmul.mubr.bf16.gmra.mrb[0].mxu0 %v3144
        %v3385 = vpop.f32.mrb[0].mxu0
        %v3386 = vadd.f32 %v3183, %v3385
        %v3387 = vpop.f32.mrb[0].mxu0
        %v3388 = vpop.f32.mrb[0].mxu0
        %v3389 = vadd.f32 %v3183, %v3388
        %v3390 = vpop.f32.mrb[0].mxu0
        %3391 = vmatprep.mubr.bf16.mxu0 %v3267
        %3392 = vmatmul.mubr.bf16.gmra.mrb[0].mxu0 %v3146
        %v3393 = vpop.f32.mrb[0].mxu0
        %v3394 = vadd.f32 %v3183, %v3393
        %v3395 = vpop.f32.mrb[0].mxu0
        %v3396 = vpop.f32.mrb[0].mxu0
        %v3397 = vadd.f32 %v3183, %v3396
        %v3398 = vpop.f32.mrb[0].mxu0
        %3399 = vmatprep.mubr.bf16.mxu0 %v3270
        %3400 = vmatmul.mubr.bf16.gmra.mrb[0].mxu0 %v3148
        %v3401 = vpop.f32.mrb[0].mxu0
        %v3402 = vadd.f32 %v3183, %v3401
        %v3403 = vpop.f32.mrb[0].mxu0
        %v3404 = vpop.f32.mrb[0].mxu0
        %v3405 = vadd.f32 %v3183, %v3404
        %v3406 = vpop.f32.mrb[0].mxu0
        %3407 = vmatprep.mubr.bf16.mxu0 %v3273
        %3408 = vmatmul.mubr.bf16.gmra.mrb[0].mxu0 %v3150
        %v3409 = vpop.f32.mrb[0].mxu0
        %v3410 = vadd.f32 %v3183, %v3409
        %v3411 = vpop.f32.mrb[0].mxu0
        %v3412 = vpop.f32.mrb[0].mxu0
        %v3413 = vadd.f32 %v3183, %v3412
        %v3414 = vpop.f32.mrb[0].mxu0
        %3415 = vmatprep.mubr.bf16.mxu0 %v3276
        %3416 = vmatmul.mubr.bf16.gmra.mrb[0].mxu0 %v3152
        %v3417 = vpop.f32.mrb[0].mxu0
        %v3418 = vadd.f32 %v3183, %v3417
        %v3419 = vpop.f32.mrb[0].mxu0
        %v3420 = vpop.f32.mrb[0].mxu0
        %v3421 = vadd.f32 %v3183, %v3420
        %v3422 = vpop.f32.mrb[0].mxu0
        %3423 = vmatprep.mubr.bf16.mxu0 %v3279
        %3424 = vmatmul.mubr.bf16.gmra.mrb[0].mxu0 %v3154
        %v3425 = vpop.f32.mrb[0].mxu0
        %v3426 = vadd.f32 %v3183, %v3425
        %v3427 = vpop.f32.mrb[0].mxu0
        %v3428 = vpop.f32.mrb[0].mxu0
        %v3429 = vadd.f32 %v3183, %v3428
        %v3430 = vpop.f32.mrb[0].mxu0
        %3431 = vmatprep.mubr.bf16.mxu0 %v3282
        %3432 = vmatmul.mubr.bf16.gmra.mrb[0].mxu0 %v3156
        %v3433 = vpop.f32.mrb[0].mxu0
        %v3434 = vadd.f32 %v3183, %v3433
        %v3435 = vpop.f32.mrb[0].mxu0
        %v3436 = vpop.f32.mrb[0].mxu0
        %v3437 = vadd.f32 %v3183, %v3436
        %v3438 = vpop.f32.mrb[0].mxu0
        %3439 = vmatprep.mubr.bf16.mxu0 %v3285
        %3440 = vmatmul.mubr.bf16.gmra.mrb[0].mxu0 %v3158
        %v3441 = vpop.f32.mrb[0].mxu0
        %v3442 = vadd.f32 %v3183, %v3441
        %v3443 = vpop.f32.mrb[0].mxu0
        %v3444 = vpop.f32.mrb[0].mxu0
        %v3445 = vadd.f32 %v3183, %v3444
        %v3446 = vpop.f32.mrb[0].mxu0
        %3447 = vdwg.mxu0
        %3448 = vst.msk [vmem:[%s390] sm:$0xff] %vm2007, %v3322
        %3449 = vst.msk [vmem:[%s390 + $0x8] sm:$0xff] %vm2007, %v3325
        %3450 = vst.msk [vmem:[%s390 + $0x10] sm:$0xff] %vm2007, %v3330
        %3451 = vst.msk [vmem:[%s390 + $0x18] sm:$0xff] %vm2007, %v3333
        %3452 = vst.msk [vmem:[%s390 + $0x20] sm:$0xff] %vm2007, %v3338
        %3453 = vst.msk [vmem:[%s390 + $0x28] sm:$0xff] %vm2007, %v3341
        %3454 = vst.msk [vmem:[%s390 + $0x30] sm:$0xff] %vm2007, %v3346
        %3455 = vst.msk [vmem:[%s390 + $0x38] sm:$0xff] %vm2007, %v3349
        %3456 = vst.msk [vmem:[%s390 + $0x40] sm:$0xff] %vm2007, %v3354
        %3457 = vst.msk [vmem:[%s390 + $0x48] sm:$0xff] %vm2007, %v3357
        %3458 = vst.msk [vmem:[%s390 + $0x50] sm:$0xff] %vm2007, %v3362
        %3459 = vst.msk [vmem:[%s390 + $0x58] sm:$0xff] %vm2007, %v3365
        %3460 = vst.msk [vmem:[%s390 + $0x60] sm:$0xff] %vm2007, %v3370
        %3461 = vst.msk [vmem:[%s390 + $0x68] sm:$0xff] %vm2007, %v3373
        %3462 = vst.msk [vmem:[%s390 + $0x70] sm:$0xff] %vm2007, %v3378
        %3463 = vst.msk [vmem:[%s390 + $0x78] sm:$0xff] %vm2007, %v3381
        %3464 = vst.msk [vmem:[%s390 + $0x80] sm:$0xff] %vm2007, %v3386
        %3465 = vst.msk [vmem:[%s390 + $0x88] sm:$0xff] %vm2007, %v3389
        %3466 = vst.msk [vmem:[%s390 + $0x90] sm:$0xff] %vm2007, %v3394
        %3467 = vst.msk [vmem:[%s390 + $0x98] sm:$0xff] %vm2007, %v3397
        %3468 = vst.msk [vmem:[%s390 + $0xa0] sm:$0xff] %vm2007, %v3402
        %3469 = vst.msk [vmem:[%s390 + $0xa8] sm:$0xff] %vm2007, %v3405
        %3470 = vst.msk [vmem:[%s390 + $0xb0] sm:$0xff] %vm2007, %v3410
        %3471 = vst.msk [vmem:[%s390 + $0xb8] sm:$0xff] %vm2007, %v3413
        %3472 = vst.msk [vmem:[%s390 + $0xc0] sm:$0xff] %vm2007, %v3418
        %3473 = vst.msk [vmem:[%s390 + $0xc8] sm:$0xff] %vm2007, %v3421
        %3474 = vst.msk [vmem:[%s390 + $0xd0] sm:$0xff] %vm2007, %v3426
        %3475 = vst.msk [vmem:[%s390 + $0xd8] sm:$0xff] %vm2007, %v3429
        %3476 = vst.msk [vmem:[%s390 + $0xe0] sm:$0xff] %vm2007, %v3434
        %3477 = vst.msk [vmem:[%s390 + $0xe8] sm:$0xff] %vm2007, %v3437
        %3478 = vst.msk [vmem:[%s390 + $0xf0] sm:$0xff] %vm2007, %v3442
        %3479 = vst.msk [vmem:[%s390 + $0xf8] sm:$0xff] %vm2007, %v3445
        %v3480 = vld [vmem:[%s6] sm:$0x1]
        %v3482 = vlaneseq
        %v3483 = vshrl.u32 %v3482, 7
        %v3484 = vsub.s32 0, %v3483
        %v3485 = vrot.slane %v3480, %v3484
        %v3487 = vmul.f32 %v3322, %v3485
        %v3488 = vmul.f32 %v3325, %v3485
        %v3489 = vmul.f32 %v3330, %v3485
        %v3490 = vmul.f32 %v3333, %v3485
        %v3491 = vmul.f32 %v3338, %v3485
        %v3492 = vmul.f32 %v3341, %v3485
        %v3493 = vmul.f32 %v3346, %v3485
        %v3494 = vmul.f32 %v3349, %v3485
        %v3495 = vmul.f32 %v3354, %v3485
        %v3496 = vmul.f32 %v3357, %v3485
        %v3497 = vmul.f32 %v3362, %v3485
        %v3498 = vmul.f32 %v3365, %v3485
        %v3499 = vmul.f32 %v3370, %v3485
        %v3500 = vmul.f32 %v3373, %v3485
        %v3501 = vmul.f32 %v3378, %v3485
        %v3502 = vmul.f32 %v3381, %v3485
        %v3503 = vmul.f32 %v3386, %v3485
        %v3504 = vmul.f32 %v3389, %v3485
        %v3505 = vmul.f32 %v3394, %v3485
        %v3506 = vmul.f32 %v3397, %v3485
        %v3507 = vmul.f32 %v3402, %v3485
        %v3508 = vmul.f32 %v3405, %v3485
        %v3509 = vmul.f32 %v3410, %v3485
        %v3510 = vmul.f32 %v3413, %v3485
        %v3511 = vmul.f32 %v3418, %v3485
        %v3512 = vmul.f32 %v3421, %v3485
        %v3513 = vmul.f32 %v3426, %v3485
        %v3514 = vmul.f32 %v3429, %v3485
        %v3515 = vmul.f32 %v3434, %v3485
        %v3516 = vmul.f32 %v3437, %v3485
        %v3517 = vmul.f32 %v3442, %v3485
        %v3518 = vmul.f32 %v3445, %v3485
        %v3519 = vld [vmem:[%s7] sm:$0x1]
        %v3521 = vlaneseq
        %v3522 = vshrl.u32 %v3521, 7
        %v3523 = vsub.s32 0, %v3522
        %v3524 = vrot.slane %v3519, %v3523
        %v3526 = vadd.f32 %v3487, %v3524
        %v3527 = vadd.f32 %v3488, %v3524
        %v3528 = vadd.f32 %v3489, %v3524
        %v3529 = vadd.f32 %v3490, %v3524
        %v3530 = vadd.f32 %v3491, %v3524
        %v3531 = vadd.f32 %v3492, %v3524
        %v3532 = vadd.f32 %v3493, %v3524
        %v3533 = vadd.f32 %v3494, %v3524
        %v3534 = vadd.f32 %v3495, %v3524
        %v3535 = vadd.f32 %v3496, %v3524
        %v3536 = vadd.f32 %v3497, %v3524
        %v3537 = vadd.f32 %v3498, %v3524
        %v3538 = vadd.f32 %v3499, %v3524
        %v3539 = vadd.f32 %v3500, %v3524
        %v3540 = vadd.f32 %v3501, %v3524
        %v3541 = vadd.f32 %v3502, %v3524
        %v3542 = vadd.f32 %v3503, %v3524
        %v3543 = vadd.f32 %v3504, %v3524
        %v3544 = vadd.f32 %v3505, %v3524
        %v3545 = vadd.f32 %v3506, %v3524
        %v3546 = vadd.f32 %v3507, %v3524
        %v3547 = vadd.f32 %v3508, %v3524
        %v3548 = vadd.f32 %v3509, %v3524
        %v3549 = vadd.f32 %v3510, %v3524
        %v3550 = vadd.f32 %v3511, %v3524
        %v3551 = vadd.f32 %v3512, %v3524
        %v3552 = vadd.f32 %v3513, %v3524
        %v3553 = vadd.f32 %v3514, %v3524
        %v3554 = vadd.f32 %v3515, %v3524
        %v3555 = vadd.f32 %v3516, %v3524
        %v3556 = vadd.f32 %v3517, %v3524
        %v3557 = vadd.f32 %v3518, %v3524
        %v3558 = vmax.f32 %v3526, 0.0
        %v3559 = vmax.f32 %v3527, 0.0
        %v3560 = vmax.f32 %v3528, 0.0
        %v3561 = vmax.f32 %v3529, 0.0
        %v3562 = vmax.f32 %v3530, 0.0
        %v3563 = vmax.f32 %v3531, 0.0
        %v3564 = vmax.f32 %v3532, 0.0
        %v3565 = vmax.f32 %v3533, 0.0
        %v3566 = vmax.f32 %v3534, 0.0
        %v3567 = vmax.f32 %v3535, 0.0
        %v3568 = vmax.f32 %v3536, 0.0
        %v3569 = vmax.f32 %v3537, 0.0
        %v3570 = vmax.f32 %v3538, 0.0
        %v3571 = vmax.f32 %v3539, 0.0
        %v3572 = vmax.f32 %v3540, 0.0
        %v3573 = vmax.f32 %v3541, 0.0
        %v3574 = vmax.f32 %v3542, 0.0
        %v3575 = vmax.f32 %v3543, 0.0
        %v3576 = vmax.f32 %v3544, 0.0
        %v3577 = vmax.f32 %v3545, 0.0
        %v3578 = vmax.f32 %v3546, 0.0
        %v3579 = vmax.f32 %v3547, 0.0
        %v3580 = vmax.f32 %v3548, 0.0
        %v3581 = vmax.f32 %v3549, 0.0
        %v3582 = vmax.f32 %v3550, 0.0
        %v3583 = vmax.f32 %v3551, 0.0
        %v3584 = vmax.f32 %v3552, 0.0
        %v3585 = vmax.f32 %v3553, 0.0
        %v3586 = vmax.f32 %v3554, 0.0
        %v3587 = vmax.f32 %v3555, 0.0
        %v3588 = vmax.f32 %v3556, 0.0
        %v3589 = vmax.f32 %v3557, 0.0
        %v3590 = vsel %vm2007, %v3558, 0.0
        %v3591 = vsel %vm2007, %v3559, 0.0
        %v3592 = vadd.f32 %v3590, %v3591
        %v3593 = vsel %vm2007, %v3560, 0.0
        %v3594 = vadd.f32 %v3592, %v3593
        %v3595 = vsel %vm2007, %v3561, 0.0
        %v3596 = vadd.f32 %v3594, %v3595
        %v3597 = vsel %vm2007, %v3562, 0.0
        %v3598 = vadd.f32 %v3596, %v3597
        %v3599 = vsel %vm2007, %v3563, 0.0
        %v3600 = vadd.f32 %v3598, %v3599
        %v3601 = vsel %vm2007, %v3564, 0.0
        %v3602 = vadd.f32 %v3600, %v3601
        %v3603 = vsel %vm2007, %v3565, 0.0
        %v3604 = vadd.f32 %v3602, %v3603
        %v3605 = vsel %vm2007, %v3566, 0.0
        %v3606 = vadd.f32 %v3604, %v3605
        %v3607 = vsel %vm2007, %v3567, 0.0
        %v3608 = vadd.f32 %v3606, %v3607
        %v3609 = vsel %vm2007, %v3568, 0.0
        %v3610 = vadd.f32 %v3608, %v3609
        %v3611 = vsel %vm2007, %v3569, 0.0
        %v3612 = vadd.f32 %v3610, %v3611
        %v3613 = vsel %vm2007, %v3570, 0.0
        %v3614 = vadd.f32 %v3612, %v3613
        %v3615 = vsel %vm2007, %v3571, 0.0
        %v3616 = vadd.f32 %v3614, %v3615
        %v3617 = vsel %vm2007, %v3572, 0.0
        %v3618 = vadd.f32 %v3616, %v3617
        %v3619 = vsel %vm2007, %v3573, 0.0
        %v3620 = vadd.f32 %v3618, %v3619
        %v3621 = vsel %vm2007, %v3574, 0.0
        %v3622 = vadd.f32 %v3620, %v3621
        %v3623 = vsel %vm2007, %v3575, 0.0
        %v3624 = vadd.f32 %v3622, %v3623
        %v3625 = vsel %vm2007, %v3576, 0.0
        %v3626 = vadd.f32 %v3624, %v3625
        %v3627 = vsel %vm2007, %v3577, 0.0
        %v3628 = vadd.f32 %v3626, %v3627
        %v3629 = vsel %vm2007, %v3578, 0.0
        %v3630 = vadd.f32 %v3628, %v3629
        %v3631 = vsel %vm2007, %v3579, 0.0
        %v3632 = vadd.f32 %v3630, %v3631
        %v3633 = vsel %vm2007, %v3580, 0.0
        %v3634 = vadd.f32 %v3632, %v3633
        %v3635 = vsel %vm2007, %v3581, 0.0
        %v3636 = vadd.f32 %v3634, %v3635
        %v3637 = vsel %vm2007, %v3582, 0.0
        %v3638 = vadd.f32 %v3636, %v3637
        %v3639 = vsel %vm2007, %v3583, 0.0
        %v3640 = vadd.f32 %v3638, %v3639
        %v3641 = vsel %vm2007, %v3584, 0.0
        %v3642 = vadd.f32 %v3640, %v3641
        %v3643 = vsel %vm2007, %v3585, 0.0
        %v3644 = vadd.f32 %v3642, %v3643
        %v3645 = vsel %vm2007, %v3586, 0.0
        %v3646 = vadd.f32 %v3644, %v3645
        %v3647 = vsel %vm2007, %v3587, 0.0
        %v3648 = vadd.f32 %v3646, %v3647
        %v3649 = vsel %vm2007, %v3588, 0.0
        %v3650 = vadd.f32 %v3648, %v3649
        %v3651 = vsel %vm2007, %v3589, 0.0
        %v3652 = vadd.f32 %v3650, %v3651
        %v3653 = vrot.slane %v3652, 4
        %v3654 = vadd.f32 %v3652, %v3653
        %v3655 = vrot.slane %v3654, 2
        %v3656 = vadd.f32 %v3654, %v3655
        %v3657 = vrot.slane %v3656, 1
        %v3658 = vadd.f32 %v3656, %v3657
        %v3659 = vrcp.pop 256.0
        %v3660 = vmul.f32 %v3658, %v3659
        %v3661 = vld [vmem:[%s8] sm:$0xff]
        %v3662 = vld [vmem:[%s8 + $0x8] sm:$0xff]
        %v3664 = vsel %vm2007, %v3660, 0
        %3666 = vmatprep.subr.mxu0 0.0
        %3667 = vmatpush1.msra.mxu0 %v3661
        %3668 = vmatprep.subr.mxu0 0.0
        %3669 = vmatpush1.msra.mxu0 %v3662
        %3670 = vmatprep.subr.mxu0 0.0
        %3671 = vmatpush1.msra.mxu0 0.0
        %3672 = vmatprep.subr.mxu0 0.0
        %3673 = vmatpush1.msra.mxu0 0.0
        %3674 = vmatprep.subr.mxu0 0.0
        %3675 = vmatpush1.msra.mxu0 0.0
        %3676 = vmatprep.subr.mxu0 0.0
        %3677 = vmatpush1.msra.mxu0 0.0
        %3678 = vmatprep.subr.mxu0 0.0
        %3679 = vmatpush1.msra.mxu0 0.0
        %3680 = vmatprep.subr.mxu0 0.0
        %3681 = vmatpush1.msra.mxu0 0.0
        %3682 = vmatprep.subr.mxu0 0.0
        %3683 = vmatpush1.msra.mxu0 0.0
        %3684 = vmatprep.subr.mxu0 0.0
        %3685 = vmatpush1.msra.mxu0 0.0
        %3686 = vmatprep.subr.mxu0 0.0
        %3687 = vmatpush1.msra.mxu0 0.0
        %3688 = vmatprep.subr.mxu0 0.0
        %3689 = vmatpush1.msra.mxu0 0.0
        %3690 = vmatprep.subr.mxu0 0.0
        %3691 = vmatpush1.msra.mxu0 0.0
        %3692 = vmatprep.subr.mxu0 0.0
        %3693 = vmatpush1.msra.mxu0 0.0
        %3694 = vmatprep.subr.mxu0 0.0
        %3695 = vmatpush1.msra.mxu0 0.0
        %3696 = vmatprep.subr.mxu0 0.0
        %3697 = vmatpush1.msra.mxu0 0.0
        %3698 = vmatprep.subr.mxu0 0.0
        %3699 = vmatpush1.msra.mxu0 0.0
        %3700 = vmatprep.subr.mxu0 0.0
        %3701 = vmatpush1.msra.mxu0 0.0
        %3702 = vmatprep.subr.mxu0 0.0
        %3703 = vmatpush1.msra.mxu0 0.0
        %3704 = vmatprep.subr.mxu0 0.0
        %3705 = vmatpush1.msra.mxu0 0.0
        %3706 = vmatprep.subr.mxu0 0.0
        %3707 = vmatpush1.msra.mxu0 0.0
        %3708 = vmatprep.subr.mxu0 0.0
        %3709 = vmatpush1.msra.mxu0 0.0
        %3710 = vmatprep.subr.mxu0 0.0
        %3711 = vmatpush1.msra.mxu0 0.0
        %3712 = vmatprep.subr.mxu0 0.0
        %3713 = vmatpush1.msra.mxu0 0.0
        %3714 = vmatprep.subr.mxu0 0.0
        %3715 = vmatpush1.msra.mxu0 0.0
        %3716 = vmatprep.subr.mxu0 0.0
        %3717 = vmatpush1.msra.mxu0 0.0
        %3718 = vmatprep.subr.mxu0 0.0
        %3719 = vmatpush1.msra.mxu0 0.0
        %3720 = vmatprep.subr.mxu0 0.0
        %3721 = vmatpush1.msra.mxu0 0.0
        %3722 = vmatprep.subr.mxu0 0.0
        %3723 = vmatpush1.msra.mxu0 0.0
        %3724 = vmatprep.subr.mxu0 0.0
        %3725 = vmatpush1.msra.mxu0 0.0
        %3726 = vmatprep.subr.mxu0 0.0
        %3727 = vmatpush1.msra.mxu0 0.0
        %3728 = vmatprep.subr.mxu0 0.0
        %3729 = vmatpush1.msra.mxu0 0.0
        %3730 = vmatprep.mubr.f32.mxu0 0.0
        %3731 = vmatmul.mubr.f32.gmra.mrb[0].mxu0 %v3664
        %v3732 = vpop.f32.mrb[0].mxu0
        %v3733 = vadd.f32 0.0, %v3732
        %v3734 = vpop.f32.mrb[0].mxu0
        %3735 = vdwg.mxu0
        %v3736 = vmax.f32 %v3733, 0.0
        %v3737 = vld [vmem:[%s9] sm:$0x3]
        %vm3738 = vcmask 15360
        %v3740 = vsel %vm3738, %v3736, 0
        %v3743 = vsel %vm1732, %v3737, 0
        %3745 = vmatprep.subr.mxu0 0.0
        %3746 = vmatpush1.msra.mxu0 %v3743
        %3747 = vmatprep.subr.mxu0 0.0
        %3748 = vmatpush1.msra.mxu0 0.0
        %3749 = vmatprep.subr.mxu0 0.0
        %3750 = vmatpush1.msra.mxu0 0.0
        %3751 = vmatprep.subr.mxu0 0.0
        %3752 = vmatpush1.msra.mxu0 0.0
        %3753 = vmatprep.subr.mxu0 0.0
        %3754 = vmatpush1.msra.mxu0 0.0
        %3755 = vmatprep.subr.mxu0 0.0
        %3756 = vmatpush1.msra.mxu0 0.0
        %3757 = vmatprep.subr.mxu0 0.0
        %3758 = vmatpush1.msra.mxu0 0.0
        %3759 = vmatprep.subr.mxu0 0.0
        %3760 = vmatpush1.msra.mxu0 0.0
        %3761 = vmatprep.subr.mxu0 0.0
        %3762 = vmatpush1.msra.mxu0 0.0
        %3763 = vmatprep.subr.mxu0 0.0
        %3764 = vmatpush1.msra.mxu0 0.0
        %3765 = vmatprep.subr.mxu0 0.0
        %3766 = vmatpush1.msra.mxu0 0.0
        %3767 = vmatprep.subr.mxu0 0.0
        %3768 = vmatpush1.msra.mxu0 0.0
        %3769 = vmatprep.subr.mxu0 0.0
        %3770 = vmatpush1.msra.mxu0 0.0
        %3771 = vmatprep.subr.mxu0 0.0
        %3772 = vmatpush1.msra.mxu0 0.0
        %3773 = vmatprep.subr.mxu0 0.0
        %3774 = vmatpush1.msra.mxu0 0.0
        %3775 = vmatprep.subr.mxu0 0.0
        %3776 = vmatpush1.msra.mxu0 0.0
        %3777 = vmatprep.subr.mxu0 0.0
        %3778 = vmatpush1.msra.mxu0 0.0
        %3779 = vmatprep.subr.mxu0 0.0
        %3780 = vmatpush1.msra.mxu0 0.0
        %3781 = vmatprep.subr.mxu0 0.0
        %3782 = vmatpush1.msra.mxu0 0.0
        %3783 = vmatprep.subr.mxu0 0.0
        %3784 = vmatpush1.msra.mxu0 0.0
        %3785 = vmatprep.subr.mxu0 0.0
        %3786 = vmatpush1.msra.mxu0 0.0
        %3787 = vmatprep.subr.mxu0 0.0
        %3788 = vmatpush1.msra.mxu0 0.0
        %3789 = vmatprep.subr.mxu0 0.0
        %3790 = vmatpush1.msra.mxu0 0.0
        %3791 = vmatprep.subr.mxu0 0.0
        %3792 = vmatpush1.msra.mxu0 0.0
        %3793 = vmatprep.subr.mxu0 0.0
        %3794 = vmatpush1.msra.mxu0 0.0
        %3795 = vmatprep.subr.mxu0 0.0
        %3796 = vmatpush1.msra.mxu0 0.0
        %3797 = vmatprep.subr.mxu0 0.0
        %3798 = vmatpush1.msra.mxu0 0.0
        %3799 = vmatprep.subr.mxu0 0.0
        %3800 = vmatpush1.msra.mxu0 0.0
        %3801 = vmatprep.subr.mxu0 0.0
        %3802 = vmatpush1.msra.mxu0 0.0
        %3803 = vmatprep.subr.mxu0 0.0
        %3804 = vmatpush1.msra.mxu0 0.0
        %3805 = vmatprep.subr.mxu0 0.0
        %3806 = vmatpush1.msra.mxu0 0.0
        %3807 = vmatprep.subr.mxu0 0.0
        %3808 = vmatpush1.msra.mxu0 0.0
        %3809 = vmatprep.mubr.f32.mxu0 0.0
        %3810 = vmatmul.mubr.f32.gmra.mrb[0].mxu0 %v3740
        %v3811 = vpop.f32.mrb[0].mxu0
        %v3812 = vadd.f32 0.0, %v3811
        %v3813 = vpop.f32.mrb[0].mxu0
        %3814 = vdwg.mxu0
        %v3815 = vxor.u32 %v3812, 2147483648
        %v3816 = vmul.f32 %v3815, 1.442695
        %v3817 = vpow.pop %v3816
        %v3818 = vadd.f32 %v3817, 1.0
        %v3819 = vrcp.pop %v3818
        %v3820 = vmul.f32 1.0, %v3819
        %v3821 = vlaneseq
        %v3822 = vshrl.u32 %v3821, 7
        %v3823 = vsub.s32 0, %v3822
        %v3824 = vrot.slane %v3820, %v3823
        %v3825 = vmul.f32 %v3558, %v3824
        %v3826 = vmul.f32 %v3559, %v3824
        %v3827 = vmul.f32 %v3560, %v3824
        %v3828 = vmul.f32 %v3561, %v3824
        %v3829 = vmul.f32 %v3562, %v3824
        %v3830 = vmul.f32 %v3563, %v3824
        %v3831 = vmul.f32 %v3564, %v3824
        %v3832 = vmul.f32 %v3565, %v3824
        %v3833 = vmul.f32 %v3566, %v3824
        %v3834 = vmul.f32 %v3567, %v3824
        %v3835 = vmul.f32 %v3568, %v3824
        %v3836 = vmul.f32 %v3569, %v3824
        %v3837 = vmul.f32 %v3570, %v3824
        %v3838 = vmul.f32 %v3571, %v3824
        %v3839 = vmul.f32 %v3572, %v3824
        %v3840 = vmul.f32 %v3573, %v3824
        %v3841 = vmul.f32 %v3574, %v3824
        %v3842 = vmul.f32 %v3575, %v3824
        %v3843 = vmul.f32 %v3576, %v3824
        %v3844 = vmul.f32 %v3577, %v3824
        %v3845 = vmul.f32 %v3578, %v3824
        %v3846 = vmul.f32 %v3579, %v3824
        %v3847 = vmul.f32 %v3580, %v3824
        %v3848 = vmul.f32 %v3581, %v3824
        %v3849 = vmul.f32 %v3582, %v3824
        %v3850 = vmul.f32 %v3583, %v3824
        %v3851 = vmul.f32 %v3584, %v3824
        %v3852 = vmul.f32 %v3585, %v3824
        %v3853 = vmul.f32 %v3586, %v3824
        %v3854 = vmul.f32 %v3587, %v3824
        %v3855 = vmul.f32 %v3588, %v3824
        %v3856 = vmul.f32 %v3589, %v3824
        %3857 = vst.msk [vmem:[%s383] sm:$0xff] %vm2007, %v3825
        %3858 = vst.msk [vmem:[%s383 + $0x8] sm:$0xff] %vm2007, %v3826
        %3859 = vst.msk [vmem:[%s383 + $0x10] sm:$0xff] %vm2007, %v3827
        %3860 = vst.msk [vmem:[%s383 + $0x18] sm:$0xff] %vm2007, %v3828
        %3861 = vst.msk [vmem:[%s383 + $0x20] sm:$0xff] %vm2007, %v3829
        %3862 = vst.msk [vmem:[%s383 + $0x28] sm:$0xff] %vm2007, %v3830
        %3863 = vst.msk [vmem:[%s383 + $0x30] sm:$0xff] %vm2007, %v3831
        %3864 = vst.msk [vmem:[%s383 + $0x38] sm:$0xff] %vm2007, %v3832
        %3865 = vst.msk [vmem:[%s383 + $0x40] sm:$0xff] %vm2007, %v3833
        %3866 = vst.msk [vmem:[%s383 + $0x48] sm:$0xff] %vm2007, %v3834
        %3867 = vst.msk [vmem:[%s383 + $0x50] sm:$0xff] %vm2007, %v3835
        %3868 = vst.msk [vmem:[%s383 + $0x58] sm:$0xff] %vm2007, %v3836
        %3869 = vst.msk [vmem:[%s383 + $0x60] sm:$0xff] %vm2007, %v3837
        %3870 = vst.msk [vmem:[%s383 + $0x68] sm:$0xff] %vm2007, %v3838
        %3871 = vst.msk [vmem:[%s383 + $0x70] sm:$0xff] %vm2007, %v3839
        %3872 = vst.msk [vmem:[%s383 + $0x78] sm:$0xff] %vm2007, %v3840
        %3873 = vst.msk [vmem:[%s383 + $0x80] sm:$0xff] %vm2007, %v3841
        %3874 = vst.msk [vmem:[%s383 + $0x88] sm:$0xff] %vm2007, %v3842
        %3875 = vst.msk [vmem:[%s383 + $0x90] sm:$0xff] %vm2007, %v3843
        %3876 = vst.msk [vmem:[%s383 + $0x98] sm:$0xff] %vm2007, %v3844
        %3877 = vst.msk [vmem:[%s383 + $0xa0] sm:$0xff] %vm2007, %v3845
        %3878 = vst.msk [vmem:[%s383 + $0xa8] sm:$0xff] %vm2007, %v3846
        %3879 = vst.msk [vmem:[%s383 + $0xb0] sm:$0xff] %vm2007, %v3847
        %3880 = vst.msk [vmem:[%s383 + $0xb8] sm:$0xff] %vm2007, %v3848
        %3881 = vst.msk [vmem:[%s383 + $0xc0] sm:$0xff] %vm2007, %v3849
        %3882 = vst.msk [vmem:[%s383 + $0xc8] sm:$0xff] %vm2007, %v3850
        %3883 = vst.msk [vmem:[%s383 + $0xd0] sm:$0xff] %vm2007, %v3851
        %3884 = vst.msk [vmem:[%s383 + $0xd8] sm:$0xff] %vm2007, %v3852
        %3885 = vst.msk [vmem:[%s383 + $0xe0] sm:$0xff] %vm2007, %v3853
        %3886 = vst.msk [vmem:[%s383 + $0xe8] sm:$0xff] %vm2007, %v3854
        %3887 = vst.msk [vmem:[%s383 + $0xf0] sm:$0xff] %vm2007, %v3855
        %3888 = vst.msk [vmem:[%s383 + $0xf8] sm:$0xff] %vm2007, %v3856
        %s3889 = sand.u32 %s252, 1
        %s3890 = scalar_lea.sflag [#allocation7], %s3889
        %s3891 = sand.u32 %s252, 1
        %s3892 = smul.addr %s3891, 256
        %s3893 = scalar_lea.vmem [#allocation6], %s3892
        %s3894 = sand.u32 %s278, 1
        %s3895 = scalar_lea.sflag [#allocation9], %s3894
        %s3896 = sand.u32 %s278, 1
        %s3897 = smul.addr %s3896, 256
        %s3898 = scalar_lea.vmem [#allocation8], %s3897
        // Predicated region
        $region61: #{tpu_custom_call.1} parent=59 // pred_check
          %p3899 = pneg %p262
        $region62: #{tpu_custom_call.1} parent=59 // pred_check_branch
          %3901 = sbr.rel (%p3899) target = $region64
        $region63: #{tpu_custom_call.1} parent=59 // pred_region
          %s3903 = ssub.s32 4096, 4096
          %3904 = vsyncadd %s3890, %s3903
          %s3905 = smul.addr %s29, 32
          %s3906 = smul.addr %s3905, 128
          %s3907 = scalar_lea.hbm %s10, %s3906
          %s3908 = sshll.u32 %s3893, 4
          %s3909 = int_to_ptr.vmem [resolvable:$true] %s3908
          %3914 = dma.vmem_to_hbm [thread:$0]  %s3909, 4096, %s3907, %s3890, 128, 128, 8
        $region64: #{tpu_custom_call.1} parent=59 // pred_fallthru
          _
        // Predicated region
        $region65: #{tpu_custom_call.1} parent=59 // pred_check
          %p3915 = pneg %p288
        $region66: #{tpu_custom_call.1} parent=59 // pred_check_branch
          %3917 = sbr.rel (%p3915) target = $region68
        $region67: #{tpu_custom_call.1} parent=59 // pred_region
          %s3919 = ssub.s32 4096, 4096
          %3920 = vsyncadd %s3895, %s3919
          %s3921 = smul.addr %s29, 32
          %s3922 = smul.addr %s3921, 128
          %s3923 = scalar_lea.hbm %s11, %s3922
          %s3924 = sshll.u32 %s3898, 4
          %s3925 = int_to_ptr.vmem [resolvable:$true] %s3924
          %3930 = dma.vmem_to_hbm [thread:$0]  %s3925, 4096, %s3923, %s3895, 128, 128, 8
        $region68: #{tpu_custom_call.1} parent=59 // pred_fallthru
          _
      $region60: #{tpu_custom_call.1} parent=5 // pred_fallthru
        _
      %p3931 = scmp.le.s32.totalorder 2, %s24
      // Predicated region
      $region69: #{tpu_custom_call.1} parent=5 // pred_check
        %p3932 = pneg %p3931
      $region70: #{tpu_custom_call.1} parent=5 // pred_check_branch
        %3934 = sbr.rel (%p3932) target = $region72
      $region71: #{tpu_custom_call.1} parent=5 // pred_region
        %s3935 = ssub.s32 %s24, 2
        // Predicated region
        $region73: #{tpu_custom_call.1} parent=71 // pred_check
          %p3936 = pneg %p268
        $region74: #{tpu_custom_call.1} parent=71 // pred_check_branch
          %3938 = sbr.rel (%p3936) target = $region76
        $region75: #{tpu_custom_call.1} parent=71 // pred_region
          %s3939 = sand.u32 %s253, 1
          %s3940 = scalar_lea.sflag [#allocation7], %s3939
          %s3941 = sand.u32 %s253, 1
          %s3942 = smul.addr %s3941, 256
          %s3943 = scalar_lea.vmem [#allocation6], %s3942
          %3944 = dma.done %s3940, 4096
        $region76: #{tpu_custom_call.1} parent=71 // pred_fallthru
          _
        // Predicated region
        $region77: #{tpu_custom_call.1} parent=71 // pred_check
          %p3945 = pneg %p294
        $region78: #{tpu_custom_call.1} parent=71 // pred_check_branch
          %3947 = sbr.rel (%p3945) target = $region80
        $region79: #{tpu_custom_call.1} parent=71 // pred_region
          %s3948 = sand.u32 %s279, 1
          %s3949 = scalar_lea.sflag [#allocation9], %s3948
          %s3950 = sand.u32 %s279, 1
          %s3951 = smul.addr %s3950, 256
          %s3952 = scalar_lea.vmem [#allocation8], %s3951
          %3953 = dma.done %s3949, 4096
        $region80: #{tpu_custom_call.1} parent=71 // pred_fallthru
          _
      $region72: #{tpu_custom_call.1} parent=5 // pred_fallthru
        _
    $region6: #{tpu_custom_call.1} parent=1 // loop_footer
      %s28 = sadd.s32 1, %s24
    $region7: #{tpu_custom_call.1} parent=1 // loop_footer_branch
      %23 = sbr.rel target = $region3
    $region8: #{tpu_custom_call.1} parent=1 // loop_exit
      _
    %3954 = vsyncpa [#allocation7], 1
    %s3955 = scalar_lea.sflag [#allocation7], 1
    %3956 = vsyncpa %s3955, 1
    %3957 = vsyncpa [#allocation9], 1
    %s3958 = scalar_lea.sflag [#allocation9], 1
    %3959 = vsyncpa %s3958, 1

</llo_original>
